<compile_context>
chip_gen: v7x
topology: tpu7x:2x2x1
jax: 0.10.0
libtpu: 0.0.40
codegen_flags: <defaults>
</compile_context>

<pallas_src>
import jax
import jax.numpy as jnp
from jax.experimental import pallas as pl
from jax.experimental.pallas import tpu as pltpu


def _leaky_relu(x, slope=0.01):
    # nn.LeakyReLU() default negative_slope = 0.01
    return jnp.where(x > 0, x, slope * x)


def _choose_block_bt(BT, N, target_rows=512):
    """Pick block_bt (number of (b,t) slabs per grid step).

    Constraints: block_bt divides BT; block_bt * N is sublane-aligned (mult of
    8) unless the block covers the whole array; rows-per-step close to
    `target_rows`; keep >= 2 grid steps when possible (megacore on v7x).
    """
    divisors = [d for d in range(1, BT + 1) if BT % d == 0]
    cands = [d for d in divisors if (d * N) % 8 == 0 and d * N <= target_rows]
    if not cands:
        cands = [d for d in divisors if (d * N) % 8 == 0]
    if not cands:
        return BT  # single full-array block (always a legal BlockSpec)
    multi = [d for d in cands if BT // d >= 2]
    return max(multi) if multi else max(cands)


def _make_kernel(E):
    def kernel(eb_ref, trep_ref, nrep_ref, w1_ref, b1_ref,
               wspa_ref, bspa_ref, wtem_ref, btem_ref, w3_ref, b3_ref,
               out_ref):
        f32 = jnp.float32

        # ln1: (M, Din) @ (Din, H) + b1
        x = eb_ref[...]
        eb_out = jnp.dot(x, w1_ref[...],
                         preferred_element_type=f32) + b1_ref[...].astype(f32)

        # Spatial adaptive matmul, flattened over the embed dim:
        #   out_spa = sum_e (node[:, e] * eb_out) @ Wspa[e]  + node @ bpool_spa
        node = nrep_ref[...].astype(f32)                          # (M, E)
        acc_spa = jnp.dot(node, bspa_ref[...].astype(f32),
                          preferred_element_type=f32)             # (M, H) bias
        for e in range(E):
            scaled = (eb_out * node[:, e:e + 1]).astype(wspa_ref.dtype)
            acc_spa = acc_spa + jnp.dot(scaled, wspa_ref[e],
                                        preferred_element_type=f32)
        out_spa = _leaky_relu(acc_spa)

        # Temporal adaptive matmul, same structure with per-(b,t) time coeffs.
        tvals = trep_ref[...].astype(f32)                         # (M, E)
        acc_tem = jnp.dot(tvals, btem_ref[...].astype(f32),
                          preferred_element_type=f32)             # (M, H) bias
        for e in range(E):
            scaled = (out_spa * tvals[:, e:e + 1]).astype(wtem_ref.dtype)
            acc_tem = acc_tem + jnp.dot(scaled, wtem_ref[e],
                                        preferred_element_type=f32)
        out_tem = _leaky_relu(acc_tem)

        # ln3
        logits = jnp.dot(out_tem.astype(w3_ref.dtype), w3_ref[...],
                         preferred_element_type=f32) + b3_ref[...].astype(f32)
        out_ref[...] = logits.astype(out_ref.dtype)

    return kernel


def mlp_rl_pallas(eb, time_eb, node_eb, params, *, block_bt=None,
                  mxu_dtype=jnp.float32):
    B, T, N, Din = eb.shape
    E = node_eb.shape[1]
    H = params["w1"].shape[1]
    Dout = params["w3"].shape[1]
    BT = B * T
    M_total = BT * N

    if block_bt is None:
        block_bt = _choose_block_bt(BT, N)
    assert BT % block_bt == 0
    m_tile = block_bt * N
    num_blocks = BT // block_bt

    f32 = jnp.float32
    # Row-major flatten: row r <-> (bt = r // N, n = r % N).
    eb_flat = eb.reshape(M_total, Din).astype(mxu_dtype)
    # Per-row time coefficients (bt repeated N times) and per-row node
    # coefficients (n pattern repeats every N rows, constant across grid steps).
    time_rep = jnp.repeat(time_eb.reshape(BT, E).astype(f32), N, axis=0)
    node_rep = jnp.tile(node_eb.astype(f32), (block_bt, 1))

    w1 = params["w1"].astype(mxu_dtype)
    w3 = params["w3"].astype(mxu_dtype)
    wpool_spa = params["wpool_spa"].astype(mxu_dtype)
    wpool_tem = params["wpool_tem"].astype(mxu_dtype)
    b1 = params["b1"].reshape(1, H).astype(f32)
    b3 = params["b3"].reshape(1, Dout).astype(f32)
    bpool_spa = params["bpool_spa"].astype(f32)
    bpool_tem = params["bpool_tem"].astype(f32)

    kernel = _make_kernel(E)

    const2 = lambda i: (0, 0)
    const3 = lambda i: (0, 0, 0)

    grid_spec = pltpu.PrefetchScalarGridSpec(
        num_scalar_prefetch=0,
        grid=(num_blocks,),
        in_specs=[
            pl.BlockSpec((m_tile, Din), lambda i: (i, 0)),   # eb rows
            pl.BlockSpec((m_tile, E), lambda i: (i, 0)),     # per-row time coeffs
            pl.BlockSpec((m_tile, E), const2),               # per-row node coeffs
            pl.BlockSpec((Din, H), const2),                  # W1
            pl.BlockSpec((1, H), const2),                    # b1
            pl.BlockSpec((E, H, H), const3),                 # weights_pool_spa
            pl.BlockSpec((E, H), const2),                    # bias_pool_spa
            pl.BlockSpec((E, H, H), const3),                 # weights_pool_tem
            pl.BlockSpec((E, H), const2),                    # bias_pool_tem
            pl.BlockSpec((H, Dout), const2),                 # W3
            pl.BlockSpec((1, Dout), const2),                 # b3
        ],
        out_specs=pl.BlockSpec((m_tile, Dout), lambda i: (i, 0)),
    )

    # Advisory cost hint for XLA scheduling around the custom call.
    flops = 2 * M_total * (Din * H + 2 * E * H * H + 2 * E * H + H * Dout)
    w_bytes = jnp.dtype(mxu_dtype).itemsize
    bytes_accessed = (
        eb_flat.size * w_bytes
        + (time_rep.size + node_rep.size) * 4
        + (w1.size + w3.size + wpool_spa.size + wpool_tem.size) * w_bytes
        + (b1.size + b3.size + bpool_spa.size + bpool_tem.size) * 4
        + M_total * Dout * 4
    )

    out = pl.pallas_call(
        kernel,
        out_shape=jax.ShapeDtypeStruct((M_total, Dout), f32),
        grid_spec=grid_spec,
        compiler_params=pltpu.CompilerParams(
            dimension_semantics=("parallel",)),
        cost_estimate=pl.CostEstimate(
            flops=flops, transcendentals=0, bytes_accessed=bytes_accessed),
    )(eb_flat, time_rep, node_rep, w1, b1, wpool_spa, bpool_spa,
      wpool_tem, bpool_tem, w3, b3)

    return out.reshape(B, T, N, Dout)


def mlp_rl_reference(eb, time_eb, node_eb, params):
    """Pure-JAX reference mirroring the PyTorch forward exactly."""
    eb_out = eb @ params["w1"] + params["b1"]
    weights_spa = jnp.einsum("nd,dio->nio", node_eb, params["wpool_spa"])
    bias_spa = node_eb @ params["bpool_spa"]
    out_spa = jnp.einsum("btni,nio->btno", eb_out, weights_spa) + bias_spa
    out_spa = jnp.where(out_spa > 0, out_spa, 0.01 * out_spa)
    weights_tem = jnp.einsum("btd,dio->btio", time_eb, params["wpool_tem"])
    bias_tem = (time_eb @ params["bpool_tem"])[:, :, None, :]
    out_tem = jnp.einsum("btni,btio->btno", out_spa, weights_tem) + bias_tem
    out_tem = jnp.where(out_tem > 0, out_tem, 0.01 * out_tem)
    return out_tem @ params["w3"] + params["b3"]


if __name__ == "__main__":
    B, T, N = 2, 4, 8
    dim_in, hidden_dim, embed_dim, dim_out = 16, 32, 8, 4

    key = jax.random.PRNGKey(0)
    ks = jax.random.split(key, 11)
    params = {
        "w1": jax.random.normal(ks[0], (dim_in, hidden_dim), jnp.float32) * 0.2,
        "b1": jax.random.normal(ks[1], (hidden_dim,), jnp.float32) * 0.1,
        "w3": jax.random.normal(ks[2], (hidden_dim, dim_out), jnp.float32) * 0.2,
        "b3": jax.random.normal(ks[3], (dim_out,), jnp.float32) * 0.1,
        "wpool_spa": jax.random.normal(
            ks[4], (embed_dim, hidden_dim, hidden_dim), jnp.float32) * 0.1,
        "bpool_spa": jax.random.normal(
            ks[5], (embed_dim, hidden_dim), jnp.float32) * 0.1,
        "wpool_tem": jax.random.normal(
            ks[6], (embed_dim, hidden_dim, hidden_dim), jnp.float32) * 0.1,
        "bpool_tem": jax.random.normal(
            ks[7], (embed_dim, hidden_dim), jnp.float32) * 0.1,
    }
    eb = jax.random.normal(ks[8], (B, T, N, dim_in), jnp.float32)
    time_eb = jax.random.normal(ks[9], (B, T, embed_dim), jnp.float32)
    node_eb = jax.random.normal(ks[10], (N, embed_dim), jnp.float32)

    out = jax.block_until_ready(mlp_rl_pallas(eb, time_eb, node_eb, params))

    ref = mlp_rl_reference(eb, time_eb, node_eb, params)
    assert out.shape == (B, T, N, dim_out)
    max_err = float(jnp.max(jnp.abs(out - ref)))
    # Summation order differs from the reference (E-wise accumulation), so
    # allow a slightly looser f32 tolerance than exact-order matching.
    assert jnp.allclose(out, ref, atol=1e-3, rtol=1e-3), max_err
    print("KERNEL_OK")
</pallas_src>

<mosaic_0001>
module attributes {stable_mosaic.version = 11 : i64} {
  func.func @kernel(%arg0: i32, %arg1: memref<32x16xf32, #tpu.memory_space<vmem>>, %arg2: memref<32x8xf32, #tpu.memory_space<vmem>>, %arg3: memref<32x8xf32, #tpu.memory_space<vmem>>, %arg4: memref<16x32xf32, #tpu.memory_space<vmem>>, %arg5: memref<1x32xf32, #tpu.memory_space<vmem>>, %arg6: memref<8x32x32xf32, #tpu.memory_space<vmem>>, %arg7: memref<8x32xf32, #tpu.memory_space<vmem>>, %arg8: memref<8x32x32xf32, #tpu.memory_space<vmem>>, %arg9: memref<8x32xf32, #tpu.memory_space<vmem>>, %arg10: memref<32x4xf32, #tpu.memory_space<vmem>>, %arg11: memref<1x4xf32, #tpu.memory_space<vmem>>, %arg12: memref<32x4xf32, #tpu.memory_space<vmem>>) attributes {dimension_semantics = [#tpu.dimension_semantics<parallel>], iteration_bounds = array<i64: 2>, scalar_prefetch = 0 : i64, scratch_operands = 0 : i64, tpu.core_type = #tpu.core_type<tc>, window_params = [{transform_indices = @transform_0, window_bounds = array<i64: 32, 16>}, {transform_indices = @transform_1, window_bounds = array<i64: 32, 8>}, {pipeline_mode = #tpu.pipeline_mode<synchronous>, transform_indices = @transform_2, window_bounds = array<i64: 32, 8>}, {pipeline_mode = #tpu.pipeline_mode<synchronous>, transform_indices = @transform_3, window_bounds = array<i64: 16, 32>}, {pipeline_mode = #tpu.pipeline_mode<synchronous>, transform_indices = @transform_4, window_bounds = array<i64: 1, 32>}, {pipeline_mode = #tpu.pipeline_mode<synchronous>, transform_indices = @transform_5, window_bounds = array<i64: 8, 32, 32>}, {pipeline_mode = #tpu.pipeline_mode<synchronous>, transform_indices = @transform_6, window_bounds = array<i64: 8, 32>}, {pipeline_mode = #tpu.pipeline_mode<synchronous>, transform_indices = @transform_7, window_bounds = array<i64: 8, 32, 32>}, {pipeline_mode = #tpu.pipeline_mode<synchronous>, transform_indices = @transform_8, window_bounds = array<i64: 8, 32>}, {pipeline_mode = #tpu.pipeline_mode<synchronous>, transform_indices = @transform_9, window_bounds = array<i64: 32, 4>}, {pipeline_mode = #tpu.pipeline_mode<synchronous>, transform_indices = @transform_10, window_bounds = array<i64: 1, 4>}, {transform_indices = @transform_11, window_bounds = array<i64: 32, 4>}]} {
    %c0 = arith.constant 0 : index
    %c0_0 = arith.constant 0 : index
    %0 = vector.load %arg1[%c0, %c0_0] : memref<32x16xf32, #tpu.memory_space<vmem>>, vector<32x16xf32>
    %c0_1 = arith.constant 0 : index
    %c0_2 = arith.constant 0 : index
    %1 = vector.load %arg4[%c0_1, %c0_2] : memref<16x32xf32, #tpu.memory_space<vmem>>, vector<16x32xf32>
    %cst = arith.constant dense<0.000000e+00> : vector<32x32xf32>
    %2 = tpu.matmul %0, %1, %cst {dimension_numbers = #tpu.dot_dimension_numbers<[1], [0], [0], [1], [0, 0, 1, 1], [], []>} : vector<32x16xf32>, vector<16x32xf32>, vector<32x32xf32> -> vector<32x32xf32>
    %c0_3 = arith.constant 0 : index
    %c0_4 = arith.constant 0 : index
    %3 = vector.load %arg5[%c0_3, %c0_4] : memref<1x32xf32, #tpu.memory_space<vmem>>, vector<1x32xf32>
    %4 = vector.broadcast %3 : vector<1x32xf32> to vector<32x32xf32>
    %5 = arith.addf %2, %4 : vector<32x32xf32>
    %c0_5 = arith.constant 0 : index
    %c0_6 = arith.constant 0 : index
    %6 = vector.load %arg3[%c0_5, %c0_6] : memref<32x8xf32, #tpu.memory_space<vmem>>, vector<32x8xf32>
    %c0_7 = arith.constant 0 : index
    %c0_8 = arith.constant 0 : index
    %7 = vector.load %arg7[%c0_7, %c0_8] : memref<8x32xf32, #tpu.memory_space<vmem>>, vector<8x32xf32>
    %cst_9 = arith.constant dense<0.000000e+00> : vector<32x32xf32>
    %8 = tpu.matmul %6, %7, %cst_9 {dimension_numbers = #tpu.dot_dimension_numbers<[1], [0], [0], [1], [0, 0, 1, 1], [], []>} : vector<32x8xf32>, vector<8x32xf32>, vector<32x32xf32> -> vector<32x32xf32>
    %9 = vector.extract_strided_slice %6 {offsets = [0, 0], sizes = [32, 1], strides = [1, 1]} : vector<32x8xf32> to vector<32x1xf32>
    %10 = vector.broadcast %9 : vector<32x1xf32> to vector<32x32xf32>
    %11 = arith.mulf %5, %10 : vector<32x32xf32>
    %c0_10 = arith.constant 0 : index
    %c0_11 = arith.constant 0 : index
    %c0_12 = arith.constant 0 : index
    %12 = vector.load %arg6[%c0_10, %c0_11, %c0_12] : memref<8x32x32xf32, #tpu.memory_space<vmem>>, vector<1x32x32xf32>
    %13 = vector.shape_cast %12 : vector<1x32x32xf32> to vector<32x32xf32>
    %cst_13 = arith.constant dense<0.000000e+00> : vector<32x32xf32>
    %14 = tpu.matmul %11, %13, %cst_13 {dimension_numbers = #tpu.dot_dimension_numbers<[1], [0], [0], [1], [0, 0, 1, 1], [], []>} : vector<32x32xf32>, vector<32x32xf32>, vector<32x32xf32> -> vector<32x32xf32>
    %15 = arith.addf %8, %14 : vector<32x32xf32>
    %16 = vector.extract_strided_slice %6 {offsets = [0, 1], sizes = [32, 1], strides = [1, 1]} : vector<32x8xf32> to vector<32x1xf32>
    %17 = vector.broadcast %16 : vector<32x1xf32> to vector<32x32xf32>
    %18 = arith.mulf %5, %17 : vector<32x32xf32>
    %c1 = arith.constant 1 : index
    %c0_14 = arith.constant 0 : index
    %c0_15 = arith.constant 0 : index
    %19 = vector.load %arg6[%c1, %c0_14, %c0_15] : memref<8x32x32xf32, #tpu.memory_space<vmem>>, vector<1x32x32xf32>
    %20 = vector.shape_cast %19 : vector<1x32x32xf32> to vector<32x32xf32>
    %cst_16 = arith.constant dense<0.000000e+00> : vector<32x32xf32>
    %21 = tpu.matmul %18, %20, %cst_16 {dimension_numbers = #tpu.dot_dimension_numbers<[1], [0], [0], [1], [0, 0, 1, 1], [], []>} : vector<32x32xf32>, vector<32x32xf32>, vector<32x32xf32> -> vector<32x32xf32>
    %22 = arith.addf %15, %21 : vector<32x32xf32>
    %23 = vector.extract_strided_slice %6 {offsets = [0, 2], sizes = [32, 1], strides = [1, 1]} : vector<32x8xf32> to vector<32x1xf32>
    %24 = vector.broadcast %23 : vector<32x1xf32> to vector<32x32xf32>
    %25 = arith.mulf %5, %24 : vector<32x32xf32>
    %c2 = arith.constant 2 : index
    %c0_17 = arith.constant 0 : index
    %c0_18 = arith.constant 0 : index
    %26 = vector.load %arg6[%c2, %c0_17, %c0_18] : memref<8x32x32xf32, #tpu.memory_space<vmem>>, vector<1x32x32xf32>
    %27 = vector.shape_cast %26 : vector<1x32x32xf32> to vector<32x32xf32>
    %cst_19 = arith.constant dense<0.000000e+00> : vector<32x32xf32>
    %28 = tpu.matmul %25, %27, %cst_19 {dimension_numbers = #tpu.dot_dimension_numbers<[1], [0], [0], [1], [0, 0, 1, 1], [], []>} : vector<32x32xf32>, vector<32x32xf32>, vector<32x32xf32> -> vector<32x32xf32>
    %29 = arith.addf %22, %28 : vector<32x32xf32>
    %30 = vector.extract_strided_slice %6 {offsets = [0, 3], sizes = [32, 1], strides = [1, 1]} : vector<32x8xf32> to vector<32x1xf32>
    %31 = vector.broadcast %30 : vector<32x1xf32> to vector<32x32xf32>
    %32 = arith.mulf %5, %31 : vector<32x32xf32>
    %c3 = arith.constant 3 : index
    %c0_20 = arith.constant 0 : index
    %c0_21 = arith.constant 0 : index
    %33 = vector.load %arg6[%c3, %c0_20, %c0_21] : memref<8x32x32xf32, #tpu.memory_space<vmem>>, vector<1x32x32xf32>
    %34 = vector.shape_cast %33 : vector<1x32x32xf32> to vector<32x32xf32>
    %cst_22 = arith.constant dense<0.000000e+00> : vector<32x32xf32>
    %35 = tpu.matmul %32, %34, %cst_22 {dimension_numbers = #tpu.dot_dimension_numbers<[1], [0], [0], [1], [0, 0, 1, 1], [], []>} : vector<32x32xf32>, vector<32x32xf32>, vector<32x32xf32> -> vector<32x32xf32>
    %36 = arith.addf %29, %35 : vector<32x32xf32>
    %37 = vector.extract_strided_slice %6 {offsets = [0, 4], sizes = [32, 1], strides = [1, 1]} : vector<32x8xf32> to vector<32x1xf32>
    %38 = vector.broadcast %37 : vector<32x1xf32> to vector<32x32xf32>
    %39 = arith.mulf %5, %38 : vector<32x32xf32>
    %c4 = arith.constant 4 : index
    %c0_23 = arith.constant 0 : index
    %c0_24 = arith.constant 0 : index
    %40 = vector.load %arg6[%c4, %c0_23, %c0_24] : memref<8x32x32xf32, #tpu.memory_space<vmem>>, vector<1x32x32xf32>
    %41 = vector.shape_cast %40 : vector<1x32x32xf32> to vector<32x32xf32>
    %cst_25 = arith.constant dense<0.000000e+00> : vector<32x32xf32>
    %42 = tpu.matmul %39, %41, %cst_25 {dimension_numbers = #tpu.dot_dimension_numbers<[1], [0], [0], [1], [0, 0, 1, 1], [], []>} : vector<32x32xf32>, vector<32x32xf32>, vector<32x32xf32> -> vector<32x32xf32>
    %43 = arith.addf %36, %42 : vector<32x32xf32>
    %44 = vector.extract_strided_slice %6 {offsets = [0, 5], sizes = [32, 1], strides = [1, 1]} : vector<32x8xf32> to vector<32x1xf32>
    %45 = vector.broadcast %44 : vector<32x1xf32> to vector<32x32xf32>
    %46 = arith.mulf %5, %45 : vector<32x32xf32>
    %c5 = arith.constant 5 : index
    %c0_26 = arith.constant 0 : index
    %c0_27 = arith.constant 0 : index
    %47 = vector.load %arg6[%c5, %c0_26, %c0_27] : memref<8x32x32xf32, #tpu.memory_space<vmem>>, vector<1x32x32xf32>
    %48 = vector.shape_cast %47 : vector<1x32x32xf32> to vector<32x32xf32>
    %cst_28 = arith.constant dense<0.000000e+00> : vector<32x32xf32>
    %49 = tpu.matmul %46, %48, %cst_28 {dimension_numbers = #tpu.dot_dimension_numbers<[1], [0], [0], [1], [0, 0, 1, 1], [], []>} : vector<32x32xf32>, vector<32x32xf32>, vector<32x32xf32> -> vector<32x32xf32>
    %50 = arith.addf %43, %49 : vector<32x32xf32>
    %51 = vector.extract_strided_slice %6 {offsets = [0, 6], sizes = [32, 1], strides = [1, 1]} : vector<32x8xf32> to vector<32x1xf32>
    %52 = vector.broadcast %51 : vector<32x1xf32> to vector<32x32xf32>
    %53 = arith.mulf %5, %52 : vector<32x32xf32>
    %c6 = arith.constant 6 : index
    %c0_29 = arith.constant 0 : index
    %c0_30 = arith.constant 0 : index
    %54 = vector.load %arg6[%c6, %c0_29, %c0_30] : memref<8x32x32xf32, #tpu.memory_space<vmem>>, vector<1x32x32xf32>
    %55 = vector.shape_cast %54 : vector<1x32x32xf32> to vector<32x32xf32>
    %cst_31 = arith.constant dense<0.000000e+00> : vector<32x32xf32>
    %56 = tpu.matmul %53, %55, %cst_31 {dimension_numbers = #tpu.dot_dimension_numbers<[1], [0], [0], [1], [0, 0, 1, 1], [], []>} : vector<32x32xf32>, vector<32x32xf32>, vector<32x32xf32> -> vector<32x32xf32>
    %57 = arith.addf %50, %56 : vector<32x32xf32>
    %58 = vector.extract_strided_slice %6 {offsets = [0, 7], sizes = [32, 1], strides = [1, 1]} : vector<32x8xf32> to vector<32x1xf32>
    %59 = vector.broadcast %58 : vector<32x1xf32> to vector<32x32xf32>
    %60 = arith.mulf %5, %59 : vector<32x32xf32>
    %c7 = arith.constant 7 : index
    %c0_32 = arith.constant 0 : index
    %c0_33 = arith.constant 0 : index
    %61 = vector.load %arg6[%c7, %c0_32, %c0_33] : memref<8x32x32xf32, #tpu.memory_space<vmem>>, vector<1x32x32xf32>
    %62 = vector.shape_cast %61 : vector<1x32x32xf32> to vector<32x32xf32>
    %cst_34 = arith.constant dense<0.000000e+00> : vector<32x32xf32>
    %63 = tpu.matmul %60, %62, %cst_34 {dimension_numbers = #tpu.dot_dimension_numbers<[1], [0], [0], [1], [0, 0, 1, 1], [], []>} : vector<32x32xf32>, vector<32x32xf32>, vector<32x32xf32> -> vector<32x32xf32>
    %64 = arith.addf %57, %63 : vector<32x32xf32>
    %cst_35 = arith.constant 0.000000e+00 : f32
    %65 = vector.broadcast %cst_35 : f32 to vector<32x32xf32>
    %66 = arith.cmpf ogt, %64, %65 : vector<32x32xf32>
    %cst_36 = arith.constant 0.00999999977 : f32
    %67 = vector.broadcast %cst_36 : f32 to vector<32x32xf32>
    %68 = arith.mulf %67, %64 : vector<32x32xf32>
    %69 = arith.select %66, %64, %68 : vector<32x32xi1>, vector<32x32xf32>
    %c0_37 = arith.constant 0 : index
    %c0_38 = arith.constant 0 : index
    %70 = vector.load %arg2[%c0_37, %c0_38] : memref<32x8xf32, #tpu.memory_space<vmem>>, vector<32x8xf32>
    %c0_39 = arith.constant 0 : index
    %c0_40 = arith.constant 0 : index
    %71 = vector.load %arg9[%c0_39, %c0_40] : memref<8x32xf32, #tpu.memory_space<vmem>>, vector<8x32xf32>
    %cst_41 = arith.constant dense<0.000000e+00> : vector<32x32xf32>
    %72 = tpu.matmul %70, %71, %cst_41 {dimension_numbers = #tpu.dot_dimension_numbers<[1], [0], [0], [1], [0, 0, 1, 1], [], []>} : vector<32x8xf32>, vector<8x32xf32>, vector<32x32xf32> -> vector<32x32xf32>
    %73 = vector.extract_strided_slice %70 {offsets = [0, 0], sizes = [32, 1], strides = [1, 1]} : vector<32x8xf32> to vector<32x1xf32>
    %74 = vector.broadcast %73 : vector<32x1xf32> to vector<32x32xf32>
    %75 = arith.mulf %69, %74 : vector<32x32xf32>
    %c0_42 = arith.constant 0 : index
    %c0_43 = arith.constant 0 : index
    %c0_44 = arith.constant 0 : index
    %76 = vector.load %arg8[%c0_42, %c0_43, %c0_44] : memref<8x32x32xf32, #tpu.memory_space<vmem>>, vector<1x32x32xf32>
    %77 = vector.shape_cast %76 : vector<1x32x32xf32> to vector<32x32xf32>
    %cst_45 = arith.constant dense<0.000000e+00> : vector<32x32xf32>
    %78 = tpu.matmul %75, %77, %cst_45 {dimension_numbers = #tpu.dot_dimension_numbers<[1], [0], [0], [1], [0, 0, 1, 1], [], []>} : vector<32x32xf32>, vector<32x32xf32>, vector<32x32xf32> -> vector<32x32xf32>
    %79 = arith.addf %72, %78 : vector<32x32xf32>
    %80 = vector.extract_strided_slice %70 {offsets = [0, 1], sizes = [32, 1], strides = [1, 1]} : vector<32x8xf32> to vector<32x1xf32>
    %81 = vector.broadcast %80 : vector<32x1xf32> to vector<32x32xf32>
    %82 = arith.mulf %69, %81 : vector<32x32xf32>
    %c1_46 = arith.constant 1 : index
    %c0_47 = arith.constant 0 : index
    %c0_48 = arith.constant 0 : index
    %83 = vector.load %arg8[%c1_46, %c0_47, %c0_48] : memref<8x32x32xf32, #tpu.memory_space<vmem>>, vector<1x32x32xf32>
    %84 = vector.shape_cast %83 : vector<1x32x32xf32> to vector<32x32xf32>
    %cst_49 = arith.constant dense<0.000000e+00> : vector<32x32xf32>
    %85 = tpu.matmul %82, %84, %cst_49 {dimension_numbers = #tpu.dot_dimension_numbers<[1], [0], [0], [1], [0, 0, 1, 1], [], []>} : vector<32x32xf32>, vector<32x32xf32>, vector<32x32xf32> -> vector<32x32xf32>
    %86 = arith.addf %79, %85 : vector<32x32xf32>
    %87 = vector.extract_strided_slice %70 {offsets = [0, 2], sizes = [32, 1], strides = [1, 1]} : vector<32x8xf32> to vector<32x1xf32>
    %88 = vector.broadcast %87 : vector<32x1xf32> to vector<32x32xf32>
    %89 = arith.mulf %69, %88 : vector<32x32xf32>
    %c2_50 = arith.constant 2 : index
    %c0_51 = arith.constant 0 : index
    %c0_52 = arith.constant 0 : index
    %90 = vector.load %arg8[%c2_50, %c0_51, %c0_52] : memref<8x32x32xf32, #tpu.memory_space<vmem>>, vector<1x32x32xf32>
    %91 = vector.shape_cast %90 : vector<1x32x32xf32> to vector<32x32xf32>
    %cst_53 = arith.constant dense<0.000000e+00> : vector<32x32xf32>
    %92 = tpu.matmul %89, %91, %cst_53 {dimension_numbers = #tpu.dot_dimension_numbers<[1], [0], [0], [1], [0, 0, 1, 1], [], []>} : vector<32x32xf32>, vector<32x32xf32>, vector<32x32xf32> -> vector<32x32xf32>
    %93 = arith.addf %86, %92 : vector<32x32xf32>
    %94 = vector.extract_strided_slice %70 {offsets = [0, 3], sizes = [32, 1], strides = [1, 1]} : vector<32x8xf32> to vector<32x1xf32>
    %95 = vector.broadcast %94 : vector<32x1xf32> to vector<32x32xf32>
    %96 = arith.mulf %69, %95 : vector<32x32xf32>
    %c3_54 = arith.constant 3 : index
    %c0_55 = arith.constant 0 : index
    %c0_56 = arith.constant 0 : index
    %97 = vector.load %arg8[%c3_54, %c0_55, %c0_56] : memref<8x32x32xf32, #tpu.memory_space<vmem>>, vector<1x32x32xf32>
    %98 = vector.shape_cast %97 : vector<1x32x32xf32> to vector<32x32xf32>
    %cst_57 = arith.constant dense<0.000000e+00> : vector<32x32xf32>
    %99 = tpu.matmul %96, %98, %cst_57 {dimension_numbers = #tpu.dot_dimension_numbers<[1], [0], [0], [1], [0, 0, 1, 1], [], []>} : vector<32x32xf32>, vector<32x32xf32>, vector<32x32xf32> -> vector<32x32xf32>
    %100 = arith.addf %93, %99 : vector<32x32xf32>
    %101 = vector.extract_strided_slice %70 {offsets = [0, 4], sizes = [32, 1], strides = [1, 1]} : vector<32x8xf32> to vector<32x1xf32>
    %102 = vector.broadcast %101 : vector<32x1xf32> to vector<32x32xf32>
    %103 = arith.mulf %69, %102 : vector<32x32xf32>
    %c4_58 = arith.constant 4 : index
    %c0_59 = arith.constant 0 : index
    %c0_60 = arith.constant 0 : index
    %104 = vector.load %arg8[%c4_58, %c0_59, %c0_60] : memref<8x32x32xf32, #tpu.memory_space<vmem>>, vector<1x32x32xf32>
    %105 = vector.shape_cast %104 : vector<1x32x32xf32> to vector<32x32xf32>
    %cst_61 = arith.constant dense<0.000000e+00> : vector<32x32xf32>
    %106 = tpu.matmul %103, %105, %cst_61 {dimension_numbers = #tpu.dot_dimension_numbers<[1], [0], [0], [1], [0, 0, 1, 1], [], []>} : vector<32x32xf32>, vector<32x32xf32>, vector<32x32xf32> -> vector<32x32xf32>
    %107 = arith.addf %100, %106 : vector<32x32xf32>
    %108 = vector.extract_strided_slice %70 {offsets = [0, 5], sizes = [32, 1], strides = [1, 1]} : vector<32x8xf32> to vector<32x1xf32>
    %109 = vector.broadcast %108 : vector<32x1xf32> to vector<32x32xf32>
    %110 = arith.mulf %69, %109 : vector<32x32xf32>
    %c5_62 = arith.constant 5 : index
    %c0_63 = arith.constant 0 : index
    %c0_64 = arith.constant 0 : index
    %111 = vector.load %arg8[%c5_62, %c0_63, %c0_64] : memref<8x32x32xf32, #tpu.memory_space<vmem>>, vector<1x32x32xf32>
    %112 = vector.shape_cast %111 : vector<1x32x32xf32> to vector<32x32xf32>
    %cst_65 = arith.constant dense<0.000000e+00> : vector<32x32xf32>
    %113 = tpu.matmul %110, %112, %cst_65 {dimension_numbers = #tpu.dot_dimension_numbers<[1], [0], [0], [1], [0, 0, 1, 1], [], []>} : vector<32x32xf32>, vector<32x32xf32>, vector<32x32xf32> -> vector<32x32xf32>
    %114 = arith.addf %107, %113 : vector<32x32xf32>
    %115 = vector.extract_strided_slice %70 {offsets = [0, 6], sizes = [32, 1], strides = [1, 1]} : vector<32x8xf32> to vector<32x1xf32>
    %116 = vector.broadcast %115 : vector<32x1xf32> to vector<32x32xf32>
    %117 = arith.mulf %69, %116 : vector<32x32xf32>
    %c6_66 = arith.constant 6 : index
    %c0_67 = arith.constant 0 : index
    %c0_68 = arith.constant 0 : index
    %118 = vector.load %arg8[%c6_66, %c0_67, %c0_68] : memref<8x32x32xf32, #tpu.memory_space<vmem>>, vector<1x32x32xf32>
    %119 = vector.shape_cast %118 : vector<1x32x32xf32> to vector<32x32xf32>
    %cst_69 = arith.constant dense<0.000000e+00> : vector<32x32xf32>
    %120 = tpu.matmul %117, %119, %cst_69 {dimension_numbers = #tpu.dot_dimension_numbers<[1], [0], [0], [1], [0, 0, 1, 1], [], []>} : vector<32x32xf32>, vector<32x32xf32>, vector<32x32xf32> -> vector<32x32xf32>
    %121 = arith.addf %114, %120 : vector<32x32xf32>
    %122 = vector.extract_strided_slice %70 {offsets = [0, 7], sizes = [32, 1], strides = [1, 1]} : vector<32x8xf32> to vector<32x1xf32>
    %123 = vector.broadcast %122 : vector<32x1xf32> to vector<32x32xf32>
    %124 = arith.mulf %69, %123 : vector<32x32xf32>
    %c7_70 = arith.constant 7 : index
    %c0_71 = arith.constant 0 : index
    %c0_72 = arith.constant 0 : index
    %125 = vector.load %arg8[%c7_70, %c0_71, %c0_72] : memref<8x32x32xf32, #tpu.memory_space<vmem>>, vector<1x32x32xf32>
    %126 = vector.shape_cast %125 : vector<1x32x32xf32> to vector<32x32xf32>
    %cst_73 = arith.constant dense<0.000000e+00> : vector<32x32xf32>
    %127 = tpu.matmul %124, %126, %cst_73 {dimension_numbers = #tpu.dot_dimension_numbers<[1], [0], [0], [1], [0, 0, 1, 1], [], []>} : vector<32x32xf32>, vector<32x32xf32>, vector<32x32xf32> -> vector<32x32xf32>
    %128 = arith.addf %121, %127 : vector<32x32xf32>
    %cst_74 = arith.constant 0.000000e+00 : f32
    %129 = vector.broadcast %cst_74 : f32 to vector<32x32xf32>
    %130 = arith.cmpf ogt, %128, %129 : vector<32x32xf32>
    %cst_75 = arith.constant 0.00999999977 : f32
    %131 = vector.broadcast %cst_75 : f32 to vector<32x32xf32>
    %132 = arith.mulf %131, %128 : vector<32x32xf32>
    %133 = arith.select %130, %128, %132 : vector<32x32xi1>, vector<32x32xf32>
    %c0_76 = arith.constant 0 : index
    %c0_77 = arith.constant 0 : index
    %134 = vector.load %arg10[%c0_76, %c0_77] : memref<32x4xf32, #tpu.memory_space<vmem>>, vector<32x4xf32>
    %cst_78 = arith.constant dense<0.000000e+00> : vector<32x4xf32>
    %135 = tpu.matmul %133, %134, %cst_78 {dimension_numbers = #tpu.dot_dimension_numbers<[1], [0], [0], [1], [0, 0, 1, 1], [], []>} : vector<32x32xf32>, vector<32x4xf32>, vector<32x4xf32> -> vector<32x4xf32>
    %c0_79 = arith.constant 0 : index
    %c0_80 = arith.constant 0 : index
    %136 = vector.load %arg11[%c0_79, %c0_80] : memref<1x4xf32, #tpu.memory_space<vmem>>, vector<1x4xf32>
    %137 = vector.broadcast %136 : vector<1x4xf32> to vector<32x4xf32>
    %138 = arith.addf %135, %137 : vector<32x4xf32>
    %c0_81 = arith.constant 0 : index
    %c0_82 = arith.constant 0 : index
    %139 = vector.load %arg12[%c0_81, %c0_82] : memref<32x4xf32, #tpu.memory_space<vmem>>, vector<32x4xf32>
    tpu.vector_store %arg12[%c0_81, %c0_82], %138 {strides = array<i32>} : memref<32x4xf32, #tpu.memory_space<vmem>>, vector<32x4xf32>,
    return
  }
  func.func @transform_0(%arg0: i32) -> (i32, i32) {
    %c0_i32 = arith.constant 0 : i32
    %c0_i32_0 = arith.constant 0 : i32
    return %arg0, %c0_i32 : i32, i32
  }
  func.func @transform_1(%arg0: i32) -> (i32, i32) {
    %c0_i32 = arith.constant 0 : i32
    %c0_i32_0 = arith.constant 0 : i32
    return %arg0, %c0_i32 : i32, i32
  }
  func.func @transform_2(%arg0: i32) -> (i32, i32) {
    %c0_i32 = arith.constant 0 : i32
    %c0_i32_0 = arith.constant 0 : i32
    %c0_i32_1 = arith.constant 0 : i32
    return %c0_i32, %c0_i32_0 : i32, i32
  }
  func.func @transform_3(%arg0: i32) -> (i32, i32) {
    %c0_i32 = arith.constant 0 : i32
    %c0_i32_0 = arith.constant 0 : i32
    %c0_i32_1 = arith.constant 0 : i32
    return %c0_i32, %c0_i32_0 : i32, i32
  }
  func.func @transform_4(%arg0: i32) -> (i32, i32) {
    %c0_i32 = arith.constant 0 : i32
    %c0_i32_0 = arith.constant 0 : i32
    %c0_i32_1 = arith.constant 0 : i32
    return %c0_i32, %c0_i32_0 : i32, i32
  }
  func.func @transform_5(%arg0: i32) -> (i32, i32, i32) {
    %c0_i32 = arith.constant 0 : i32
    %c0_i32_0 = arith.constant 0 : i32
    %c0_i32_1 = arith.constant 0 : i32
    %c0_i32_2 = arith.constant 0 : i32
    return %c0_i32, %c0_i32_0, %c0_i32_1 : i32, i32, i32
  }
  func.func @transform_6(%arg0: i32) -> (i32, i32) {
    %c0_i32 = arith.constant 0 : i32
    %c0_i32_0 = arith.constant 0 : i32
    %c0_i32_1 = arith.constant 0 : i32
    return %c0_i32, %c0_i32_0 : i32, i32
  }
  func.func @transform_7(%arg0: i32) -> (i32, i32, i32) {
    %c0_i32 = arith.constant 0 : i32
    %c0_i32_0 = arith.constant 0 : i32
    %c0_i32_1 = arith.constant 0 : i32
    %c0_i32_2 = arith.constant 0 : i32
    return %c0_i32, %c0_i32_0, %c0_i32_1 : i32, i32, i32
  }
  func.func @transform_8(%arg0: i32) -> (i32, i32) {
    %c0_i32 = arith.constant 0 : i32
    %c0_i32_0 = arith.constant 0 : i32
    %c0_i32_1 = arith.constant 0 : i32
    return %c0_i32, %c0_i32_0 : i32, i32
  }
  func.func @transform_9(%arg0: i32) -> (i32, i32) {
    %c0_i32 = arith.constant 0 : i32
    %c0_i32_0 = arith.constant 0 : i32
    %c0_i32_1 = arith.constant 0 : i32
    return %c0_i32, %c0_i32_0 : i32, i32
  }
  func.func @transform_10(%arg0: i32) -> (i32, i32) {
    %c0_i32 = arith.constant 0 : i32
    %c0_i32_0 = arith.constant 0 : i32
    %c0_i32_1 = arith.constant 0 : i32
    return %c0_i32, %c0_i32_0 : i32, i32
  }
  func.func @transform_11(%arg0: i32) -> (i32, i32) {
    %c0_i32 = arith.constant 0 : i32
    %c0_i32_0 = arith.constant 0 : i32
    return %arg0, %c0_i32 : i32, i32
  }
}

</mosaic_0001>

<llo_original>
// kernel: tpu_custom_call.1
$region0: #{tpu_custom_call.1}
  #allocation0 [shape = 'u32[]', space=smem, size = 0x4, offset = 0x4, fixed_abs, tag = 'smem constant byte address 0x4 - core index']
  #allocation1 [shape = 'u32[144,128]{1,0:T(1,128)}', space=vmem, size = 0x12000, scoped, tag = 'internal scratch']
  %s0 = inlined_call_operand.vmem [shape: f32[64,16], index: 0, kind: input, shape index: {}]
  %s1 = inlined_call_operand.vmem [shape: f32[64,8], index: 1, kind: input, shape index: {}]
  %s2 = inlined_call_operand.vmem [shape: f32[32,8], index: 2, kind: input, shape index: {}]
  %s3 = inlined_call_operand.vmem [shape: f32[16,32], index: 3, kind: input, shape index: {}]
  %s4 = inlined_call_operand.vmem [shape: f32[1,32], index: 4, kind: input, shape index: {}]
  %s5 = inlined_call_operand.hbm [shape: f32[8,32,32], index: 5, kind: input, shape index: {}]
  %s6 = inlined_call_operand.vmem [shape: f32[8,32], index: 6, kind: input, shape index: {}]
  %s7 = inlined_call_operand.hbm [shape: f32[8,32,32], index: 7, kind: input, shape index: {}]
  %s8 = inlined_call_operand.vmem [shape: f32[8,32], index: 8, kind: input, shape index: {}]
  %s9 = inlined_call_operand.vmem [shape: f32[32,4], index: 9, kind: input, shape index: {}]
  %s10 = inlined_call_operand.vmem [shape: f32[1,4], index: 10, kind: input, shape index: {}]
  %s11 = inlined_call_operand.vmem [shape: f32[64,4], index: 11, kind: output, shape index: {}]
  %s12 = sld [smem:[#allocation0]]
  $region85: #{tpu_custom_call.1} parent=0
    _
  %s14 = ssub.s32 1, %s12
  %s15 = scalar_select 0, %s14, %s12
  $region1: #{tpu_custom_call.1} parent=0
    #allocation2 [shape = 'u8[131072]{0}', space=vmem, size = 0x20000, scoped, tag = 'input window, operand 5, single buffered']
    #allocation3 [shape = 's32[2]{0}', space=sflag, size = 0x8, scoped, tag = 'scoped memory for tpu_custom_call.1']
    #allocation4 [shape = 'u8[131072]{0}', space=vmem, size = 0x20000, scoped, tag = 'input window, operand 7, single buffered']
    #allocation5 [shape = 's32[1]{0}', space=sflag, size = 0x4, scoped, tag = 'scoped memory for tpu_custom_call.1']
    %16 = vsyncpa [#allocation3], 0
    %17 = vsyncpa [#allocation5], 0
    loop: start=0, step=1, limit=4
    $region2: #{tpu_custom_call.1} parent=1 // loop_pre_header
      _
    $region3: #{tpu_custom_call.1} parent=1 // loop_header
      %s19 = sphi 0, %s23
      %p20 = scmp.ge.s32.totalorder %s19, 4
      %s29 = sphi 0, %s31
      %s32 = sphi 0, %s29
      %s33 = sphi 0, %s32
      %s49 = sphi 0, %s33
      %s55 = sphi 0, %s57
      %s58 = sphi 0, %s55
      %s59 = sphi 0, %s58
      %s75 = sphi 0, %s59
      %s79 = sphi 0, %s79
      %s81 = sphi 0, %s79
      %s82 = sphi 0, %s81
      %s96 = sphi 0, %s82
      %s100 = sphi 0, %s100
      %s102 = sphi 0, %s100
      %s103 = sphi 0, %s102
      %s117 = sphi 0, %s103
      %s121 = sphi 0, %s121
      %s123 = sphi 0, %s121
      %s124 = sphi 0, %s123
      %s138 = sphi 0, %s124
      %s142 = sphi 0, %s142
      %s144 = sphi 0, %s142
      %s145 = sphi 0, %s144
      %s159 = sphi 0, %s145
      %s163 = sphi 0, %s163
      %s165 = sphi 0, %s163
      %s166 = sphi 0, %s165
      %s180 = sphi 0, %s166
      %s184 = sphi 0, %s184
      %s186 = sphi 0, %s184
      %s187 = sphi 0, %s186
      %s201 = sphi 0, %s187
      %s205 = sphi 0, %s205
      %s207 = sphi 0, %s205
      %s208 = sphi 0, %s207
      %s222 = sphi 0, %s208
      %s226 = sphi 0, %s226
      %s228 = sphi 0, %s226
      %s229 = sphi 0, %s228
      %s243 = sphi 0, %s229
      %s247 = sphi 0, %s247
      %s249 = sphi 0, %s247
      %s250 = sphi 0, %s249
      %s264 = sphi 0, %s250
      %s270 = sphi 0, %s272
      %s273 = sphi 0, %s270
      %s274 = sphi 0, %s273
      %s290 = sphi 0, %s274
    $region4: #{tpu_custom_call.1} parent=1 // loop_header_branch
      %22 = sbr.rel (%p20) target = $region8
    $region5: #{tpu_custom_call.1} parent=1 // loop_body
      %s24 = ssub.s32 %s19, 1
      %s25 = ssub.s32 %s19, 2
      %s26 = sadd.s32 %s19, 1
      %s27 = ssub.s32 %s19, %s26
      %p28 = scmp.eq.s32.totalorder %s27, 0
      %s30 = sadd.s32 %s29, 1
      %s31 = scalar_select %p28, %s29, %s30
      %p34 = pneg %p28
      %p35 = scmp.eq.s32.totalorder %s19, 1
      %p36 = por %p34, %p35
      %p37 = scmp.ne.s32.totalorder %s29, %s32
      %p38 = scmp.eq.s32.totalorder %s19, 0
      %p39 = por %p37, %p38
      %p40 = scmp.ne.s32.totalorder %s29, %s32
      %p41 = scmp.eq.s32.totalorder %s24, 1
      %p42 = por %p40, %p41
      %p43 = scmp.ne.s32.totalorder %s32, %s33
      %p44 = scmp.eq.s32.totalorder %s24, 0
      %p45 = por %p43, %p44
      %p46 = scmp.ne.s32.totalorder %s32, %s33
      %p47 = scmp.eq.s32.totalorder %s25, 1
      %p48 = por %p46, %p47
      %p50 = scmp.ne.s32.totalorder %s33, %s49
      %p51 = scmp.eq.s32.totalorder %s25, 0
      %p52 = por %p50, %p51
      %s53 = ssub.s32 %s19, %s26
      %p54 = scmp.eq.s32.totalorder %s53, 0
      %s56 = sadd.s32 %s55, 1
      %s57 = scalar_select %p54, %s55, %s56
      %p60 = pneg %p54
      %p61 = scmp.eq.s32.totalorder %s19, 1
      %p62 = por %p60, %p61
      %p63 = scmp.ne.s32.totalorder %s55, %s58
      %p64 = scmp.eq.s32.totalorder %s19, 0
      %p65 = por %p63, %p64
      %p66 = scmp.ne.s32.totalorder %s55, %s58
      %p67 = scmp.eq.s32.totalorder %s24, 1
      %p68 = por %p66, %p67
      %p69 = scmp.ne.s32.totalorder %s58, %s59
      %p70 = scmp.eq.s32.totalorder %s24, 0
      %p71 = por %p69, %p70
      %p72 = scmp.ne.s32.totalorder %s58, %s59
      %p73 = scmp.eq.s32.totalorder %s25, 1
      %p74 = por %p72, %p73
      %p76 = scmp.ne.s32.totalorder %s59, %s75
      %p77 = scmp.eq.s32.totalorder %s25, 0
      %p78 = por %p76, %p77
      %s80 = sadd.s32 %s79, 1
      %p83 = scmp.eq.s32.totalorder %s19, 1
      %p84 = scmp.ne.s32.totalorder %s79, %s81
      %p85 = scmp.eq.s32.totalorder %s19, 0
      %p86 = por %p84, %p85
      %p87 = scmp.ne.s32.totalorder %s79, %s81
      %p88 = scmp.eq.s32.totalorder %s24, 1
      %p89 = por %p87, %p88
      %p90 = scmp.ne.s32.totalorder %s81, %s82
      %p91 = scmp.eq.s32.totalorder %s24, 0
      %p92 = por %p90, %p91
      %p93 = scmp.ne.s32.totalorder %s81, %s82
      %p94 = scmp.eq.s32.totalorder %s25, 1
      %p95 = por %p93, %p94
      %p97 = scmp.ne.s32.totalorder %s82, %s96
      %p98 = scmp.eq.s32.totalorder %s25, 0
      %p99 = por %p97, %p98
      %s101 = sadd.s32 %s100, 1
      %p104 = scmp.eq.s32.totalorder %s19, 1
      %p105 = scmp.ne.s32.totalorder %s100, %s102
      %p106 = scmp.eq.s32.totalorder %s19, 0
      %p107 = por %p105, %p106
      %p108 = scmp.ne.s32.totalorder %s100, %s102
      %p109 = scmp.eq.s32.totalorder %s24, 1
      %p110 = por %p108, %p109
      %p111 = scmp.ne.s32.totalorder %s102, %s103
      %p112 = scmp.eq.s32.totalorder %s24, 0
      %p113 = por %p111, %p112
      %p114 = scmp.ne.s32.totalorder %s102, %s103
      %p115 = scmp.eq.s32.totalorder %s25, 1
      %p116 = por %p114, %p115
      %p118 = scmp.ne.s32.totalorder %s103, %s117
      %p119 = scmp.eq.s32.totalorder %s25, 0
      %p120 = por %p118, %p119
      %s122 = sadd.s32 %s121, 1
      %p125 = scmp.eq.s32.totalorder %s19, 1
      %p126 = scmp.ne.s32.totalorder %s121, %s123
      %p127 = scmp.eq.s32.totalorder %s19, 0
      %p128 = por %p126, %p127
      %p129 = scmp.ne.s32.totalorder %s121, %s123
      %p130 = scmp.eq.s32.totalorder %s24, 1
      %p131 = por %p129, %p130
      %p132 = scmp.ne.s32.totalorder %s123, %s124
      %p133 = scmp.eq.s32.totalorder %s24, 0
      %p134 = por %p132, %p133
      %p135 = scmp.ne.s32.totalorder %s123, %s124
      %p136 = scmp.eq.s32.totalorder %s25, 1
      %p137 = por %p135, %p136
      %p139 = scmp.ne.s32.totalorder %s124, %s138
      %p140 = scmp.eq.s32.totalorder %s25, 0
      %p141 = por %p139, %p140
      %s143 = sadd.s32 %s142, 1
      %p146 = scmp.eq.s32.totalorder %s19, 1
      %p147 = scmp.ne.s32.totalorder %s142, %s144
      %p148 = scmp.eq.s32.totalorder %s19, 0
      %p149 = por %p147, %p148
      %p150 = scmp.ne.s32.totalorder %s142, %s144
      %p151 = scmp.eq.s32.totalorder %s24, 1
      %p152 = por %p150, %p151
      %p153 = scmp.ne.s32.totalorder %s144, %s145
      %p154 = scmp.eq.s32.totalorder %s24, 0
      %p155 = por %p153, %p154
      %p156 = scmp.ne.s32.totalorder %s144, %s145
      %p157 = scmp.eq.s32.totalorder %s25, 1
      %p158 = por %p156, %p157
      %p160 = scmp.ne.s32.totalorder %s145, %s159
      %p161 = scmp.eq.s32.totalorder %s25, 0
      %p162 = por %p160, %p161
      %s164 = sadd.s32 %s163, 1
      %p167 = scmp.eq.s32.totalorder %s19, 1
      %p168 = scmp.ne.s32.totalorder %s163, %s165
      %p169 = scmp.eq.s32.totalorder %s19, 0
      %p170 = por %p168, %p169
      %p171 = scmp.ne.s32.totalorder %s163, %s165
      %p172 = scmp.eq.s32.totalorder %s24, 1
      %p173 = por %p171, %p172
      %p174 = scmp.ne.s32.totalorder %s165, %s166
      %p175 = scmp.eq.s32.totalorder %s24, 0
      %p176 = por %p174, %p175
      %p177 = scmp.ne.s32.totalorder %s165, %s166
      %p178 = scmp.eq.s32.totalorder %s25, 1
      %p179 = por %p177, %p178
      %p181 = scmp.ne.s32.totalorder %s166, %s180
      %p182 = scmp.eq.s32.totalorder %s25, 0
      %p183 = por %p181, %p182
      %s185 = sadd.s32 %s184, 1
      %p188 = scmp.eq.s32.totalorder %s19, 1
      %p189 = scmp.ne.s32.totalorder %s184, %s186
      %p190 = scmp.eq.s32.totalorder %s19, 0
      %p191 = por %p189, %p190
      %p192 = scmp.ne.s32.totalorder %s184, %s186
      %p193 = scmp.eq.s32.totalorder %s24, 1
      %p194 = por %p192, %p193
      %p195 = scmp.ne.s32.totalorder %s186, %s187
      %p196 = scmp.eq.s32.totalorder %s24, 0
      %p197 = por %p195, %p196
      %p198 = scmp.ne.s32.totalorder %s186, %s187
      %p199 = scmp.eq.s32.totalorder %s25, 1
      %p200 = por %p198, %p199
      %p202 = scmp.ne.s32.totalorder %s187, %s201
      %p203 = scmp.eq.s32.totalorder %s25, 0
      %p204 = por %p202, %p203
      %s206 = sadd.s32 %s205, 1
      %p209 = scmp.eq.s32.totalorder %s19, 1
      %p210 = scmp.ne.s32.totalorder %s205, %s207
      %p211 = scmp.eq.s32.totalorder %s19, 0
      %p212 = por %p210, %p211
      %p213 = scmp.ne.s32.totalorder %s205, %s207
      %p214 = scmp.eq.s32.totalorder %s24, 1
      %p215 = por %p213, %p214
      %p216 = scmp.ne.s32.totalorder %s207, %s208
      %p217 = scmp.eq.s32.totalorder %s24, 0
      %p218 = por %p216, %p217
      %p219 = scmp.ne.s32.totalorder %s207, %s208
      %p220 = scmp.eq.s32.totalorder %s25, 1
      %p221 = por %p219, %p220
      %p223 = scmp.ne.s32.totalorder %s208, %s222
      %p224 = scmp.eq.s32.totalorder %s25, 0
      %p225 = por %p223, %p224
      %s227 = sadd.s32 %s226, 1
      %p230 = scmp.eq.s32.totalorder %s19, 1
      %p231 = scmp.ne.s32.totalorder %s226, %s228
      %p232 = scmp.eq.s32.totalorder %s19, 0
      %p233 = por %p231, %p232
      %p234 = scmp.ne.s32.totalorder %s226, %s228
      %p235 = scmp.eq.s32.totalorder %s24, 1
      %p236 = por %p234, %p235
      %p237 = scmp.ne.s32.totalorder %s228, %s229
      %p238 = scmp.eq.s32.totalorder %s24, 0
      %p239 = por %p237, %p238
      %p240 = scmp.ne.s32.totalorder %s228, %s229
      %p241 = scmp.eq.s32.totalorder %s25, 1
      %p242 = por %p240, %p241
      %p244 = scmp.ne.s32.totalorder %s229, %s243
      %p245 = scmp.eq.s32.totalorder %s25, 0
      %p246 = por %p244, %p245
      %s248 = sadd.s32 %s247, 1
      %p251 = scmp.eq.s32.totalorder %s19, 1
      %p252 = scmp.ne.s32.totalorder %s247, %s249
      %p253 = scmp.eq.s32.totalorder %s19, 0
      %p254 = por %p252, %p253
      %p255 = scmp.ne.s32.totalorder %s247, %s249
      %p256 = scmp.eq.s32.totalorder %s24, 1
      %p257 = por %p255, %p256
      %p258 = scmp.ne.s32.totalorder %s249, %s250
      %p259 = scmp.eq.s32.totalorder %s24, 0
      %p260 = por %p258, %p259
      %p261 = scmp.ne.s32.totalorder %s249, %s250
      %p262 = scmp.eq.s32.totalorder %s25, 1
      %p263 = por %p261, %p262
      %p265 = scmp.ne.s32.totalorder %s250, %s264
      %p266 = scmp.eq.s32.totalorder %s25, 0
      %p267 = por %p265, %p266
      %s268 = ssub.s32 %s19, %s26
      %p269 = scmp.eq.s32.totalorder %s268, 0
      %s271 = sadd.s32 %s270, 1
      %s272 = scalar_select %p269, %s270, %s271
      %p275 = pneg %p269
      %p276 = scmp.eq.s32.totalorder %s19, 1
      %p277 = por %p275, %p276
      %p278 = scmp.ne.s32.totalorder %s270, %s273
      %p279 = scmp.eq.s32.totalorder %s19, 0
      %p280 = por %p278, %p279
      %p281 = scmp.ne.s32.totalorder %s270, %s273
      %p282 = scmp.eq.s32.totalorder %s24, 1
      %p283 = por %p281, %p282
      %p284 = scmp.ne.s32.totalorder %s273, %s274
      %p285 = scmp.eq.s32.totalorder %s24, 0
      %p286 = por %p284, %p285
      %p287 = scmp.ne.s32.totalorder %s273, %s274
      %p288 = scmp.eq.s32.totalorder %s25, 1
      %p289 = por %p287, %p288
      %p291 = scmp.ne.s32.totalorder %s274, %s290
      %p292 = scmp.eq.s32.totalorder %s25, 0
      %p293 = por %p291, %p292
      %p294 = scmp.le.s32.totalorder 1, %s19
      %p295 = scmp.lt.s32.totalorder %s19, 3
      %p296 = pnand %p294, %p295
      %p297 = pneg %p296
      // Predicated region
      $region9: #{tpu_custom_call.1} parent=5 // pred_check
        _
      $region10: #{tpu_custom_call.1} parent=5 // pred_check_branch
        %299 = sbr.rel (%p296) target = $region12
      $region11: #{tpu_custom_call.1} parent=5 // pred_region
        %s300 = ssub.s32 %s19, 1
        // Predicated region
        $region13: #{tpu_custom_call.1} parent=11 // pred_check
          %p301 = pneg %p92
        $region14: #{tpu_custom_call.1} parent=11 // pred_check_branch
          %303 = sbr.rel (%p301) target = $region16
        $region15: #{tpu_custom_call.1} parent=11 // pred_region
          _
        $region16: #{tpu_custom_call.1} parent=11 // pred_fallthru
          _
        // Predicated region
        $region17: #{tpu_custom_call.1} parent=11 // pred_check
          %p304 = pneg %p113
        $region18: #{tpu_custom_call.1} parent=11 // pred_check_branch
          %306 = sbr.rel (%p304) target = $region20
        $region19: #{tpu_custom_call.1} parent=11 // pred_region
          _
        $region20: #{tpu_custom_call.1} parent=11 // pred_fallthru
          _
        // Predicated region
        $region21: #{tpu_custom_call.1} parent=11 // pred_check
          %p307 = pneg %p134
        $region22: #{tpu_custom_call.1} parent=11 // pred_check_branch
          %309 = sbr.rel (%p307) target = $region24
        $region23: #{tpu_custom_call.1} parent=11 // pred_region
          _
        $region24: #{tpu_custom_call.1} parent=11 // pred_fallthru
          _
        // Predicated region
        $region25: #{tpu_custom_call.1} parent=11 // pred_check
          %p310 = pneg %p155
        $region26: #{tpu_custom_call.1} parent=11 // pred_check_branch
          %312 = sbr.rel (%p310) target = $region28
        $region27: #{tpu_custom_call.1} parent=11 // pred_region
          %s314 = ssub.s32 4096, 4096
          %315 = vsyncadd [#allocation3], %s314
          %s316 = sshll.u32 [#allocation2], 4
          %s317 = int_to_ptr.vmem [resolvable:$true] %s316
          %322 = dma.hbm_to_vmem [thread:$0]  %s5, 4096, %s317, [#allocation3], 128, 128, 8
        $region28: #{tpu_custom_call.1} parent=11 // pred_fallthru
          _
        // Predicated region
        $region29: #{tpu_custom_call.1} parent=11 // pred_check
          %p323 = pneg %p176
        $region30: #{tpu_custom_call.1} parent=11 // pred_check_branch
          %325 = sbr.rel (%p323) target = $region32
        $region31: #{tpu_custom_call.1} parent=11 // pred_region
          _
        $region32: #{tpu_custom_call.1} parent=11 // pred_fallthru
          _
        // Predicated region
        $region33: #{tpu_custom_call.1} parent=11 // pred_check
          %p326 = pneg %p197
        $region34: #{tpu_custom_call.1} parent=11 // pred_check_branch
          %328 = sbr.rel (%p326) target = $region36
        $region35: #{tpu_custom_call.1} parent=11 // pred_region
          %s330 = ssub.s32 4096, 4096
          %331 = vsyncadd [#allocation5], %s330
          %s332 = sshll.u32 [#allocation4], 4
          %s333 = int_to_ptr.vmem [resolvable:$true] %s332
          %338 = dma.hbm_to_vmem [thread:$0]  %s7, 4096, %s333, [#allocation5], 128, 128, 8
        $region36: #{tpu_custom_call.1} parent=11 // pred_fallthru
          _
        // Predicated region
        $region37: #{tpu_custom_call.1} parent=11 // pred_check
          %p339 = pneg %p218
        $region38: #{tpu_custom_call.1} parent=11 // pred_check_branch
          %341 = sbr.rel (%p339) target = $region40
        $region39: #{tpu_custom_call.1} parent=11 // pred_region
          _
        $region40: #{tpu_custom_call.1} parent=11 // pred_fallthru
          _
        // Predicated region
        $region41: #{tpu_custom_call.1} parent=11 // pred_check
          %p342 = pneg %p239
        $region42: #{tpu_custom_call.1} parent=11 // pred_check_branch
          %344 = sbr.rel (%p342) target = $region44
        $region43: #{tpu_custom_call.1} parent=11 // pred_region
          _
        $region44: #{tpu_custom_call.1} parent=11 // pred_fallthru
          _
        // Predicated region
        $region45: #{tpu_custom_call.1} parent=11 // pred_check
          %p345 = pneg %p260
        $region46: #{tpu_custom_call.1} parent=11 // pred_check_branch
          %347 = sbr.rel (%p345) target = $region48
        $region47: #{tpu_custom_call.1} parent=11 // pred_region
          _
        $region48: #{tpu_custom_call.1} parent=11 // pred_fallthru
          _
      $region12: #{tpu_custom_call.1} parent=5 // pred_fallthru
        _
      %p348 = scmp.lt.s32.totalorder %s19, 2
      // Predicated region
      $region49: #{tpu_custom_call.1} parent=5 // pred_check
        %p349 = pneg %p348
      $region50: #{tpu_custom_call.1} parent=5 // pred_check_branch
        %351 = sbr.rel (%p349) target = $region52
      $region51: #{tpu_custom_call.1} parent=5 // pred_region
        // Predicated region
        $region53: #{tpu_custom_call.1} parent=51 // pred_check
          %p352 = pneg %p39
        $region54: #{tpu_custom_call.1} parent=51 // pred_check_branch
          %354 = sbr.rel (%p352) target = $region56
        $region55: #{tpu_custom_call.1} parent=51 // pred_region
          %s355 = smul.u32 4, %s19
          %p356 = scmp.lt.s32.totalorder %s355, 7
          %s357 = scalar_select %p356, %s355, 7
          %s358 = smul.addr %s357, 8
          %s359 = scalar_lea.vmem %s0, %s358
          %s360 = smul.u32 4, %s19
        $region56: #{tpu_custom_call.1} parent=51 // pred_fallthru
          _
        // Predicated region
        $region57: #{tpu_custom_call.1} parent=51 // pred_check
          %p361 = pneg %p65
        $region58: #{tpu_custom_call.1} parent=51 // pred_check_branch
          %363 = sbr.rel (%p361) target = $region60
        $region59: #{tpu_custom_call.1} parent=51 // pred_region
          %s364 = smul.u32 4, %s19
          %p365 = scmp.lt.s32.totalorder %s364, 7
          %s366 = scalar_select %p365, %s364, 7
          %s367 = smul.addr %s366, 8
          %s368 = scalar_lea.vmem %s1, %s367
          %s369 = smul.u32 4, %s19
        $region60: #{tpu_custom_call.1} parent=51 // pred_fallthru
          _
      $region52: #{tpu_custom_call.1} parent=5 // pred_fallthru
        _
      %p370 = scmp.le.s32.totalorder 1, %s19
      %p371 = scmp.lt.s32.totalorder %s19, 3
      %p372 = pnand %p370, %p371
      %p373 = pneg %p372
      // Predicated region
      $region61: #{tpu_custom_call.1} parent=5 // pred_check
        _
      $region62: #{tpu_custom_call.1} parent=5 // pred_check_branch
        %375 = sbr.rel (%p372) target = $region64
      $region63: #{tpu_custom_call.1} parent=5 // pred_region
        %s376 = ssub.s32 %s19, 1
        // Predicated region
        $region65: #{tpu_custom_call.1} parent=63 // pred_check
          %p377 = pneg %p155
        $region66: #{tpu_custom_call.1} parent=63 // pred_check_branch
          %379 = sbr.rel (%p377) target = $region68
        $region67: #{tpu_custom_call.1} parent=63 // pred_region
          %380 = dma.done [#allocation3], 4096
        $region68: #{tpu_custom_call.1} parent=63 // pred_fallthru
          _
        // Predicated region
        $region69: #{tpu_custom_call.1} parent=63 // pred_check
          %p381 = pneg %p197
        $region70: #{tpu_custom_call.1} parent=63 // pred_check_branch
          %383 = sbr.rel (%p381) target = $region72
        $region71: #{tpu_custom_call.1} parent=63 // pred_region
          %384 = dma.done [#allocation5], 4096
        $region72: #{tpu_custom_call.1} parent=63 // pred_fallthru
          _
        %s385 = smul.u32 4, %s24
        %p386 = scmp.lt.s32.totalorder %s385, 7
        %s387 = scalar_select %p386, %s385, 7
        %s388 = smul.addr %s387, 8
        %s389 = scalar_lea.vmem %s0, %s388
        %p390 = pneg %p45
        %p391 = pneg %p42
        %s392 = smul.u32 4, %s24
        %p393 = scmp.lt.s32.totalorder %s392, 7
        %s394 = scalar_select %p393, %s392, 7
        %s395 = smul.addr %s394, 8
        %s396 = scalar_lea.vmem %s1, %s395
        %p397 = pneg %p71
        %p398 = pneg %p68
        %p399 = pneg %p92
        %p400 = pneg %p89
        %p401 = pneg %p113
        %p402 = pneg %p110
        %p403 = pneg %p134
        %p404 = pneg %p131
        %p405 = pneg %p155
        %p406 = pneg %p152
        %p407 = pneg %p176
        %p408 = pneg %p173
        %p409 = pneg %p197
        %p410 = pneg %p194
        %p411 = pneg %p218
        %p412 = pneg %p215
        %p413 = pneg %p239
        %p414 = pneg %p236
        %p415 = pneg %p260
        %p416 = pneg %p257
        %p417 = pneg %p286
        %p418 = pneg %p283
        %s419 = smul.u32 4, %s24
        %p420 = scmp.lt.s32.totalorder %s419, 7
        %s421 = scalar_select %p420, %s419, 7
        %s422 = smul.addr %s421, 8
        %s423 = scalar_lea.vmem %s11, %s422
        %s424 = smul.u32 4, %s24
        %p425 = scmp.lt.s32.totalorder %s424, 7
        %s426 = scalar_select %p425, %s424, 7
        %s427 = smul.addr %s426, 8
        %s428 = scalar_lea.vmem %s0, %s427
        %s429 = smul.u32 4, %s24
        %s430 = smul.u32 4, %s24
        %p431 = scmp.lt.s32.totalorder %s430, 7
        %s432 = scalar_select %p431, %s430, 7
        %s433 = smul.addr %s432, 8
        %s434 = scalar_lea.vmem %s1, %s433
        %s435 = smul.u32 4, %s24
        %s436 = smul.u32 4, %s24
        %p437 = scmp.lt.s32.totalorder %s436, 7
        %s438 = scalar_select %p437, %s436, 7
        %s439 = smul.addr %s438, 8
        %s440 = scalar_lea.vmem %s11, %s439
        %s441 = smul.u32 4, %s24
        %v442 = vld [vmem:[%s428] sm:$0xff]
        %v443 = vld [vmem:[%s428 + $0x8] sm:$0xff]
        %v444 = vld [vmem:[%s428 + $0x10] sm:$0xff]
        %v445 = vld [vmem:[%s428 + $0x18] sm:$0xff]
        %v446 = vld [vmem:[%s3] sm:$0xff]
        %v447 = vld [vmem:[%s3 + $0x8] sm:$0xff]
        %v448 = vld [vmem:[%s4] sm:$0x1]
        %v450 = vlaneseq
        %v451 = vshrl.u32 %v450, 7
        %v452 = vsub.s32 0, %v451
        %v453 = vrot.slane %v448, %v452
        %vm455 = vcmask 130048
        %v457 = vsel %vm455, %v442, 0
        %v460 = vsel %vm455, %v443, 0
        %v463 = vsel %vm455, %v444, 0
        %v466 = vsel %vm455, %v445, 0
        %468 = vmatprep.subr.mxu0 0.0
        %469 = vmatpush1.msra.mxu0 %v446
        %470 = vmatprep.subr.mxu0 0.0
        %471 = vmatpush1.msra.mxu0 %v447
        %472 = vmatprep.subr.mxu0 0.0
        %473 = vmatpush1.msra.mxu0 0.0
        %474 = vmatprep.subr.mxu0 0.0
        %475 = vmatpush1.msra.mxu0 0.0
        %476 = vmatprep.subr.mxu0 0.0
        %477 = vmatpush1.msra.mxu0 0.0
        %478 = vmatprep.subr.mxu0 0.0
        %479 = vmatpush1.msra.mxu0 0.0
        %480 = vmatprep.subr.mxu0 0.0
        %481 = vmatpush1.msra.mxu0 0.0
        %482 = vmatprep.subr.mxu0 0.0
        %483 = vmatpush1.msra.mxu0 0.0
        %484 = vmatprep.subr.mxu0 0.0
        %485 = vmatpush1.msra.mxu0 0.0
        %486 = vmatprep.subr.mxu0 0.0
        %487 = vmatpush1.msra.mxu0 0.0
        %488 = vmatprep.subr.mxu0 0.0
        %489 = vmatpush1.msra.mxu0 0.0
        %490 = vmatprep.subr.mxu0 0.0
        %491 = vmatpush1.msra.mxu0 0.0
        %492 = vmatprep.subr.mxu0 0.0
        %493 = vmatpush1.msra.mxu0 0.0
        %494 = vmatprep.subr.mxu0 0.0
        %495 = vmatpush1.msra.mxu0 0.0
        %496 = vmatprep.subr.mxu0 0.0
        %497 = vmatpush1.msra.mxu0 0.0
        %498 = vmatprep.subr.mxu0 0.0
        %499 = vmatpush1.msra.mxu0 0.0
        %500 = vmatprep.subr.mxu0 0.0
        %501 = vmatpush1.msra.mxu0 0.0
        %502 = vmatprep.subr.mxu0 0.0
        %503 = vmatpush1.msra.mxu0 0.0
        %504 = vmatprep.subr.mxu0 0.0
        %505 = vmatpush1.msra.mxu0 0.0
        %506 = vmatprep.subr.mxu0 0.0
        %507 = vmatpush1.msra.mxu0 0.0
        %508 = vmatprep.subr.mxu0 0.0
        %509 = vmatpush1.msra.mxu0 0.0
        %510 = vmatprep.subr.mxu0 0.0
        %511 = vmatpush1.msra.mxu0 0.0
        %512 = vmatprep.subr.mxu0 0.0
        %513 = vmatpush1.msra.mxu0 0.0
        %514 = vmatprep.subr.mxu0 0.0
        %515 = vmatpush1.msra.mxu0 0.0
        %516 = vmatprep.subr.mxu0 0.0
        %517 = vmatpush1.msra.mxu0 0.0
        %518 = vmatprep.subr.mxu0 0.0
        %519 = vmatpush1.msra.mxu0 0.0
        %520 = vmatprep.subr.mxu0 0.0
        %521 = vmatpush1.msra.mxu0 0.0
        %522 = vmatprep.subr.mxu0 0.0
        %523 = vmatpush1.msra.mxu0 0.0
        %524 = vmatprep.subr.mxu0 0.0
        %525 = vmatpush1.msra.mxu0 0.0
        %526 = vmatprep.subr.mxu0 0.0
        %527 = vmatpush1.msra.mxu0 0.0
        %528 = vmatprep.subr.mxu0 0.0
        %529 = vmatpush1.msra.mxu0 0.0
        %530 = vmatprep.subr.mxu0 0.0
        %531 = vmatpush1.msra.mxu0 0.0
        %532 = vmatprep.mubr.f32.mxu0 0.0
        %533 = vmatmul.mubr.f32.gmra.mrb[0].mxu0 %v457
        %v534 = vpop.f32.mrb[0].mxu0
        %v535 = vadd.f32 %v453, %v534
        %v536 = vpop.f32.mrb[0].mxu0
        %537 = vmatprep.mubr.f32.mxu0 0.0
        %538 = vmatmul.mubr.f32.gmra.mrb[0].mxu0 %v460
        %v539 = vpop.f32.mrb[0].mxu0
        %v540 = vadd.f32 %v453, %v539
        %v541 = vpop.f32.mrb[0].mxu0
        %542 = vmatprep.mubr.f32.mxu0 0.0
        %543 = vmatmul.mubr.f32.gmra.mrb[0].mxu0 %v463
        %v544 = vpop.f32.mrb[0].mxu0
        %v545 = vadd.f32 %v453, %v544
        %v546 = vpop.f32.mrb[0].mxu0
        %547 = vmatprep.mubr.f32.mxu0 0.0
        %548 = vmatmul.mubr.f32.gmra.mrb[0].mxu0 %v466
        %v549 = vpop.f32.mrb[0].mxu0
        %v550 = vadd.f32 %v453, %v549
        %v551 = vpop.f32.mrb[0].mxu0
        %552 = vdwg.mxu0
        %v553 = vld [vmem:[%s2] sm:$0xff]
        %v554 = vld [vmem:[%s2 + $0x8] sm:$0xff]
        %v555 = vld [vmem:[%s2 + $0x10] sm:$0xff]
        %v556 = vld [vmem:[%s2 + $0x18] sm:$0xff]
        %v557 = vld [vmem:[%s6] sm:$0xff]
        %559 = vset.pattern.permute.xlu0 0
        %560 = vperm.xlu0 %559, %v553
        %v561 = vpop.permute.xlu0 %560
        %564 = vset.pattern.permute.xlu0 0
        %565 = vperm.xlu0 %564, %v554
        %v566 = vpop.permute.xlu0 %565
        %569 = vset.pattern.permute.xlu0 0
        %570 = vperm.xlu0 %569, %v555
        %v571 = vpop.permute.xlu0 %570
        %574 = vset.pattern.permute.xlu0 0
        %575 = vperm.xlu0 %574, %v556
        %v576 = vpop.permute.xlu0 %575
        %v578 = vmul.f32 %v535, %v561
        %v579 = vmul.f32 %v540, %v566
        %v580 = vmul.f32 %v545, %v571
        %v581 = vmul.f32 %v550, %v576
        %v582 = vld [vmem:[#allocation2] sm:$0xff]
        %v583 = vld [vmem:[#allocation2 + $0x8] sm:$0xff]
        %v584 = vld [vmem:[#allocation2 + $0x10] sm:$0xff]
        %v585 = vld [vmem:[#allocation2 + $0x18] sm:$0xff]
        %vm586 = vcmask 261120
        %v588 = vsel %vm586, %v578, 0
        %v591 = vsel %vm586, %v579, 0
        %v594 = vsel %vm586, %v580, 0
        %v597 = vsel %vm586, %v581, 0
        %599 = vmatprep.subr.mxu0 0.0
        %600 = vmatpush1.msra.mxu0 %v582
        %601 = vmatprep.subr.mxu0 0.0
        %602 = vmatpush1.msra.mxu0 %v583
        %603 = vmatprep.subr.mxu0 0.0
        %604 = vmatpush1.msra.mxu0 %v584
        %605 = vmatprep.subr.mxu0 0.0
        %606 = vmatpush1.msra.mxu0 %v585
        %607 = vmatprep.subr.mxu0 0.0
        %608 = vmatpush1.msra.mxu0 0.0
        %609 = vmatprep.subr.mxu0 0.0
        %610 = vmatpush1.msra.mxu0 0.0
        %611 = vmatprep.subr.mxu0 0.0
        %612 = vmatpush1.msra.mxu0 0.0
        %613 = vmatprep.subr.mxu0 0.0
        %614 = vmatpush1.msra.mxu0 0.0
        %615 = vmatprep.subr.mxu0 0.0
        %616 = vmatpush1.msra.mxu0 0.0
        %617 = vmatprep.subr.mxu0 0.0
        %618 = vmatpush1.msra.mxu0 0.0
        %619 = vmatprep.subr.mxu0 0.0
        %620 = vmatpush1.msra.mxu0 0.0
        %621 = vmatprep.subr.mxu0 0.0
        %622 = vmatpush1.msra.mxu0 0.0
        %623 = vmatprep.subr.mxu0 0.0
        %624 = vmatpush1.msra.mxu0 0.0
        %625 = vmatprep.subr.mxu0 0.0
        %626 = vmatpush1.msra.mxu0 0.0
        %627 = vmatprep.subr.mxu0 0.0
        %628 = vmatpush1.msra.mxu0 0.0
        %629 = vmatprep.subr.mxu0 0.0
        %630 = vmatpush1.msra.mxu0 0.0
        %631 = vmatprep.subr.mxu0 0.0
        %632 = vmatpush1.msra.mxu0 0.0
        %633 = vmatprep.subr.mxu0 0.0
        %634 = vmatpush1.msra.mxu0 0.0
        %635 = vmatprep.subr.mxu0 0.0
        %636 = vmatpush1.msra.mxu0 0.0
        %637 = vmatprep.subr.mxu0 0.0
        %638 = vmatpush1.msra.mxu0 0.0
        %639 = vmatprep.subr.mxu0 0.0
        %640 = vmatpush1.msra.mxu0 0.0
        %641 = vmatprep.subr.mxu0 0.0
        %642 = vmatpush1.msra.mxu0 0.0
        %643 = vmatprep.subr.mxu0 0.0
        %644 = vmatpush1.msra.mxu0 0.0
        %645 = vmatprep.subr.mxu0 0.0
        %646 = vmatpush1.msra.mxu0 0.0
        %647 = vmatprep.subr.mxu0 0.0
        %648 = vmatpush1.msra.mxu0 0.0
        %649 = vmatprep.subr.mxu0 0.0
        %650 = vmatpush1.msra.mxu0 0.0
        %651 = vmatprep.subr.mxu0 0.0
        %652 = vmatpush1.msra.mxu0 0.0
        %653 = vmatprep.subr.mxu0 0.0
        %654 = vmatpush1.msra.mxu0 0.0
        %655 = vmatprep.subr.mxu0 0.0
        %656 = vmatpush1.msra.mxu0 0.0
        %657 = vmatprep.subr.mxu0 0.0
        %658 = vmatpush1.msra.mxu0 0.0
        %659 = vmatprep.subr.mxu0 0.0
        %660 = vmatpush1.msra.mxu0 0.0
        %661 = vmatprep.subr.mxu0 0.0
        %662 = vmatpush1.msra.mxu0 0.0
        %663 = vmatprep.mubr.f32.mxu0 0.0
        %664 = vmatmul.mubr.f32.gmra.mrb[0].mxu0 %v588
        %v665 = vpop.f32.mrb[0].mxu0
        %v666 = vadd.f32 0.0, %v665
        %v667 = vpop.f32.mrb[0].mxu0
        %668 = vmatprep.mubr.f32.mxu0 0.0
        %669 = vmatmul.mubr.f32.gmra.mrb[0].mxu0 %v591
        %v670 = vpop.f32.mrb[0].mxu0
        %v671 = vadd.f32 0.0, %v670
        %v672 = vpop.f32.mrb[0].mxu0
        %673 = vmatprep.mubr.f32.mxu0 0.0
        %674 = vmatmul.mubr.f32.gmra.mrb[0].mxu0 %v594
        %v675 = vpop.f32.mrb[0].mxu0
        %v676 = vadd.f32 0.0, %v675
        %v677 = vpop.f32.mrb[0].mxu0
        %678 = vmatprep.mubr.f32.mxu0 0.0
        %679 = vmatmul.mubr.f32.gmra.mrb[0].mxu0 %v597
        %v680 = vpop.f32.mrb[0].mxu0
        %v681 = vadd.f32 0.0, %v680
        %v682 = vpop.f32.mrb[0].mxu0
        %683 = vdwg.mxu0
        %vm684 = vcmask 64512
        %v685 = vsel %vm684, %v553, 0
        %v687 = vsel %vm684, %v554, 0
        %v689 = vsel %vm684, %v555, 0
        %v691 = vsel %vm684, %v556, 0
        %693 = vmatprep.subr.mxu0 0.0
        %694 = vmatpush1.msra.mxu0 %v557
        %695 = vmatprep.subr.mxu0 0.0
        %696 = vmatpush1.msra.mxu0 0.0
        %697 = vmatprep.subr.mxu0 0.0
        %698 = vmatpush1.msra.mxu0 0.0
        %699 = vmatprep.subr.mxu0 0.0
        %700 = vmatpush1.msra.mxu0 0.0
        %701 = vmatprep.subr.mxu0 0.0
        %702 = vmatpush1.msra.mxu0 0.0
        %703 = vmatprep.subr.mxu0 0.0
        %704 = vmatpush1.msra.mxu0 0.0
        %705 = vmatprep.subr.mxu0 0.0
        %706 = vmatpush1.msra.mxu0 0.0
        %707 = vmatprep.subr.mxu0 0.0
        %708 = vmatpush1.msra.mxu0 0.0
        %709 = vmatprep.subr.mxu0 0.0
        %710 = vmatpush1.msra.mxu0 0.0
        %711 = vmatprep.subr.mxu0 0.0
        %712 = vmatpush1.msra.mxu0 0.0
        %713 = vmatprep.subr.mxu0 0.0
        %714 = vmatpush1.msra.mxu0 0.0
        %715 = vmatprep.subr.mxu0 0.0
        %716 = vmatpush1.msra.mxu0 0.0
        %717 = vmatprep.subr.mxu0 0.0
        %718 = vmatpush1.msra.mxu0 0.0
        %719 = vmatprep.subr.mxu0 0.0
        %720 = vmatpush1.msra.mxu0 0.0
        %721 = vmatprep.subr.mxu0 0.0
        %722 = vmatpush1.msra.mxu0 0.0
        %723 = vmatprep.subr.mxu0 0.0
        %724 = vmatpush1.msra.mxu0 0.0
        %725 = vmatprep.subr.mxu0 0.0
        %726 = vmatpush1.msra.mxu0 0.0
        %727 = vmatprep.subr.mxu0 0.0
        %728 = vmatpush1.msra.mxu0 0.0
        %729 = vmatprep.subr.mxu0 0.0
        %730 = vmatpush1.msra.mxu0 0.0
        %731 = vmatprep.subr.mxu0 0.0
        %732 = vmatpush1.msra.mxu0 0.0
        %733 = vmatprep.subr.mxu0 0.0
        %734 = vmatpush1.msra.mxu0 0.0
        %735 = vmatprep.subr.mxu0 0.0
        %736 = vmatpush1.msra.mxu0 0.0
        %737 = vmatprep.subr.mxu0 0.0
        %738 = vmatpush1.msra.mxu0 0.0
        %739 = vmatprep.subr.mxu0 0.0
        %740 = vmatpush1.msra.mxu0 0.0
        %741 = vmatprep.subr.mxu0 0.0
        %742 = vmatpush1.msra.mxu0 0.0
        %743 = vmatprep.subr.mxu0 0.0
        %744 = vmatpush1.msra.mxu0 0.0
        %745 = vmatprep.subr.mxu0 0.0
        %746 = vmatpush1.msra.mxu0 0.0
        %747 = vmatprep.subr.mxu0 0.0
        %748 = vmatpush1.msra.mxu0 0.0
        %749 = vmatprep.subr.mxu0 0.0
        %750 = vmatpush1.msra.mxu0 0.0
        %751 = vmatprep.subr.mxu0 0.0
        %752 = vmatpush1.msra.mxu0 0.0
        %753 = vmatprep.subr.mxu0 0.0
        %754 = vmatpush1.msra.mxu0 0.0
        %755 = vmatprep.subr.mxu0 0.0
        %756 = vmatpush1.msra.mxu0 0.0
        %757 = vmatprep.mubr.f32.mxu0 0.0
        %758 = vmatmul.mubr.f32.gmra.mrb[0].mxu0 %v685
        %v759 = vpop.f32.mrb[0].mxu0
        %v760 = vadd.f32 %v666, %v759
        %v761 = vpop.f32.mrb[0].mxu0
        %762 = vmatprep.mubr.f32.mxu0 0.0
        %763 = vmatmul.mubr.f32.gmra.mrb[0].mxu0 %v687
        %v764 = vpop.f32.mrb[0].mxu0
        %v765 = vadd.f32 %v671, %v764
        %v766 = vpop.f32.mrb[0].mxu0
        %767 = vmatprep.mubr.f32.mxu0 0.0
        %768 = vmatmul.mubr.f32.gmra.mrb[0].mxu0 %v689
        %v769 = vpop.f32.mrb[0].mxu0
        %v770 = vadd.f32 %v676, %v769
        %v771 = vpop.f32.mrb[0].mxu0
        %772 = vmatprep.mubr.f32.mxu0 0.0
        %773 = vmatmul.mubr.f32.gmra.mrb[0].mxu0 %v691
        %v774 = vpop.f32.mrb[0].mxu0
        %v775 = vadd.f32 %v681, %v774
        %v776 = vpop.f32.mrb[0].mxu0
        %777 = vdwg.mxu0
        %778 = vset.pattern.permute.xlu0 1
        %779 = vperm.xlu0 %778, %v553
        %v780 = vpop.permute.xlu0 %779
        %782 = vset.pattern.permute.xlu0 1
        %783 = vperm.xlu0 %782, %v554
        %v784 = vpop.permute.xlu0 %783
        %786 = vset.pattern.permute.xlu0 1
        %787 = vperm.xlu0 %786, %v555
        %v788 = vpop.permute.xlu0 %787
        %790 = vset.pattern.permute.xlu0 1
        %791 = vperm.xlu0 %790, %v556
        %v792 = vpop.permute.xlu0 %791
        %v794 = vmul.f32 %v535, %v780
        %v795 = vmul.f32 %v540, %v784
        %v796 = vmul.f32 %v545, %v788
        %v797 = vmul.f32 %v550, %v792
        %s798 = scalar_lea.vmem [#allocation2], 32
        %v799 = vld [vmem:[%s798] sm:$0xff]
        %v800 = vld [vmem:[%s798 + $0x8] sm:$0xff]
        %v801 = vld [vmem:[%s798 + $0x10] sm:$0xff]
        %v802 = vld [vmem:[%s798 + $0x18] sm:$0xff]
        %v804 = vsel %vm586, %v794, 0
        %v807 = vsel %vm586, %v795, 0
        %v810 = vsel %vm586, %v796, 0
        %v813 = vsel %vm586, %v797, 0
        %815 = vmatprep.subr.mxu0 0.0
        %816 = vmatpush1.msra.mxu0 %v799
        %817 = vmatprep.subr.mxu0 0.0
        %818 = vmatpush1.msra.mxu0 %v800
        %819 = vmatprep.subr.mxu0 0.0
        %820 = vmatpush1.msra.mxu0 %v801
        %821 = vmatprep.subr.mxu0 0.0
        %822 = vmatpush1.msra.mxu0 %v802
        %823 = vmatprep.subr.mxu0 0.0
        %824 = vmatpush1.msra.mxu0 0.0
        %825 = vmatprep.subr.mxu0 0.0
        %826 = vmatpush1.msra.mxu0 0.0
        %827 = vmatprep.subr.mxu0 0.0
        %828 = vmatpush1.msra.mxu0 0.0
        %829 = vmatprep.subr.mxu0 0.0
        %830 = vmatpush1.msra.mxu0 0.0
        %831 = vmatprep.subr.mxu0 0.0
        %832 = vmatpush1.msra.mxu0 0.0
        %833 = vmatprep.subr.mxu0 0.0
        %834 = vmatpush1.msra.mxu0 0.0
        %835 = vmatprep.subr.mxu0 0.0
        %836 = vmatpush1.msra.mxu0 0.0
        %837 = vmatprep.subr.mxu0 0.0
        %838 = vmatpush1.msra.mxu0 0.0
        %839 = vmatprep.subr.mxu0 0.0
        %840 = vmatpush1.msra.mxu0 0.0
        %841 = vmatprep.subr.mxu0 0.0
        %842 = vmatpush1.msra.mxu0 0.0
        %843 = vmatprep.subr.mxu0 0.0
        %844 = vmatpush1.msra.mxu0 0.0
        %845 = vmatprep.subr.mxu0 0.0
        %846 = vmatpush1.msra.mxu0 0.0
        %847 = vmatprep.subr.mxu0 0.0
        %848 = vmatpush1.msra.mxu0 0.0
        %849 = vmatprep.subr.mxu0 0.0
        %850 = vmatpush1.msra.mxu0 0.0
        %851 = vmatprep.subr.mxu0 0.0
        %852 = vmatpush1.msra.mxu0 0.0
        %853 = vmatprep.subr.mxu0 0.0
        %854 = vmatpush1.msra.mxu0 0.0
        %855 = vmatprep.subr.mxu0 0.0
        %856 = vmatpush1.msra.mxu0 0.0
        %857 = vmatprep.subr.mxu0 0.0
        %858 = vmatpush1.msra.mxu0 0.0
        %859 = vmatprep.subr.mxu0 0.0
        %860 = vmatpush1.msra.mxu0 0.0
        %861 = vmatprep.subr.mxu0 0.0
        %862 = vmatpush1.msra.mxu0 0.0
        %863 = vmatprep.subr.mxu0 0.0
        %864 = vmatpush1.msra.mxu0 0.0
        %865 = vmatprep.subr.mxu0 0.0
        %866 = vmatpush1.msra.mxu0 0.0
        %867 = vmatprep.subr.mxu0 0.0
        %868 = vmatpush1.msra.mxu0 0.0
        %869 = vmatprep.subr.mxu0 0.0
        %870 = vmatpush1.msra.mxu0 0.0
        %871 = vmatprep.subr.mxu0 0.0
        %872 = vmatpush1.msra.mxu0 0.0
        %873 = vmatprep.subr.mxu0 0.0
        %874 = vmatpush1.msra.mxu0 0.0
        %875 = vmatprep.subr.mxu0 0.0
        %876 = vmatpush1.msra.mxu0 0.0
        %877 = vmatprep.subr.mxu0 0.0
        %878 = vmatpush1.msra.mxu0 0.0
        %879 = vmatprep.mubr.f32.mxu0 0.0
        %880 = vmatmul.mubr.f32.gmra.mrb[0].mxu0 %v804
        %v881 = vpop.f32.mrb[0].mxu0
        %v882 = vadd.f32 0.0, %v881
        %v883 = vpop.f32.mrb[0].mxu0
        %884 = vmatprep.mubr.f32.mxu0 0.0
        %885 = vmatmul.mubr.f32.gmra.mrb[0].mxu0 %v807
        %v886 = vpop.f32.mrb[0].mxu0
        %v887 = vadd.f32 0.0, %v886
        %v888 = vpop.f32.mrb[0].mxu0
        %889 = vmatprep.mubr.f32.mxu0 0.0
        %890 = vmatmul.mubr.f32.gmra.mrb[0].mxu0 %v810
        %v891 = vpop.f32.mrb[0].mxu0
        %v892 = vadd.f32 0.0, %v891
        %v893 = vpop.f32.mrb[0].mxu0
        %894 = vmatprep.mubr.f32.mxu0 0.0
        %895 = vmatmul.mubr.f32.gmra.mrb[0].mxu0 %v813
        %v896 = vpop.f32.mrb[0].mxu0
        %v897 = vadd.f32 0.0, %v896
        %v898 = vpop.f32.mrb[0].mxu0
        %899 = vdwg.mxu0
        %v900 = vadd.f32 %v760, %v882
        %v901 = vadd.f32 %v765, %v887
        %v902 = vadd.f32 %v770, %v892
        %v903 = vadd.f32 %v775, %v897
        %904 = vset.pattern.permute.xlu0 2
        %905 = vperm.xlu0 %904, %v553
        %v906 = vpop.permute.xlu0 %905
        %908 = vset.pattern.permute.xlu0 2
        %909 = vperm.xlu0 %908, %v554
        %v910 = vpop.permute.xlu0 %909
        %912 = vset.pattern.permute.xlu0 2
        %913 = vperm.xlu0 %912, %v555
        %v914 = vpop.permute.xlu0 %913
        %916 = vset.pattern.permute.xlu0 2
        %917 = vperm.xlu0 %916, %v556
        %v918 = vpop.permute.xlu0 %917
        %v920 = vmul.f32 %v535, %v906
        %v921 = vmul.f32 %v540, %v910
        %v922 = vmul.f32 %v545, %v914
        %v923 = vmul.f32 %v550, %v918
        %s924 = scalar_lea.vmem [#allocation2], 64
        %v925 = vld [vmem:[%s924] sm:$0xff]
        %v926 = vld [vmem:[%s924 + $0x8] sm:$0xff]
        %v927 = vld [vmem:[%s924 + $0x10] sm:$0xff]
        %v928 = vld [vmem:[%s924 + $0x18] sm:$0xff]
        %v930 = vsel %vm586, %v920, 0
        %v933 = vsel %vm586, %v921, 0
        %v936 = vsel %vm586, %v922, 0
        %v939 = vsel %vm586, %v923, 0
        %941 = vmatprep.subr.mxu0 0.0
        %942 = vmatpush1.msra.mxu0 %v925
        %943 = vmatprep.subr.mxu0 0.0
        %944 = vmatpush1.msra.mxu0 %v926
        %945 = vmatprep.subr.mxu0 0.0
        %946 = vmatpush1.msra.mxu0 %v927
        %947 = vmatprep.subr.mxu0 0.0
        %948 = vmatpush1.msra.mxu0 %v928
        %949 = vmatprep.subr.mxu0 0.0
        %950 = vmatpush1.msra.mxu0 0.0
        %951 = vmatprep.subr.mxu0 0.0
        %952 = vmatpush1.msra.mxu0 0.0
        %953 = vmatprep.subr.mxu0 0.0
        %954 = vmatpush1.msra.mxu0 0.0
        %955 = vmatprep.subr.mxu0 0.0
        %956 = vmatpush1.msra.mxu0 0.0
        %957 = vmatprep.subr.mxu0 0.0
        %958 = vmatpush1.msra.mxu0 0.0
        %959 = vmatprep.subr.mxu0 0.0
        %960 = vmatpush1.msra.mxu0 0.0
        %961 = vmatprep.subr.mxu0 0.0
        %962 = vmatpush1.msra.mxu0 0.0
        %963 = vmatprep.subr.mxu0 0.0
        %964 = vmatpush1.msra.mxu0 0.0
        %965 = vmatprep.subr.mxu0 0.0
        %966 = vmatpush1.msra.mxu0 0.0
        %967 = vmatprep.subr.mxu0 0.0
        %968 = vmatpush1.msra.mxu0 0.0
        %969 = vmatprep.subr.mxu0 0.0
        %970 = vmatpush1.msra.mxu0 0.0
        %971 = vmatprep.subr.mxu0 0.0
        %972 = vmatpush1.msra.mxu0 0.0
        %973 = vmatprep.subr.mxu0 0.0
        %974 = vmatpush1.msra.mxu0 0.0
        %975 = vmatprep.subr.mxu0 0.0
        %976 = vmatpush1.msra.mxu0 0.0
        %977 = vmatprep.subr.mxu0 0.0
        %978 = vmatpush1.msra.mxu0 0.0
        %979 = vmatprep.subr.mxu0 0.0
        %980 = vmatpush1.msra.mxu0 0.0
        %981 = vmatprep.subr.mxu0 0.0
        %982 = vmatpush1.msra.mxu0 0.0
        %983 = vmatprep.subr.mxu0 0.0
        %984 = vmatpush1.msra.mxu0 0.0
        %985 = vmatprep.subr.mxu0 0.0
        %986 = vmatpush1.msra.mxu0 0.0
        %987 = vmatprep.subr.mxu0 0.0
        %988 = vmatpush1.msra.mxu0 0.0
        %989 = vmatprep.subr.mxu0 0.0
        %990 = vmatpush1.msra.mxu0 0.0
        %991 = vmatprep.subr.mxu0 0.0
        %992 = vmatpush1.msra.mxu0 0.0
        %993 = vmatprep.subr.mxu0 0.0
        %994 = vmatpush1.msra.mxu0 0.0
        %995 = vmatprep.subr.mxu0 0.0
        %996 = vmatpush1.msra.mxu0 0.0
        %997 = vmatprep.subr.mxu0 0.0
        %998 = vmatpush1.msra.mxu0 0.0
        %999 = vmatprep.subr.mxu0 0.0
        %1000 = vmatpush1.msra.mxu0 0.0
        %1001 = vmatprep.subr.mxu0 0.0
        %1002 = vmatpush1.msra.mxu0 0.0
        %1003 = vmatprep.subr.mxu0 0.0
        %1004 = vmatpush1.msra.mxu0 0.0
        %1005 = vmatprep.mubr.f32.mxu0 0.0
        %1006 = vmatmul.mubr.f32.gmra.mrb[0].mxu0 %v930
        %v1007 = vpop.f32.mrb[0].mxu0
        %v1008 = vadd.f32 0.0, %v1007
        %v1009 = vpop.f32.mrb[0].mxu0
        %1010 = vmatprep.mubr.f32.mxu0 0.0
        %1011 = vmatmul.mubr.f32.gmra.mrb[0].mxu0 %v933
        %v1012 = vpop.f32.mrb[0].mxu0
        %v1013 = vadd.f32 0.0, %v1012
        %v1014 = vpop.f32.mrb[0].mxu0
        %1015 = vmatprep.mubr.f32.mxu0 0.0
        %1016 = vmatmul.mubr.f32.gmra.mrb[0].mxu0 %v936
        %v1017 = vpop.f32.mrb[0].mxu0
        %v1018 = vadd.f32 0.0, %v1017
        %v1019 = vpop.f32.mrb[0].mxu0
        %1020 = vmatprep.mubr.f32.mxu0 0.0
        %1021 = vmatmul.mubr.f32.gmra.mrb[0].mxu0 %v939
        %v1022 = vpop.f32.mrb[0].mxu0
        %v1023 = vadd.f32 0.0, %v1022
        %v1024 = vpop.f32.mrb[0].mxu0
        %1025 = vdwg.mxu0
        %v1026 = vadd.f32 %v900, %v1008
        %v1027 = vadd.f32 %v901, %v1013
        %v1028 = vadd.f32 %v902, %v1018
        %v1029 = vadd.f32 %v903, %v1023
        %1030 = vset.pattern.permute.xlu0 3
        %1031 = vperm.xlu0 %1030, %v553
        %v1032 = vpop.permute.xlu0 %1031
        %1034 = vset.pattern.permute.xlu0 3
        %1035 = vperm.xlu0 %1034, %v554
        %v1036 = vpop.permute.xlu0 %1035
        %1038 = vset.pattern.permute.xlu0 3
        %1039 = vperm.xlu0 %1038, %v555
        %v1040 = vpop.permute.xlu0 %1039
        %1042 = vset.pattern.permute.xlu0 3
        %1043 = vperm.xlu0 %1042, %v556
        %v1044 = vpop.permute.xlu0 %1043
        %v1046 = vmul.f32 %v535, %v1032
        %v1047 = vmul.f32 %v540, %v1036
        %v1048 = vmul.f32 %v545, %v1040
        %v1049 = vmul.f32 %v550, %v1044
        %s1050 = scalar_lea.vmem [#allocation2], 96
        %v1051 = vld [vmem:[%s1050] sm:$0xff]
        %v1052 = vld [vmem:[%s1050 + $0x8] sm:$0xff]
        %v1053 = vld [vmem:[%s1050 + $0x10] sm:$0xff]
        %v1054 = vld [vmem:[%s1050 + $0x18] sm:$0xff]
        %v1056 = vsel %vm586, %v1046, 0
        %v1059 = vsel %vm586, %v1047, 0
        %v1062 = vsel %vm586, %v1048, 0
        %v1065 = vsel %vm586, %v1049, 0
        %1067 = vmatprep.subr.mxu0 0.0
        %1068 = vmatpush1.msra.mxu0 %v1051
        %1069 = vmatprep.subr.mxu0 0.0
        %1070 = vmatpush1.msra.mxu0 %v1052
        %1071 = vmatprep.subr.mxu0 0.0
        %1072 = vmatpush1.msra.mxu0 %v1053
        %1073 = vmatprep.subr.mxu0 0.0
        %1074 = vmatpush1.msra.mxu0 %v1054
        %1075 = vmatprep.subr.mxu0 0.0
        %1076 = vmatpush1.msra.mxu0 0.0
        %1077 = vmatprep.subr.mxu0 0.0
        %1078 = vmatpush1.msra.mxu0 0.0
        %1079 = vmatprep.subr.mxu0 0.0
        %1080 = vmatpush1.msra.mxu0 0.0
        %1081 = vmatprep.subr.mxu0 0.0
        %1082 = vmatpush1.msra.mxu0 0.0
        %1083 = vmatprep.subr.mxu0 0.0
        %1084 = vmatpush1.msra.mxu0 0.0
        %1085 = vmatprep.subr.mxu0 0.0
        %1086 = vmatpush1.msra.mxu0 0.0
        %1087 = vmatprep.subr.mxu0 0.0
        %1088 = vmatpush1.msra.mxu0 0.0
        %1089 = vmatprep.subr.mxu0 0.0
        %1090 = vmatpush1.msra.mxu0 0.0
        %1091 = vmatprep.subr.mxu0 0.0
        %1092 = vmatpush1.msra.mxu0 0.0
        %1093 = vmatprep.subr.mxu0 0.0
        %1094 = vmatpush1.msra.mxu0 0.0
        %1095 = vmatprep.subr.mxu0 0.0
        %1096 = vmatpush1.msra.mxu0 0.0
        %1097 = vmatprep.subr.mxu0 0.0
        %1098 = vmatpush1.msra.mxu0 0.0
        %1099 = vmatprep.subr.mxu0 0.0
        %1100 = vmatpush1.msra.mxu0 0.0
        %1101 = vmatprep.subr.mxu0 0.0
        %1102 = vmatpush1.msra.mxu0 0.0
        %1103 = vmatprep.subr.mxu0 0.0
        %1104 = vmatpush1.msra.mxu0 0.0
        %1105 = vmatprep.subr.mxu0 0.0
        %1106 = vmatpush1.msra.mxu0 0.0
        %1107 = vmatprep.subr.mxu0 0.0
        %1108 = vmatpush1.msra.mxu0 0.0
        %1109 = vmatprep.subr.mxu0 0.0
        %1110 = vmatpush1.msra.mxu0 0.0
        %1111 = vmatprep.subr.mxu0 0.0
        %1112 = vmatpush1.msra.mxu0 0.0
        %1113 = vmatprep.subr.mxu0 0.0
        %1114 = vmatpush1.msra.mxu0 0.0
        %1115 = vmatprep.subr.mxu0 0.0
        %1116 = vmatpush1.msra.mxu0 0.0
        %1117 = vmatprep.subr.mxu0 0.0
        %1118 = vmatpush1.msra.mxu0 0.0
        %1119 = vmatprep.subr.mxu0 0.0
        %1120 = vmatpush1.msra.mxu0 0.0
        %1121 = vmatprep.subr.mxu0 0.0
        %1122 = vmatpush1.msra.mxu0 0.0
        %1123 = vmatprep.subr.mxu0 0.0
        %1124 = vmatpush1.msra.mxu0 0.0
        %1125 = vmatprep.subr.mxu0 0.0
        %1126 = vmatpush1.msra.mxu0 0.0
        %1127 = vmatprep.subr.mxu0 0.0
        %1128 = vmatpush1.msra.mxu0 0.0
        %1129 = vmatprep.subr.mxu0 0.0
        %1130 = vmatpush1.msra.mxu0 0.0
        %1131 = vmatprep.mubr.f32.mxu0 0.0
        %1132 = vmatmul.mubr.f32.gmra.mrb[0].mxu0 %v1056
        %v1133 = vpop.f32.mrb[0].mxu0
        %v1134 = vadd.f32 0.0, %v1133
        %v1135 = vpop.f32.mrb[0].mxu0
        %1136 = vmatprep.mubr.f32.mxu0 0.0
        %1137 = vmatmul.mubr.f32.gmra.mrb[0].mxu0 %v1059
        %v1138 = vpop.f32.mrb[0].mxu0
        %v1139 = vadd.f32 0.0, %v1138
        %v1140 = vpop.f32.mrb[0].mxu0
        %1141 = vmatprep.mubr.f32.mxu0 0.0
        %1142 = vmatmul.mubr.f32.gmra.mrb[0].mxu0 %v1062
        %v1143 = vpop.f32.mrb[0].mxu0
        %v1144 = vadd.f32 0.0, %v1143
        %v1145 = vpop.f32.mrb[0].mxu0
        %1146 = vmatprep.mubr.f32.mxu0 0.0
        %1147 = vmatmul.mubr.f32.gmra.mrb[0].mxu0 %v1065
        %v1148 = vpop.f32.mrb[0].mxu0
        %v1149 = vadd.f32 0.0, %v1148
        %v1150 = vpop.f32.mrb[0].mxu0
        %1151 = vdwg.mxu0
        %v1152 = vadd.f32 %v1026, %v1134
        %v1153 = vadd.f32 %v1027, %v1139
        %v1154 = vadd.f32 %v1028, %v1144
        %v1155 = vadd.f32 %v1029, %v1149
        %1156 = vset.pattern.permute.xlu0 4
        %1157 = vperm.xlu0 %1156, %v553
        %v1158 = vpop.permute.xlu0 %1157
        %1160 = vset.pattern.permute.xlu0 4
        %1161 = vperm.xlu0 %1160, %v554
        %v1162 = vpop.permute.xlu0 %1161
        %1164 = vset.pattern.permute.xlu0 4
        %1165 = vperm.xlu0 %1164, %v555
        %v1166 = vpop.permute.xlu0 %1165
        %1168 = vset.pattern.permute.xlu0 4
        %1169 = vperm.xlu0 %1168, %v556
        %v1170 = vpop.permute.xlu0 %1169
        %v1172 = vmul.f32 %v535, %v1158
        %v1173 = vmul.f32 %v540, %v1162
        %v1174 = vmul.f32 %v545, %v1166
        %v1175 = vmul.f32 %v550, %v1170
        %s1176 = scalar_lea.vmem [#allocation2], 128
        %v1177 = vld [vmem:[%s1176] sm:$0xff]
        %v1178 = vld [vmem:[%s1176 + $0x8] sm:$0xff]
        %v1179 = vld [vmem:[%s1176 + $0x10] sm:$0xff]
        %v1180 = vld [vmem:[%s1176 + $0x18] sm:$0xff]
        %v1182 = vsel %vm586, %v1172, 0
        %v1185 = vsel %vm586, %v1173, 0
        %v1188 = vsel %vm586, %v1174, 0
        %v1191 = vsel %vm586, %v1175, 0
        %1193 = vmatprep.subr.mxu0 0.0
        %1194 = vmatpush1.msra.mxu0 %v1177
        %1195 = vmatprep.subr.mxu0 0.0
        %1196 = vmatpush1.msra.mxu0 %v1178
        %1197 = vmatprep.subr.mxu0 0.0
        %1198 = vmatpush1.msra.mxu0 %v1179
        %1199 = vmatprep.subr.mxu0 0.0
        %1200 = vmatpush1.msra.mxu0 %v1180
        %1201 = vmatprep.subr.mxu0 0.0
        %1202 = vmatpush1.msra.mxu0 0.0
        %1203 = vmatprep.subr.mxu0 0.0
        %1204 = vmatpush1.msra.mxu0 0.0
        %1205 = vmatprep.subr.mxu0 0.0
        %1206 = vmatpush1.msra.mxu0 0.0
        %1207 = vmatprep.subr.mxu0 0.0
        %1208 = vmatpush1.msra.mxu0 0.0
        %1209 = vmatprep.subr.mxu0 0.0
        %1210 = vmatpush1.msra.mxu0 0.0
        %1211 = vmatprep.subr.mxu0 0.0
        %1212 = vmatpush1.msra.mxu0 0.0
        %1213 = vmatprep.subr.mxu0 0.0
        %1214 = vmatpush1.msra.mxu0 0.0
        %1215 = vmatprep.subr.mxu0 0.0
        %1216 = vmatpush1.msra.mxu0 0.0
        %1217 = vmatprep.subr.mxu0 0.0
        %1218 = vmatpush1.msra.mxu0 0.0
        %1219 = vmatprep.subr.mxu0 0.0
        %1220 = vmatpush1.msra.mxu0 0.0
        %1221 = vmatprep.subr.mxu0 0.0
        %1222 = vmatpush1.msra.mxu0 0.0
        %1223 = vmatprep.subr.mxu0 0.0
        %1224 = vmatpush1.msra.mxu0 0.0
        %1225 = vmatprep.subr.mxu0 0.0
        %1226 = vmatpush1.msra.mxu0 0.0
        %1227 = vmatprep.subr.mxu0 0.0
        %1228 = vmatpush1.msra.mxu0 0.0
        %1229 = vmatprep.subr.mxu0 0.0
        %1230 = vmatpush1.msra.mxu0 0.0
        %1231 = vmatprep.subr.mxu0 0.0
        %1232 = vmatpush1.msra.mxu0 0.0
        %1233 = vmatprep.subr.mxu0 0.0
        %1234 = vmatpush1.msra.mxu0 0.0
        %1235 = vmatprep.subr.mxu0 0.0
        %1236 = vmatpush1.msra.mxu0 0.0
        %1237 = vmatprep.subr.mxu0 0.0
        %1238 = vmatpush1.msra.mxu0 0.0
        %1239 = vmatprep.subr.mxu0 0.0
        %1240 = vmatpush1.msra.mxu0 0.0
        %1241 = vmatprep.subr.mxu0 0.0
        %1242 = vmatpush1.msra.mxu0 0.0
        %1243 = vmatprep.subr.mxu0 0.0
        %1244 = vmatpush1.msra.mxu0 0.0
        %1245 = vmatprep.subr.mxu0 0.0
        %1246 = vmatpush1.msra.mxu0 0.0
        %1247 = vmatprep.subr.mxu0 0.0
        %1248 = vmatpush1.msra.mxu0 0.0
        %1249 = vmatprep.subr.mxu0 0.0
        %1250 = vmatpush1.msra.mxu0 0.0
        %1251 = vmatprep.subr.mxu0 0.0
        %1252 = vmatpush1.msra.mxu0 0.0
        %1253 = vmatprep.subr.mxu0 0.0
        %1254 = vmatpush1.msra.mxu0 0.0
        %1255 = vmatprep.subr.mxu0 0.0
        %1256 = vmatpush1.msra.mxu0 0.0
        %1257 = vmatprep.mubr.f32.mxu0 0.0
        %1258 = vmatmul.mubr.f32.gmra.mrb[0].mxu0 %v1182
        %v1259 = vpop.f32.mrb[0].mxu0
        %v1260 = vadd.f32 0.0, %v1259
        %v1261 = vpop.f32.mrb[0].mxu0
        %1262 = vmatprep.mubr.f32.mxu0 0.0
        %1263 = vmatmul.mubr.f32.gmra.mrb[0].mxu0 %v1185
        %v1264 = vpop.f32.mrb[0].mxu0
        %v1265 = vadd.f32 0.0, %v1264
        %v1266 = vpop.f32.mrb[0].mxu0
        %1267 = vmatprep.mubr.f32.mxu0 0.0
        %1268 = vmatmul.mubr.f32.gmra.mrb[0].mxu0 %v1188
        %v1269 = vpop.f32.mrb[0].mxu0
        %v1270 = vadd.f32 0.0, %v1269
        %v1271 = vpop.f32.mrb[0].mxu0
        %1272 = vmatprep.mubr.f32.mxu0 0.0
        %1273 = vmatmul.mubr.f32.gmra.mrb[0].mxu0 %v1191
        %v1274 = vpop.f32.mrb[0].mxu0
        %v1275 = vadd.f32 0.0, %v1274
        %v1276 = vpop.f32.mrb[0].mxu0
        %1277 = vdwg.mxu0
        %v1278 = vadd.f32 %v1152, %v1260
        %v1279 = vadd.f32 %v1153, %v1265
        %v1280 = vadd.f32 %v1154, %v1270
        %v1281 = vadd.f32 %v1155, %v1275
        %1282 = vset.pattern.permute.xlu0 5
        %1283 = vperm.xlu0 %1282, %v553
        %v1284 = vpop.permute.xlu0 %1283
        %1286 = vset.pattern.permute.xlu0 5
        %1287 = vperm.xlu0 %1286, %v554
        %v1288 = vpop.permute.xlu0 %1287
        %1290 = vset.pattern.permute.xlu0 5
        %1291 = vperm.xlu0 %1290, %v555
        %v1292 = vpop.permute.xlu0 %1291
        %1294 = vset.pattern.permute.xlu0 5
        %1295 = vperm.xlu0 %1294, %v556
        %v1296 = vpop.permute.xlu0 %1295
        %v1298 = vmul.f32 %v535, %v1284
        %v1299 = vmul.f32 %v540, %v1288
        %v1300 = vmul.f32 %v545, %v1292
        %v1301 = vmul.f32 %v550, %v1296
        %s1302 = scalar_lea.vmem [#allocation2], 160
        %v1303 = vld [vmem:[%s1302] sm:$0xff]
        %v1304 = vld [vmem:[%s1302 + $0x8] sm:$0xff]
        %v1305 = vld [vmem:[%s1302 + $0x10] sm:$0xff]
        %v1306 = vld [vmem:[%s1302 + $0x18] sm:$0xff]
        %v1308 = vsel %vm586, %v1298, 0
        %v1311 = vsel %vm586, %v1299, 0
        %v1314 = vsel %vm586, %v1300, 0
        %v1317 = vsel %vm586, %v1301, 0
        %1319 = vmatprep.subr.mxu0 0.0
        %1320 = vmatpush1.msra.mxu0 %v1303
        %1321 = vmatprep.subr.mxu0 0.0
        %1322 = vmatpush1.msra.mxu0 %v1304
        %1323 = vmatprep.subr.mxu0 0.0
        %1324 = vmatpush1.msra.mxu0 %v1305
        %1325 = vmatprep.subr.mxu0 0.0
        %1326 = vmatpush1.msra.mxu0 %v1306
        %1327 = vmatprep.subr.mxu0 0.0
        %1328 = vmatpush1.msra.mxu0 0.0
        %1329 = vmatprep.subr.mxu0 0.0
        %1330 = vmatpush1.msra.mxu0 0.0
        %1331 = vmatprep.subr.mxu0 0.0
        %1332 = vmatpush1.msra.mxu0 0.0
        %1333 = vmatprep.subr.mxu0 0.0
        %1334 = vmatpush1.msra.mxu0 0.0
        %1335 = vmatprep.subr.mxu0 0.0
        %1336 = vmatpush1.msra.mxu0 0.0
        %1337 = vmatprep.subr.mxu0 0.0
        %1338 = vmatpush1.msra.mxu0 0.0
        %1339 = vmatprep.subr.mxu0 0.0
        %1340 = vmatpush1.msra.mxu0 0.0
        %1341 = vmatprep.subr.mxu0 0.0
        %1342 = vmatpush1.msra.mxu0 0.0
        %1343 = vmatprep.subr.mxu0 0.0
        %1344 = vmatpush1.msra.mxu0 0.0
        %1345 = vmatprep.subr.mxu0 0.0
        %1346 = vmatpush1.msra.mxu0 0.0
        %1347 = vmatprep.subr.mxu0 0.0
        %1348 = vmatpush1.msra.mxu0 0.0
        %1349 = vmatprep.subr.mxu0 0.0
        %1350 = vmatpush1.msra.mxu0 0.0
        %1351 = vmatprep.subr.mxu0 0.0
        %1352 = vmatpush1.msra.mxu0 0.0
        %1353 = vmatprep.subr.mxu0 0.0
        %1354 = vmatpush1.msra.mxu0 0.0
        %1355 = vmatprep.subr.mxu0 0.0
        %1356 = vmatpush1.msra.mxu0 0.0
        %1357 = vmatprep.subr.mxu0 0.0
        %1358 = vmatpush1.msra.mxu0 0.0
        %1359 = vmatprep.subr.mxu0 0.0
        %1360 = vmatpush1.msra.mxu0 0.0
        %1361 = vmatprep.subr.mxu0 0.0
        %1362 = vmatpush1.msra.mxu0 0.0
        %1363 = vmatprep.subr.mxu0 0.0
        %1364 = vmatpush1.msra.mxu0 0.0
        %1365 = vmatprep.subr.mxu0 0.0
        %1366 = vmatpush1.msra.mxu0 0.0
        %1367 = vmatprep.subr.mxu0 0.0
        %1368 = vmatpush1.msra.mxu0 0.0
        %1369 = vmatprep.subr.mxu0 0.0
        %1370 = vmatpush1.msra.mxu0 0.0
        %1371 = vmatprep.subr.mxu0 0.0
        %1372 = vmatpush1.msra.mxu0 0.0
        %1373 = vmatprep.subr.mxu0 0.0
        %1374 = vmatpush1.msra.mxu0 0.0
        %1375 = vmatprep.subr.mxu0 0.0
        %1376 = vmatpush1.msra.mxu0 0.0
        %1377 = vmatprep.subr.mxu0 0.0
        %1378 = vmatpush1.msra.mxu0 0.0
        %1379 = vmatprep.subr.mxu0 0.0
        %1380 = vmatpush1.msra.mxu0 0.0
        %1381 = vmatprep.subr.mxu0 0.0
        %1382 = vmatpush1.msra.mxu0 0.0
        %1383 = vmatprep.mubr.f32.mxu0 0.0
        %1384 = vmatmul.mubr.f32.gmra.mrb[0].mxu0 %v1308
        %v1385 = vpop.f32.mrb[0].mxu0
        %v1386 = vadd.f32 0.0, %v1385
        %v1387 = vpop.f32.mrb[0].mxu0
        %1388 = vmatprep.mubr.f32.mxu0 0.0
        %1389 = vmatmul.mubr.f32.gmra.mrb[0].mxu0 %v1311
        %v1390 = vpop.f32.mrb[0].mxu0
        %v1391 = vadd.f32 0.0, %v1390
        %v1392 = vpop.f32.mrb[0].mxu0
        %1393 = vmatprep.mubr.f32.mxu0 0.0
        %1394 = vmatmul.mubr.f32.gmra.mrb[0].mxu0 %v1314
        %v1395 = vpop.f32.mrb[0].mxu0
        %v1396 = vadd.f32 0.0, %v1395
        %v1397 = vpop.f32.mrb[0].mxu0
        %1398 = vmatprep.mubr.f32.mxu0 0.0
        %1399 = vmatmul.mubr.f32.gmra.mrb[0].mxu0 %v1317
        %v1400 = vpop.f32.mrb[0].mxu0
        %v1401 = vadd.f32 0.0, %v1400
        %v1402 = vpop.f32.mrb[0].mxu0
        %1403 = vdwg.mxu0
        %v1404 = vadd.f32 %v1278, %v1386
        %v1405 = vadd.f32 %v1279, %v1391
        %v1406 = vadd.f32 %v1280, %v1396
        %v1407 = vadd.f32 %v1281, %v1401
        %1408 = vset.pattern.permute.xlu0 6
        %1409 = vperm.xlu0 %1408, %v553
        %v1410 = vpop.permute.xlu0 %1409
        %1412 = vset.pattern.permute.xlu0 6
        %1413 = vperm.xlu0 %1412, %v554
        %v1414 = vpop.permute.xlu0 %1413
        %1416 = vset.pattern.permute.xlu0 6
        %1417 = vperm.xlu0 %1416, %v555
        %v1418 = vpop.permute.xlu0 %1417
        %1420 = vset.pattern.permute.xlu0 6
        %1421 = vperm.xlu0 %1420, %v556
        %v1422 = vpop.permute.xlu0 %1421
        %v1424 = vmul.f32 %v535, %v1410
        %v1425 = vmul.f32 %v540, %v1414
        %v1426 = vmul.f32 %v545, %v1418
        %v1427 = vmul.f32 %v550, %v1422
        %s1428 = scalar_lea.vmem [#allocation2], 192
        %v1429 = vld [vmem:[%s1428] sm:$0xff]
        %v1430 = vld [vmem:[%s1428 + $0x8] sm:$0xff]
        %v1431 = vld [vmem:[%s1428 + $0x10] sm:$0xff]
        %v1432 = vld [vmem:[%s1428 + $0x18] sm:$0xff]
        %v1434 = vsel %vm586, %v1424, 0
        %v1437 = vsel %vm586, %v1425, 0
        %v1440 = vsel %vm586, %v1426, 0
        %v1443 = vsel %vm586, %v1427, 0
        %1445 = vmatprep.subr.mxu0 0.0
        %1446 = vmatpush1.msra.mxu0 %v1429
        %1447 = vmatprep.subr.mxu0 0.0
        %1448 = vmatpush1.msra.mxu0 %v1430
        %1449 = vmatprep.subr.mxu0 0.0
        %1450 = vmatpush1.msra.mxu0 %v1431
        %1451 = vmatprep.subr.mxu0 0.0
        %1452 = vmatpush1.msra.mxu0 %v1432
        %1453 = vmatprep.subr.mxu0 0.0
        %1454 = vmatpush1.msra.mxu0 0.0
        %1455 = vmatprep.subr.mxu0 0.0
        %1456 = vmatpush1.msra.mxu0 0.0
        %1457 = vmatprep.subr.mxu0 0.0
        %1458 = vmatpush1.msra.mxu0 0.0
        %1459 = vmatprep.subr.mxu0 0.0
        %1460 = vmatpush1.msra.mxu0 0.0
        %1461 = vmatprep.subr.mxu0 0.0
        %1462 = vmatpush1.msra.mxu0 0.0
        %1463 = vmatprep.subr.mxu0 0.0
        %1464 = vmatpush1.msra.mxu0 0.0
        %1465 = vmatprep.subr.mxu0 0.0
        %1466 = vmatpush1.msra.mxu0 0.0
        %1467 = vmatprep.subr.mxu0 0.0
        %1468 = vmatpush1.msra.mxu0 0.0
        %1469 = vmatprep.subr.mxu0 0.0
        %1470 = vmatpush1.msra.mxu0 0.0
        %1471 = vmatprep.subr.mxu0 0.0
        %1472 = vmatpush1.msra.mxu0 0.0
        %1473 = vmatprep.subr.mxu0 0.0
        %1474 = vmatpush1.msra.mxu0 0.0
        %1475 = vmatprep.subr.mxu0 0.0
        %1476 = vmatpush1.msra.mxu0 0.0
        %1477 = vmatprep.subr.mxu0 0.0
        %1478 = vmatpush1.msra.mxu0 0.0
        %1479 = vmatprep.subr.mxu0 0.0
        %1480 = vmatpush1.msra.mxu0 0.0
        %1481 = vmatprep.subr.mxu0 0.0
        %1482 = vmatpush1.msra.mxu0 0.0
        %1483 = vmatprep.subr.mxu0 0.0
        %1484 = vmatpush1.msra.mxu0 0.0
        %1485 = vmatprep.subr.mxu0 0.0
        %1486 = vmatpush1.msra.mxu0 0.0
        %1487 = vmatprep.subr.mxu0 0.0
        %1488 = vmatpush1.msra.mxu0 0.0
        %1489 = vmatprep.subr.mxu0 0.0
        %1490 = vmatpush1.msra.mxu0 0.0
        %1491 = vmatprep.subr.mxu0 0.0
        %1492 = vmatpush1.msra.mxu0 0.0
        %1493 = vmatprep.subr.mxu0 0.0
        %1494 = vmatpush1.msra.mxu0 0.0
        %1495 = vmatprep.subr.mxu0 0.0
        %1496 = vmatpush1.msra.mxu0 0.0
        %1497 = vmatprep.subr.mxu0 0.0
        %1498 = vmatpush1.msra.mxu0 0.0
        %1499 = vmatprep.subr.mxu0 0.0
        %1500 = vmatpush1.msra.mxu0 0.0
        %1501 = vmatprep.subr.mxu0 0.0
        %1502 = vmatpush1.msra.mxu0 0.0
        %1503 = vmatprep.subr.mxu0 0.0
        %1504 = vmatpush1.msra.mxu0 0.0
        %1505 = vmatprep.subr.mxu0 0.0
        %1506 = vmatpush1.msra.mxu0 0.0
        %1507 = vmatprep.subr.mxu0 0.0
        %1508 = vmatpush1.msra.mxu0 0.0
        %1509 = vmatprep.mubr.f32.mxu0 0.0
        %1510 = vmatmul.mubr.f32.gmra.mrb[0].mxu0 %v1434
        %v1511 = vpop.f32.mrb[0].mxu0
        %v1512 = vadd.f32 0.0, %v1511
        %v1513 = vpop.f32.mrb[0].mxu0
        %1514 = vmatprep.mubr.f32.mxu0 0.0
        %1515 = vmatmul.mubr.f32.gmra.mrb[0].mxu0 %v1437
        %v1516 = vpop.f32.mrb[0].mxu0
        %v1517 = vadd.f32 0.0, %v1516
        %v1518 = vpop.f32.mrb[0].mxu0
        %1519 = vmatprep.mubr.f32.mxu0 0.0
        %1520 = vmatmul.mubr.f32.gmra.mrb[0].mxu0 %v1440
        %v1521 = vpop.f32.mrb[0].mxu0
        %v1522 = vadd.f32 0.0, %v1521
        %v1523 = vpop.f32.mrb[0].mxu0
        %1524 = vmatprep.mubr.f32.mxu0 0.0
        %1525 = vmatmul.mubr.f32.gmra.mrb[0].mxu0 %v1443
        %v1526 = vpop.f32.mrb[0].mxu0
        %v1527 = vadd.f32 0.0, %v1526
        %v1528 = vpop.f32.mrb[0].mxu0
        %1529 = vdwg.mxu0
        %v1530 = vadd.f32 %v1404, %v1512
        %v1531 = vadd.f32 %v1405, %v1517
        %v1532 = vadd.f32 %v1406, %v1522
        %v1533 = vadd.f32 %v1407, %v1527
        %1534 = vset.pattern.permute.xlu0 7
        %1535 = vperm.xlu0 %1534, %v553
        %v1536 = vpop.permute.xlu0 %1535
        %1538 = vset.pattern.permute.xlu0 7
        %1539 = vperm.xlu0 %1538, %v554
        %v1540 = vpop.permute.xlu0 %1539
        %1542 = vset.pattern.permute.xlu0 7
        %1543 = vperm.xlu0 %1542, %v555
        %v1544 = vpop.permute.xlu0 %1543
        %1546 = vset.pattern.permute.xlu0 7
        %1547 = vperm.xlu0 %1546, %v556
        %v1548 = vpop.permute.xlu0 %1547
        %v1550 = vmul.f32 %v535, %v1536
        %v1551 = vmul.f32 %v540, %v1540
        %v1552 = vmul.f32 %v545, %v1544
        %v1553 = vmul.f32 %v550, %v1548
        %s1554 = scalar_lea.vmem [#allocation2], 224
        %v1555 = vld [vmem:[%s1554] sm:$0xff]
        %v1556 = vld [vmem:[%s1554 + $0x8] sm:$0xff]
        %v1557 = vld [vmem:[%s1554 + $0x10] sm:$0xff]
        %v1558 = vld [vmem:[%s1554 + $0x18] sm:$0xff]
        %v1560 = vsel %vm586, %v1550, 0
        %v1563 = vsel %vm586, %v1551, 0
        %v1566 = vsel %vm586, %v1552, 0
        %v1569 = vsel %vm586, %v1553, 0
        %1571 = vmatprep.subr.mxu0 0.0
        %1572 = vmatpush1.msra.mxu0 %v1555
        %1573 = vmatprep.subr.mxu0 0.0
        %1574 = vmatpush1.msra.mxu0 %v1556
        %1575 = vmatprep.subr.mxu0 0.0
        %1576 = vmatpush1.msra.mxu0 %v1557
        %1577 = vmatprep.subr.mxu0 0.0
        %1578 = vmatpush1.msra.mxu0 %v1558
        %1579 = vmatprep.subr.mxu0 0.0
        %1580 = vmatpush1.msra.mxu0 0.0
        %1581 = vmatprep.subr.mxu0 0.0
        %1582 = vmatpush1.msra.mxu0 0.0
        %1583 = vmatprep.subr.mxu0 0.0
        %1584 = vmatpush1.msra.mxu0 0.0
        %1585 = vmatprep.subr.mxu0 0.0
        %1586 = vmatpush1.msra.mxu0 0.0
        %1587 = vmatprep.subr.mxu0 0.0
        %1588 = vmatpush1.msra.mxu0 0.0
        %1589 = vmatprep.subr.mxu0 0.0
        %1590 = vmatpush1.msra.mxu0 0.0
        %1591 = vmatprep.subr.mxu0 0.0
        %1592 = vmatpush1.msra.mxu0 0.0
        %1593 = vmatprep.subr.mxu0 0.0
        %1594 = vmatpush1.msra.mxu0 0.0
        %1595 = vmatprep.subr.mxu0 0.0
        %1596 = vmatpush1.msra.mxu0 0.0
        %1597 = vmatprep.subr.mxu0 0.0
        %1598 = vmatpush1.msra.mxu0 0.0
        %1599 = vmatprep.subr.mxu0 0.0
        %1600 = vmatpush1.msra.mxu0 0.0
        %1601 = vmatprep.subr.mxu0 0.0
        %1602 = vmatpush1.msra.mxu0 0.0
        %1603 = vmatprep.subr.mxu0 0.0
        %1604 = vmatpush1.msra.mxu0 0.0
        %1605 = vmatprep.subr.mxu0 0.0
        %1606 = vmatpush1.msra.mxu0 0.0
        %1607 = vmatprep.subr.mxu0 0.0
        %1608 = vmatpush1.msra.mxu0 0.0
        %1609 = vmatprep.subr.mxu0 0.0
        %1610 = vmatpush1.msra.mxu0 0.0
        %1611 = vmatprep.subr.mxu0 0.0
        %1612 = vmatpush1.msra.mxu0 0.0
        %1613 = vmatprep.subr.mxu0 0.0
        %1614 = vmatpush1.msra.mxu0 0.0
        %1615 = vmatprep.subr.mxu0 0.0
        %1616 = vmatpush1.msra.mxu0 0.0
        %1617 = vmatprep.subr.mxu0 0.0
        %1618 = vmatpush1.msra.mxu0 0.0
        %1619 = vmatprep.subr.mxu0 0.0
        %1620 = vmatpush1.msra.mxu0 0.0
        %1621 = vmatprep.subr.mxu0 0.0
        %1622 = vmatpush1.msra.mxu0 0.0
        %1623 = vmatprep.subr.mxu0 0.0
        %1624 = vmatpush1.msra.mxu0 0.0
        %1625 = vmatprep.subr.mxu0 0.0
        %1626 = vmatpush1.msra.mxu0 0.0
        %1627 = vmatprep.subr.mxu0 0.0
        %1628 = vmatpush1.msra.mxu0 0.0
        %1629 = vmatprep.subr.mxu0 0.0
        %1630 = vmatpush1.msra.mxu0 0.0
        %1631 = vmatprep.subr.mxu0 0.0
        %1632 = vmatpush1.msra.mxu0 0.0
        %1633 = vmatprep.subr.mxu0 0.0
        %1634 = vmatpush1.msra.mxu0 0.0
        %1635 = vmatprep.mubr.f32.mxu0 0.0
        %1636 = vmatmul.mubr.f32.gmra.mrb[0].mxu0 %v1560
        %v1637 = vpop.f32.mrb[0].mxu0
        %v1638 = vadd.f32 0.0, %v1637
        %v1639 = vpop.f32.mrb[0].mxu0
        %1640 = vmatprep.mubr.f32.mxu0 0.0
        %1641 = vmatmul.mubr.f32.gmra.mrb[0].mxu0 %v1563
        %v1642 = vpop.f32.mrb[0].mxu0
        %v1643 = vadd.f32 0.0, %v1642
        %v1644 = vpop.f32.mrb[0].mxu0
        %1645 = vmatprep.mubr.f32.mxu0 0.0
        %1646 = vmatmul.mubr.f32.gmra.mrb[0].mxu0 %v1566
        %v1647 = vpop.f32.mrb[0].mxu0
        %v1648 = vadd.f32 0.0, %v1647
        %v1649 = vpop.f32.mrb[0].mxu0
        %1650 = vmatprep.mubr.f32.mxu0 0.0
        %1651 = vmatmul.mubr.f32.gmra.mrb[0].mxu0 %v1569
        %v1652 = vpop.f32.mrb[0].mxu0
        %v1653 = vadd.f32 0.0, %v1652
        %v1654 = vpop.f32.mrb[0].mxu0
        %1655 = vdwg.mxu0
        %v1656 = vadd.f32 %v1530, %v1638
        %v1657 = vadd.f32 %v1531, %v1643
        %v1658 = vadd.f32 %v1532, %v1648
        %v1659 = vadd.f32 %v1533, %v1653
        %vm1660 = vcmp.gt.f32.partialorder %v1656, 0.0
        %vm1661 = vcmp.gt.f32.partialorder %v1657, 0.0
        %vm1662 = vcmp.gt.f32.partialorder %v1658, 0.0
        %vm1663 = vcmp.gt.f32.partialorder %v1659, 0.0
        %v1664 = vmul.f32 %v1656, 0.01
        %v1665 = vmul.f32 %v1657, 0.01
        %v1666 = vmul.f32 %v1658, 0.01
        %v1667 = vmul.f32 %v1659, 0.01
        %v1668 = vsel %vm1660, %v1656, %v1664
        %v1669 = vsel %vm1661, %v1657, %v1665
        %v1670 = vsel %vm1662, %v1658, %v1666
        %v1671 = vsel %vm1663, %v1659, %v1667
        %v1672 = vld [vmem:[%s434] sm:$0xff]
        %v1673 = vld [vmem:[%s434 + $0x8] sm:$0xff]
        %v1674 = vld [vmem:[%s434 + $0x10] sm:$0xff]
        %v1675 = vld [vmem:[%s434 + $0x18] sm:$0xff]
        %v1676 = vld [vmem:[%s8] sm:$0xff]
        %1678 = vset.pattern.permute.xlu0 0
        %1679 = vperm.xlu0 %1678, %v1672
        %v1680 = vpop.permute.xlu0 %1679
        %1683 = vset.pattern.permute.xlu0 0
        %1684 = vperm.xlu0 %1683, %v1673
        %v1685 = vpop.permute.xlu0 %1684
        %1688 = vset.pattern.permute.xlu0 0
        %1689 = vperm.xlu0 %1688, %v1674
        %v1690 = vpop.permute.xlu0 %1689
        %1693 = vset.pattern.permute.xlu0 0
        %1694 = vperm.xlu0 %1693, %v1675
        %v1695 = vpop.permute.xlu0 %1694
        %v1697 = vmul.f32 %v1668, %v1680
        %v1698 = vmul.f32 %v1669, %v1685
        %v1699 = vmul.f32 %v1670, %v1690
        %v1700 = vmul.f32 %v1671, %v1695
        %v1701 = vld [vmem:[#allocation4] sm:$0xff]
        %v1702 = vld [vmem:[#allocation4 + $0x8] sm:$0xff]
        %v1703 = vld [vmem:[#allocation4 + $0x10] sm:$0xff]
        %v1704 = vld [vmem:[#allocation4 + $0x18] sm:$0xff]
        %v1706 = vsel %vm586, %v1697, 0
        %v1709 = vsel %vm586, %v1698, 0
        %v1712 = vsel %vm586, %v1699, 0
        %v1715 = vsel %vm586, %v1700, 0
        %1717 = vmatprep.subr.mxu0 0.0
        %1718 = vmatpush1.msra.mxu0 %v1701
        %1719 = vmatprep.subr.mxu0 0.0
        %1720 = vmatpush1.msra.mxu0 %v1702
        %1721 = vmatprep.subr.mxu0 0.0
        %1722 = vmatpush1.msra.mxu0 %v1703
        %1723 = vmatprep.subr.mxu0 0.0
        %1724 = vmatpush1.msra.mxu0 %v1704
        %1725 = vmatprep.subr.mxu0 0.0
        %1726 = vmatpush1.msra.mxu0 0.0
        %1727 = vmatprep.subr.mxu0 0.0
        %1728 = vmatpush1.msra.mxu0 0.0
        %1729 = vmatprep.subr.mxu0 0.0
        %1730 = vmatpush1.msra.mxu0 0.0
        %1731 = vmatprep.subr.mxu0 0.0
        %1732 = vmatpush1.msra.mxu0 0.0
        %1733 = vmatprep.subr.mxu0 0.0
        %1734 = vmatpush1.msra.mxu0 0.0
        %1735 = vmatprep.subr.mxu0 0.0
        %1736 = vmatpush1.msra.mxu0 0.0
        %1737 = vmatprep.subr.mxu0 0.0
        %1738 = vmatpush1.msra.mxu0 0.0
        %1739 = vmatprep.subr.mxu0 0.0
        %1740 = vmatpush1.msra.mxu0 0.0
        %1741 = vmatprep.subr.mxu0 0.0
        %1742 = vmatpush1.msra.mxu0 0.0
        %1743 = vmatprep.subr.mxu0 0.0
        %1744 = vmatpush1.msra.mxu0 0.0
        %1745 = vmatprep.subr.mxu0 0.0
        %1746 = vmatpush1.msra.mxu0 0.0
        %1747 = vmatprep.subr.mxu0 0.0
        %1748 = vmatpush1.msra.mxu0 0.0
        %1749 = vmatprep.subr.mxu0 0.0
        %1750 = vmatpush1.msra.mxu0 0.0
        %1751 = vmatprep.subr.mxu0 0.0
        %1752 = vmatpush1.msra.mxu0 0.0
        %1753 = vmatprep.subr.mxu0 0.0
        %1754 = vmatpush1.msra.mxu0 0.0
        %1755 = vmatprep.subr.mxu0 0.0
        %1756 = vmatpush1.msra.mxu0 0.0
        %1757 = vmatprep.subr.mxu0 0.0
        %1758 = vmatpush1.msra.mxu0 0.0
        %1759 = vmatprep.subr.mxu0 0.0
        %1760 = vmatpush1.msra.mxu0 0.0
        %1761 = vmatprep.subr.mxu0 0.0
        %1762 = vmatpush1.msra.mxu0 0.0
        %1763 = vmatprep.subr.mxu0 0.0
        %1764 = vmatpush1.msra.mxu0 0.0
        %1765 = vmatprep.subr.mxu0 0.0
        %1766 = vmatpush1.msra.mxu0 0.0
        %1767 = vmatprep.subr.mxu0 0.0
        %1768 = vmatpush1.msra.mxu0 0.0
        %1769 = vmatprep.subr.mxu0 0.0
        %1770 = vmatpush1.msra.mxu0 0.0
        %1771 = vmatprep.subr.mxu0 0.0
        %1772 = vmatpush1.msra.mxu0 0.0
        %1773 = vmatprep.subr.mxu0 0.0
        %1774 = vmatpush1.msra.mxu0 0.0
        %1775 = vmatprep.subr.mxu0 0.0
        %1776 = vmatpush1.msra.mxu0 0.0
        %1777 = vmatprep.subr.mxu0 0.0
        %1778 = vmatpush1.msra.mxu0 0.0
        %1779 = vmatprep.subr.mxu0 0.0
        %1780 = vmatpush1.msra.mxu0 0.0
        %1781 = vmatprep.mubr.f32.mxu0 0.0
        %1782 = vmatmul.mubr.f32.gmra.mrb[0].mxu0 %v1706
        %v1783 = vpop.f32.mrb[0].mxu0
        %v1784 = vadd.f32 0.0, %v1783
        %v1785 = vpop.f32.mrb[0].mxu0
        %1786 = vmatprep.mubr.f32.mxu0 0.0
        %1787 = vmatmul.mubr.f32.gmra.mrb[0].mxu0 %v1709
        %v1788 = vpop.f32.mrb[0].mxu0
        %v1789 = vadd.f32 0.0, %v1788
        %v1790 = vpop.f32.mrb[0].mxu0
        %1791 = vmatprep.mubr.f32.mxu0 0.0
        %1792 = vmatmul.mubr.f32.gmra.mrb[0].mxu0 %v1712
        %v1793 = vpop.f32.mrb[0].mxu0
        %v1794 = vadd.f32 0.0, %v1793
        %v1795 = vpop.f32.mrb[0].mxu0
        %1796 = vmatprep.mubr.f32.mxu0 0.0
        %1797 = vmatmul.mubr.f32.gmra.mrb[0].mxu0 %v1715
        %v1798 = vpop.f32.mrb[0].mxu0
        %v1799 = vadd.f32 0.0, %v1798
        %v1800 = vpop.f32.mrb[0].mxu0
        %1801 = vdwg.mxu0
        %v1802 = vsel %vm684, %v1672, 0
        %v1804 = vsel %vm684, %v1673, 0
        %v1806 = vsel %vm684, %v1674, 0
        %v1808 = vsel %vm684, %v1675, 0
        %1810 = vmatprep.subr.mxu0 0.0
        %1811 = vmatpush1.msra.mxu0 %v1676
        %1812 = vmatprep.subr.mxu0 0.0
        %1813 = vmatpush1.msra.mxu0 0.0
        %1814 = vmatprep.subr.mxu0 0.0
        %1815 = vmatpush1.msra.mxu0 0.0
        %1816 = vmatprep.subr.mxu0 0.0
        %1817 = vmatpush1.msra.mxu0 0.0
        %1818 = vmatprep.subr.mxu0 0.0
        %1819 = vmatpush1.msra.mxu0 0.0
        %1820 = vmatprep.subr.mxu0 0.0
        %1821 = vmatpush1.msra.mxu0 0.0
        %1822 = vmatprep.subr.mxu0 0.0
        %1823 = vmatpush1.msra.mxu0 0.0
        %1824 = vmatprep.subr.mxu0 0.0
        %1825 = vmatpush1.msra.mxu0 0.0
        %1826 = vmatprep.subr.mxu0 0.0
        %1827 = vmatpush1.msra.mxu0 0.0
        %1828 = vmatprep.subr.mxu0 0.0
        %1829 = vmatpush1.msra.mxu0 0.0
        %1830 = vmatprep.subr.mxu0 0.0
        %1831 = vmatpush1.msra.mxu0 0.0
        %1832 = vmatprep.subr.mxu0 0.0
        %1833 = vmatpush1.msra.mxu0 0.0
        %1834 = vmatprep.subr.mxu0 0.0
        %1835 = vmatpush1.msra.mxu0 0.0
        %1836 = vmatprep.subr.mxu0 0.0
        %1837 = vmatpush1.msra.mxu0 0.0
        %1838 = vmatprep.subr.mxu0 0.0
        %1839 = vmatpush1.msra.mxu0 0.0
        %1840 = vmatprep.subr.mxu0 0.0
        %1841 = vmatpush1.msra.mxu0 0.0
        %1842 = vmatprep.subr.mxu0 0.0
        %1843 = vmatpush1.msra.mxu0 0.0
        %1844 = vmatprep.subr.mxu0 0.0
        %1845 = vmatpush1.msra.mxu0 0.0
        %1846 = vmatprep.subr.mxu0 0.0
        %1847 = vmatpush1.msra.mxu0 0.0
        %1848 = vmatprep.subr.mxu0 0.0
        %1849 = vmatpush1.msra.mxu0 0.0
        %1850 = vmatprep.subr.mxu0 0.0
        %1851 = vmatpush1.msra.mxu0 0.0
        %1852 = vmatprep.subr.mxu0 0.0
        %1853 = vmatpush1.msra.mxu0 0.0
        %1854 = vmatprep.subr.mxu0 0.0
        %1855 = vmatpush1.msra.mxu0 0.0
        %1856 = vmatprep.subr.mxu0 0.0
        %1857 = vmatpush1.msra.mxu0 0.0
        %1858 = vmatprep.subr.mxu0 0.0
        %1859 = vmatpush1.msra.mxu0 0.0
        %1860 = vmatprep.subr.mxu0 0.0
        %1861 = vmatpush1.msra.mxu0 0.0
        %1862 = vmatprep.subr.mxu0 0.0
        %1863 = vmatpush1.msra.mxu0 0.0
        %1864 = vmatprep.subr.mxu0 0.0
        %1865 = vmatpush1.msra.mxu0 0.0
        %1866 = vmatprep.subr.mxu0 0.0
        %1867 = vmatpush1.msra.mxu0 0.0
        %1868 = vmatprep.subr.mxu0 0.0
        %1869 = vmatpush1.msra.mxu0 0.0
        %1870 = vmatprep.subr.mxu0 0.0
        %1871 = vmatpush1.msra.mxu0 0.0
        %1872 = vmatprep.subr.mxu0 0.0
        %1873 = vmatpush1.msra.mxu0 0.0
        %1874 = vmatprep.mubr.f32.mxu0 0.0
        %1875 = vmatmul.mubr.f32.gmra.mrb[0].mxu0 %v1802
        %v1876 = vpop.f32.mrb[0].mxu0
        %v1877 = vadd.f32 %v1784, %v1876
        %v1878 = vpop.f32.mrb[0].mxu0
        %1879 = vmatprep.mubr.f32.mxu0 0.0
        %1880 = vmatmul.mubr.f32.gmra.mrb[0].mxu0 %v1804
        %v1881 = vpop.f32.mrb[0].mxu0
        %v1882 = vadd.f32 %v1789, %v1881
        %v1883 = vpop.f32.mrb[0].mxu0
        %1884 = vmatprep.mubr.f32.mxu0 0.0
        %1885 = vmatmul.mubr.f32.gmra.mrb[0].mxu0 %v1806
        %v1886 = vpop.f32.mrb[0].mxu0
        %v1887 = vadd.f32 %v1794, %v1886
        %v1888 = vpop.f32.mrb[0].mxu0
        %1889 = vmatprep.mubr.f32.mxu0 0.0
        %1890 = vmatmul.mubr.f32.gmra.mrb[0].mxu0 %v1808
        %v1891 = vpop.f32.mrb[0].mxu0
        %v1892 = vadd.f32 %v1799, %v1891
        %v1893 = vpop.f32.mrb[0].mxu0
        %1894 = vdwg.mxu0
        %1895 = vset.pattern.permute.xlu0 1
        %1896 = vperm.xlu0 %1895, %v1672
        %v1897 = vpop.permute.xlu0 %1896
        %1899 = vset.pattern.permute.xlu0 1
        %1900 = vperm.xlu0 %1899, %v1673
        %v1901 = vpop.permute.xlu0 %1900
        %1903 = vset.pattern.permute.xlu0 1
        %1904 = vperm.xlu0 %1903, %v1674
        %v1905 = vpop.permute.xlu0 %1904
        %1907 = vset.pattern.permute.xlu0 1
        %1908 = vperm.xlu0 %1907, %v1675
        %v1909 = vpop.permute.xlu0 %1908
        %v1911 = vmul.f32 %v1668, %v1897
        %v1912 = vmul.f32 %v1669, %v1901
        %v1913 = vmul.f32 %v1670, %v1905
        %v1914 = vmul.f32 %v1671, %v1909
        %s1915 = scalar_lea.vmem [#allocation4], 32
        %v1916 = vld [vmem:[%s1915] sm:$0xff]
        %v1917 = vld [vmem:[%s1915 + $0x8] sm:$0xff]
        %v1918 = vld [vmem:[%s1915 + $0x10] sm:$0xff]
        %v1919 = vld [vmem:[%s1915 + $0x18] sm:$0xff]
        %v1921 = vsel %vm586, %v1911, 0
        %v1924 = vsel %vm586, %v1912, 0
        %v1927 = vsel %vm586, %v1913, 0
        %v1930 = vsel %vm586, %v1914, 0
        %1932 = vmatprep.subr.mxu0 0.0
        %1933 = vmatpush1.msra.mxu0 %v1916
        %1934 = vmatprep.subr.mxu0 0.0
        %1935 = vmatpush1.msra.mxu0 %v1917
        %1936 = vmatprep.subr.mxu0 0.0
        %1937 = vmatpush1.msra.mxu0 %v1918
        %1938 = vmatprep.subr.mxu0 0.0
        %1939 = vmatpush1.msra.mxu0 %v1919
        %1940 = vmatprep.subr.mxu0 0.0
        %1941 = vmatpush1.msra.mxu0 0.0
        %1942 = vmatprep.subr.mxu0 0.0
        %1943 = vmatpush1.msra.mxu0 0.0
        %1944 = vmatprep.subr.mxu0 0.0
        %1945 = vmatpush1.msra.mxu0 0.0
        %1946 = vmatprep.subr.mxu0 0.0
        %1947 = vmatpush1.msra.mxu0 0.0
        %1948 = vmatprep.subr.mxu0 0.0
        %1949 = vmatpush1.msra.mxu0 0.0
        %1950 = vmatprep.subr.mxu0 0.0
        %1951 = vmatpush1.msra.mxu0 0.0
        %1952 = vmatprep.subr.mxu0 0.0
        %1953 = vmatpush1.msra.mxu0 0.0
        %1954 = vmatprep.subr.mxu0 0.0
        %1955 = vmatpush1.msra.mxu0 0.0
        %1956 = vmatprep.subr.mxu0 0.0
        %1957 = vmatpush1.msra.mxu0 0.0
        %1958 = vmatprep.subr.mxu0 0.0
        %1959 = vmatpush1.msra.mxu0 0.0
        %1960 = vmatprep.subr.mxu0 0.0
        %1961 = vmatpush1.msra.mxu0 0.0
        %1962 = vmatprep.subr.mxu0 0.0
        %1963 = vmatpush1.msra.mxu0 0.0
        %1964 = vmatprep.subr.mxu0 0.0
        %1965 = vmatpush1.msra.mxu0 0.0
        %1966 = vmatprep.subr.mxu0 0.0
        %1967 = vmatpush1.msra.mxu0 0.0
        %1968 = vmatprep.subr.mxu0 0.0
        %1969 = vmatpush1.msra.mxu0 0.0
        %1970 = vmatprep.subr.mxu0 0.0
        %1971 = vmatpush1.msra.mxu0 0.0
        %1972 = vmatprep.subr.mxu0 0.0
        %1973 = vmatpush1.msra.mxu0 0.0
        %1974 = vmatprep.subr.mxu0 0.0
        %1975 = vmatpush1.msra.mxu0 0.0
        %1976 = vmatprep.subr.mxu0 0.0
        %1977 = vmatpush1.msra.mxu0 0.0
        %1978 = vmatprep.subr.mxu0 0.0
        %1979 = vmatpush1.msra.mxu0 0.0
        %1980 = vmatprep.subr.mxu0 0.0
        %1981 = vmatpush1.msra.mxu0 0.0
        %1982 = vmatprep.subr.mxu0 0.0
        %1983 = vmatpush1.msra.mxu0 0.0
        %1984 = vmatprep.subr.mxu0 0.0
        %1985 = vmatpush1.msra.mxu0 0.0
        %1986 = vmatprep.subr.mxu0 0.0
        %1987 = vmatpush1.msra.mxu0 0.0
        %1988 = vmatprep.subr.mxu0 0.0
        %1989 = vmatpush1.msra.mxu0 0.0
        %1990 = vmatprep.subr.mxu0 0.0
        %1991 = vmatpush1.msra.mxu0 0.0
        %1992 = vmatprep.subr.mxu0 0.0
        %1993 = vmatpush1.msra.mxu0 0.0
        %1994 = vmatprep.subr.mxu0 0.0
        %1995 = vmatpush1.msra.mxu0 0.0
        %1996 = vmatprep.mubr.f32.mxu0 0.0
        %1997 = vmatmul.mubr.f32.gmra.mrb[0].mxu0 %v1921
        %v1998 = vpop.f32.mrb[0].mxu0
        %v1999 = vadd.f32 0.0, %v1998
        %v2000 = vpop.f32.mrb[0].mxu0
        %2001 = vmatprep.mubr.f32.mxu0 0.0
        %2002 = vmatmul.mubr.f32.gmra.mrb[0].mxu0 %v1924
        %v2003 = vpop.f32.mrb[0].mxu0
        %v2004 = vadd.f32 0.0, %v2003
        %v2005 = vpop.f32.mrb[0].mxu0
        %2006 = vmatprep.mubr.f32.mxu0 0.0
        %2007 = vmatmul.mubr.f32.gmra.mrb[0].mxu0 %v1927
        %v2008 = vpop.f32.mrb[0].mxu0
        %v2009 = vadd.f32 0.0, %v2008
        %v2010 = vpop.f32.mrb[0].mxu0
        %2011 = vmatprep.mubr.f32.mxu0 0.0
        %2012 = vmatmul.mubr.f32.gmra.mrb[0].mxu0 %v1930
        %v2013 = vpop.f32.mrb[0].mxu0
        %v2014 = vadd.f32 0.0, %v2013
        %v2015 = vpop.f32.mrb[0].mxu0
        %2016 = vdwg.mxu0
        %v2017 = vadd.f32 %v1877, %v1999
        %v2018 = vadd.f32 %v1882, %v2004
        %v2019 = vadd.f32 %v1887, %v2009
        %v2020 = vadd.f32 %v1892, %v2014
        %2021 = vset.pattern.permute.xlu0 2
        %2022 = vperm.xlu0 %2021, %v1672
        %v2023 = vpop.permute.xlu0 %2022
        %2025 = vset.pattern.permute.xlu0 2
        %2026 = vperm.xlu0 %2025, %v1673
        %v2027 = vpop.permute.xlu0 %2026
        %2029 = vset.pattern.permute.xlu0 2
        %2030 = vperm.xlu0 %2029, %v1674
        %v2031 = vpop.permute.xlu0 %2030
        %2033 = vset.pattern.permute.xlu0 2
        %2034 = vperm.xlu0 %2033, %v1675
        %v2035 = vpop.permute.xlu0 %2034
        %v2037 = vmul.f32 %v1668, %v2023
        %v2038 = vmul.f32 %v1669, %v2027
        %v2039 = vmul.f32 %v1670, %v2031
        %v2040 = vmul.f32 %v1671, %v2035
        %s2041 = scalar_lea.vmem [#allocation4], 64
        %v2042 = vld [vmem:[%s2041] sm:$0xff]
        %v2043 = vld [vmem:[%s2041 + $0x8] sm:$0xff]
        %v2044 = vld [vmem:[%s2041 + $0x10] sm:$0xff]
        %v2045 = vld [vmem:[%s2041 + $0x18] sm:$0xff]
        %v2047 = vsel %vm586, %v2037, 0
        %v2050 = vsel %vm586, %v2038, 0
        %v2053 = vsel %vm586, %v2039, 0
        %v2056 = vsel %vm586, %v2040, 0
        %2058 = vmatprep.subr.mxu0 0.0
        %2059 = vmatpush1.msra.mxu0 %v2042
        %2060 = vmatprep.subr.mxu0 0.0
        %2061 = vmatpush1.msra.mxu0 %v2043
        %2062 = vmatprep.subr.mxu0 0.0
        %2063 = vmatpush1.msra.mxu0 %v2044
        %2064 = vmatprep.subr.mxu0 0.0
        %2065 = vmatpush1.msra.mxu0 %v2045
        %2066 = vmatprep.subr.mxu0 0.0
        %2067 = vmatpush1.msra.mxu0 0.0
        %2068 = vmatprep.subr.mxu0 0.0
        %2069 = vmatpush1.msra.mxu0 0.0
        %2070 = vmatprep.subr.mxu0 0.0
        %2071 = vmatpush1.msra.mxu0 0.0
        %2072 = vmatprep.subr.mxu0 0.0
        %2073 = vmatpush1.msra.mxu0 0.0
        %2074 = vmatprep.subr.mxu0 0.0
        %2075 = vmatpush1.msra.mxu0 0.0
        %2076 = vmatprep.subr.mxu0 0.0
        %2077 = vmatpush1.msra.mxu0 0.0
        %2078 = vmatprep.subr.mxu0 0.0
        %2079 = vmatpush1.msra.mxu0 0.0
        %2080 = vmatprep.subr.mxu0 0.0
        %2081 = vmatpush1.msra.mxu0 0.0
        %2082 = vmatprep.subr.mxu0 0.0
        %2083 = vmatpush1.msra.mxu0 0.0
        %2084 = vmatprep.subr.mxu0 0.0
        %2085 = vmatpush1.msra.mxu0 0.0
        %2086 = vmatprep.subr.mxu0 0.0
        %2087 = vmatpush1.msra.mxu0 0.0
        %2088 = vmatprep.subr.mxu0 0.0
        %2089 = vmatpush1.msra.mxu0 0.0
        %2090 = vmatprep.subr.mxu0 0.0
        %2091 = vmatpush1.msra.mxu0 0.0
        %2092 = vmatprep.subr.mxu0 0.0
        %2093 = vmatpush1.msra.mxu0 0.0
        %2094 = vmatprep.subr.mxu0 0.0
        %2095 = vmatpush1.msra.mxu0 0.0
        %2096 = vmatprep.subr.mxu0 0.0
        %2097 = vmatpush1.msra.mxu0 0.0
        %2098 = vmatprep.subr.mxu0 0.0
        %2099 = vmatpush1.msra.mxu0 0.0
        %2100 = vmatprep.subr.mxu0 0.0
        %2101 = vmatpush1.msra.mxu0 0.0
        %2102 = vmatprep.subr.mxu0 0.0
        %2103 = vmatpush1.msra.mxu0 0.0
        %2104 = vmatprep.subr.mxu0 0.0
        %2105 = vmatpush1.msra.mxu0 0.0
        %2106 = vmatprep.subr.mxu0 0.0
        %2107 = vmatpush1.msra.mxu0 0.0
        %2108 = vmatprep.subr.mxu0 0.0
        %2109 = vmatpush1.msra.mxu0 0.0
        %2110 = vmatprep.subr.mxu0 0.0
        %2111 = vmatpush1.msra.mxu0 0.0
        %2112 = vmatprep.subr.mxu0 0.0
        %2113 = vmatpush1.msra.mxu0 0.0
        %2114 = vmatprep.subr.mxu0 0.0
        %2115 = vmatpush1.msra.mxu0 0.0
        %2116 = vmatprep.subr.mxu0 0.0
        %2117 = vmatpush1.msra.mxu0 0.0
        %2118 = vmatprep.subr.mxu0 0.0
        %2119 = vmatpush1.msra.mxu0 0.0
        %2120 = vmatprep.subr.mxu0 0.0
        %2121 = vmatpush1.msra.mxu0 0.0
        %2122 = vmatprep.mubr.f32.mxu0 0.0
        %2123 = vmatmul.mubr.f32.gmra.mrb[0].mxu0 %v2047
        %v2124 = vpop.f32.mrb[0].mxu0
        %v2125 = vadd.f32 0.0, %v2124
        %v2126 = vpop.f32.mrb[0].mxu0
        %2127 = vmatprep.mubr.f32.mxu0 0.0
        %2128 = vmatmul.mubr.f32.gmra.mrb[0].mxu0 %v2050
        %v2129 = vpop.f32.mrb[0].mxu0
        %v2130 = vadd.f32 0.0, %v2129
        %v2131 = vpop.f32.mrb[0].mxu0
        %2132 = vmatprep.mubr.f32.mxu0 0.0
        %2133 = vmatmul.mubr.f32.gmra.mrb[0].mxu0 %v2053
        %v2134 = vpop.f32.mrb[0].mxu0
        %v2135 = vadd.f32 0.0, %v2134
        %v2136 = vpop.f32.mrb[0].mxu0
        %2137 = vmatprep.mubr.f32.mxu0 0.0
        %2138 = vmatmul.mubr.f32.gmra.mrb[0].mxu0 %v2056
        %v2139 = vpop.f32.mrb[0].mxu0
        %v2140 = vadd.f32 0.0, %v2139
        %v2141 = vpop.f32.mrb[0].mxu0
        %2142 = vdwg.mxu0
        %v2143 = vadd.f32 %v2017, %v2125
        %v2144 = vadd.f32 %v2018, %v2130
        %v2145 = vadd.f32 %v2019, %v2135
        %v2146 = vadd.f32 %v2020, %v2140
        %2147 = vset.pattern.permute.xlu0 3
        %2148 = vperm.xlu0 %2147, %v1672
        %v2149 = vpop.permute.xlu0 %2148
        %2151 = vset.pattern.permute.xlu0 3
        %2152 = vperm.xlu0 %2151, %v1673
        %v2153 = vpop.permute.xlu0 %2152
        %2155 = vset.pattern.permute.xlu0 3
        %2156 = vperm.xlu0 %2155, %v1674
        %v2157 = vpop.permute.xlu0 %2156
        %2159 = vset.pattern.permute.xlu0 3
        %2160 = vperm.xlu0 %2159, %v1675
        %v2161 = vpop.permute.xlu0 %2160
        %v2163 = vmul.f32 %v1668, %v2149
        %v2164 = vmul.f32 %v1669, %v2153
        %v2165 = vmul.f32 %v1670, %v2157
        %v2166 = vmul.f32 %v1671, %v2161
        %s2167 = scalar_lea.vmem [#allocation4], 96
        %v2168 = vld [vmem:[%s2167] sm:$0xff]
        %v2169 = vld [vmem:[%s2167 + $0x8] sm:$0xff]
        %v2170 = vld [vmem:[%s2167 + $0x10] sm:$0xff]
        %v2171 = vld [vmem:[%s2167 + $0x18] sm:$0xff]
        %v2173 = vsel %vm586, %v2163, 0
        %v2176 = vsel %vm586, %v2164, 0
        %v2179 = vsel %vm586, %v2165, 0
        %v2182 = vsel %vm586, %v2166, 0
        %2184 = vmatprep.subr.mxu0 0.0
        %2185 = vmatpush1.msra.mxu0 %v2168
        %2186 = vmatprep.subr.mxu0 0.0
        %2187 = vmatpush1.msra.mxu0 %v2169
        %2188 = vmatprep.subr.mxu0 0.0
        %2189 = vmatpush1.msra.mxu0 %v2170
        %2190 = vmatprep.subr.mxu0 0.0
        %2191 = vmatpush1.msra.mxu0 %v2171
        %2192 = vmatprep.subr.mxu0 0.0
        %2193 = vmatpush1.msra.mxu0 0.0
        %2194 = vmatprep.subr.mxu0 0.0
        %2195 = vmatpush1.msra.mxu0 0.0
        %2196 = vmatprep.subr.mxu0 0.0
        %2197 = vmatpush1.msra.mxu0 0.0
        %2198 = vmatprep.subr.mxu0 0.0
        %2199 = vmatpush1.msra.mxu0 0.0
        %2200 = vmatprep.subr.mxu0 0.0
        %2201 = vmatpush1.msra.mxu0 0.0
        %2202 = vmatprep.subr.mxu0 0.0
        %2203 = vmatpush1.msra.mxu0 0.0
        %2204 = vmatprep.subr.mxu0 0.0
        %2205 = vmatpush1.msra.mxu0 0.0
        %2206 = vmatprep.subr.mxu0 0.0
        %2207 = vmatpush1.msra.mxu0 0.0
        %2208 = vmatprep.subr.mxu0 0.0
        %2209 = vmatpush1.msra.mxu0 0.0
        %2210 = vmatprep.subr.mxu0 0.0
        %2211 = vmatpush1.msra.mxu0 0.0
        %2212 = vmatprep.subr.mxu0 0.0
        %2213 = vmatpush1.msra.mxu0 0.0
        %2214 = vmatprep.subr.mxu0 0.0
        %2215 = vmatpush1.msra.mxu0 0.0
        %2216 = vmatprep.subr.mxu0 0.0
        %2217 = vmatpush1.msra.mxu0 0.0
        %2218 = vmatprep.subr.mxu0 0.0
        %2219 = vmatpush1.msra.mxu0 0.0
        %2220 = vmatprep.subr.mxu0 0.0
        %2221 = vmatpush1.msra.mxu0 0.0
        %2222 = vmatprep.subr.mxu0 0.0
        %2223 = vmatpush1.msra.mxu0 0.0
        %2224 = vmatprep.subr.mxu0 0.0
        %2225 = vmatpush1.msra.mxu0 0.0
        %2226 = vmatprep.subr.mxu0 0.0
        %2227 = vmatpush1.msra.mxu0 0.0
        %2228 = vmatprep.subr.mxu0 0.0
        %2229 = vmatpush1.msra.mxu0 0.0
        %2230 = vmatprep.subr.mxu0 0.0
        %2231 = vmatpush1.msra.mxu0 0.0
        %2232 = vmatprep.subr.mxu0 0.0
        %2233 = vmatpush1.msra.mxu0 0.0
        %2234 = vmatprep.subr.mxu0 0.0
        %2235 = vmatpush1.msra.mxu0 0.0
        %2236 = vmatprep.subr.mxu0 0.0
        %2237 = vmatpush1.msra.mxu0 0.0
        %2238 = vmatprep.subr.mxu0 0.0
        %2239 = vmatpush1.msra.mxu0 0.0
        %2240 = vmatprep.subr.mxu0 0.0
        %2241 = vmatpush1.msra.mxu0 0.0
        %2242 = vmatprep.subr.mxu0 0.0
        %2243 = vmatpush1.msra.mxu0 0.0
        %2244 = vmatprep.subr.mxu0 0.0
        %2245 = vmatpush1.msra.mxu0 0.0
        %2246 = vmatprep.subr.mxu0 0.0
        %2247 = vmatpush1.msra.mxu0 0.0
        %2248 = vmatprep.mubr.f32.mxu0 0.0
        %2249 = vmatmul.mubr.f32.gmra.mrb[0].mxu0 %v2173
        %v2250 = vpop.f32.mrb[0].mxu0
        %v2251 = vadd.f32 0.0, %v2250
        %v2252 = vpop.f32.mrb[0].mxu0
        %2253 = vmatprep.mubr.f32.mxu0 0.0
        %2254 = vmatmul.mubr.f32.gmra.mrb[0].mxu0 %v2176
        %v2255 = vpop.f32.mrb[0].mxu0
        %v2256 = vadd.f32 0.0, %v2255
        %v2257 = vpop.f32.mrb[0].mxu0
        %2258 = vmatprep.mubr.f32.mxu0 0.0
        %2259 = vmatmul.mubr.f32.gmra.mrb[0].mxu0 %v2179
        %v2260 = vpop.f32.mrb[0].mxu0
        %v2261 = vadd.f32 0.0, %v2260
        %v2262 = vpop.f32.mrb[0].mxu0
        %2263 = vmatprep.mubr.f32.mxu0 0.0
        %2264 = vmatmul.mubr.f32.gmra.mrb[0].mxu0 %v2182
        %v2265 = vpop.f32.mrb[0].mxu0
        %v2266 = vadd.f32 0.0, %v2265
        %v2267 = vpop.f32.mrb[0].mxu0
        %2268 = vdwg.mxu0
        %v2269 = vadd.f32 %v2143, %v2251
        %v2270 = vadd.f32 %v2144, %v2256
        %v2271 = vadd.f32 %v2145, %v2261
        %v2272 = vadd.f32 %v2146, %v2266
        %2273 = vset.pattern.permute.xlu0 4
        %2274 = vperm.xlu0 %2273, %v1672
        %v2275 = vpop.permute.xlu0 %2274
        %2277 = vset.pattern.permute.xlu0 4
        %2278 = vperm.xlu0 %2277, %v1673
        %v2279 = vpop.permute.xlu0 %2278
        %2281 = vset.pattern.permute.xlu0 4
        %2282 = vperm.xlu0 %2281, %v1674
        %v2283 = vpop.permute.xlu0 %2282
        %2285 = vset.pattern.permute.xlu0 4
        %2286 = vperm.xlu0 %2285, %v1675
        %v2287 = vpop.permute.xlu0 %2286
        %v2289 = vmul.f32 %v1668, %v2275
        %v2290 = vmul.f32 %v1669, %v2279
        %v2291 = vmul.f32 %v1670, %v2283
        %v2292 = vmul.f32 %v1671, %v2287
        %s2293 = scalar_lea.vmem [#allocation4], 128
        %v2294 = vld [vmem:[%s2293] sm:$0xff]
        %v2295 = vld [vmem:[%s2293 + $0x8] sm:$0xff]
        %v2296 = vld [vmem:[%s2293 + $0x10] sm:$0xff]
        %v2297 = vld [vmem:[%s2293 + $0x18] sm:$0xff]
        %v2299 = vsel %vm586, %v2289, 0
        %v2302 = vsel %vm586, %v2290, 0
        %v2305 = vsel %vm586, %v2291, 0
        %v2308 = vsel %vm586, %v2292, 0
        %2310 = vmatprep.subr.mxu0 0.0
        %2311 = vmatpush1.msra.mxu0 %v2294
        %2312 = vmatprep.subr.mxu0 0.0
        %2313 = vmatpush1.msra.mxu0 %v2295
        %2314 = vmatprep.subr.mxu0 0.0
        %2315 = vmatpush1.msra.mxu0 %v2296
        %2316 = vmatprep.subr.mxu0 0.0
        %2317 = vmatpush1.msra.mxu0 %v2297
        %2318 = vmatprep.subr.mxu0 0.0
        %2319 = vmatpush1.msra.mxu0 0.0
        %2320 = vmatprep.subr.mxu0 0.0
        %2321 = vmatpush1.msra.mxu0 0.0
        %2322 = vmatprep.subr.mxu0 0.0
        %2323 = vmatpush1.msra.mxu0 0.0
        %2324 = vmatprep.subr.mxu0 0.0
        %2325 = vmatpush1.msra.mxu0 0.0
        %2326 = vmatprep.subr.mxu0 0.0
        %2327 = vmatpush1.msra.mxu0 0.0
        %2328 = vmatprep.subr.mxu0 0.0
        %2329 = vmatpush1.msra.mxu0 0.0
        %2330 = vmatprep.subr.mxu0 0.0
        %2331 = vmatpush1.msra.mxu0 0.0
        %2332 = vmatprep.subr.mxu0 0.0
        %2333 = vmatpush1.msra.mxu0 0.0
        %2334 = vmatprep.subr.mxu0 0.0
        %2335 = vmatpush1.msra.mxu0 0.0
        %2336 = vmatprep.subr.mxu0 0.0
        %2337 = vmatpush1.msra.mxu0 0.0
        %2338 = vmatprep.subr.mxu0 0.0
        %2339 = vmatpush1.msra.mxu0 0.0
        %2340 = vmatprep.subr.mxu0 0.0
        %2341 = vmatpush1.msra.mxu0 0.0
        %2342 = vmatprep.subr.mxu0 0.0
        %2343 = vmatpush1.msra.mxu0 0.0
        %2344 = vmatprep.subr.mxu0 0.0
        %2345 = vmatpush1.msra.mxu0 0.0
        %2346 = vmatprep.subr.mxu0 0.0
        %2347 = vmatpush1.msra.mxu0 0.0
        %2348 = vmatprep.subr.mxu0 0.0
        %2349 = vmatpush1.msra.mxu0 0.0
        %2350 = vmatprep.subr.mxu0 0.0
        %2351 = vmatpush1.msra.mxu0 0.0
        %2352 = vmatprep.subr.mxu0 0.0
        %2353 = vmatpush1.msra.mxu0 0.0
        %2354 = vmatprep.subr.mxu0 0.0
        %2355 = vmatpush1.msra.mxu0 0.0
        %2356 = vmatprep.subr.mxu0 0.0
        %2357 = vmatpush1.msra.mxu0 0.0
        %2358 = vmatprep.subr.mxu0 0.0
        %2359 = vmatpush1.msra.mxu0 0.0
        %2360 = vmatprep.subr.mxu0 0.0
        %2361 = vmatpush1.msra.mxu0 0.0
        %2362 = vmatprep.subr.mxu0 0.0
        %2363 = vmatpush1.msra.mxu0 0.0
        %2364 = vmatprep.subr.mxu0 0.0
        %2365 = vmatpush1.msra.mxu0 0.0
        %2366 = vmatprep.subr.mxu0 0.0
        %2367 = vmatpush1.msra.mxu0 0.0
        %2368 = vmatprep.subr.mxu0 0.0
        %2369 = vmatpush1.msra.mxu0 0.0
        %2370 = vmatprep.subr.mxu0 0.0
        %2371 = vmatpush1.msra.mxu0 0.0
        %2372 = vmatprep.subr.mxu0 0.0
        %2373 = vmatpush1.msra.mxu0 0.0
        %2374 = vmatprep.mubr.f32.mxu0 0.0
        %2375 = vmatmul.mubr.f32.gmra.mrb[0].mxu0 %v2299
        %v2376 = vpop.f32.mrb[0].mxu0
        %v2377 = vadd.f32 0.0, %v2376
        %v2378 = vpop.f32.mrb[0].mxu0
        %2379 = vmatprep.mubr.f32.mxu0 0.0
        %2380 = vmatmul.mubr.f32.gmra.mrb[0].mxu0 %v2302
        %v2381 = vpop.f32.mrb[0].mxu0
        %v2382 = vadd.f32 0.0, %v2381
        %v2383 = vpop.f32.mrb[0].mxu0
        %2384 = vmatprep.mubr.f32.mxu0 0.0
        %2385 = vmatmul.mubr.f32.gmra.mrb[0].mxu0 %v2305
        %v2386 = vpop.f32.mrb[0].mxu0
        %v2387 = vadd.f32 0.0, %v2386
        %v2388 = vpop.f32.mrb[0].mxu0
        %2389 = vmatprep.mubr.f32.mxu0 0.0
        %2390 = vmatmul.mubr.f32.gmra.mrb[0].mxu0 %v2308
        %v2391 = vpop.f32.mrb[0].mxu0
        %v2392 = vadd.f32 0.0, %v2391
        %v2393 = vpop.f32.mrb[0].mxu0
        %2394 = vdwg.mxu0
        %v2395 = vadd.f32 %v2269, %v2377
        %v2396 = vadd.f32 %v2270, %v2382
        %v2397 = vadd.f32 %v2271, %v2387
        %v2398 = vadd.f32 %v2272, %v2392
        %2399 = vset.pattern.permute.xlu0 5
        %2400 = vperm.xlu0 %2399, %v1672
        %v2401 = vpop.permute.xlu0 %2400
        %2403 = vset.pattern.permute.xlu0 5
        %2404 = vperm.xlu0 %2403, %v1673
        %v2405 = vpop.permute.xlu0 %2404
        %2407 = vset.pattern.permute.xlu0 5
        %2408 = vperm.xlu0 %2407, %v1674
        %v2409 = vpop.permute.xlu0 %2408
        %2411 = vset.pattern.permute.xlu0 5
        %2412 = vperm.xlu0 %2411, %v1675
        %v2413 = vpop.permute.xlu0 %2412
        %v2415 = vmul.f32 %v1668, %v2401
        %v2416 = vmul.f32 %v1669, %v2405
        %v2417 = vmul.f32 %v1670, %v2409
        %v2418 = vmul.f32 %v1671, %v2413
        %s2419 = scalar_lea.vmem [#allocation4], 160
        %v2420 = vld [vmem:[%s2419] sm:$0xff]
        %v2421 = vld [vmem:[%s2419 + $0x8] sm:$0xff]
        %v2422 = vld [vmem:[%s2419 + $0x10] sm:$0xff]
        %v2423 = vld [vmem:[%s2419 + $0x18] sm:$0xff]
        %v2425 = vsel %vm586, %v2415, 0
        %v2428 = vsel %vm586, %v2416, 0
        %v2431 = vsel %vm586, %v2417, 0
        %v2434 = vsel %vm586, %v2418, 0
        %2436 = vmatprep.subr.mxu0 0.0
        %2437 = vmatpush1.msra.mxu0 %v2420
        %2438 = vmatprep.subr.mxu0 0.0
        %2439 = vmatpush1.msra.mxu0 %v2421
        %2440 = vmatprep.subr.mxu0 0.0
        %2441 = vmatpush1.msra.mxu0 %v2422
        %2442 = vmatprep.subr.mxu0 0.0
        %2443 = vmatpush1.msra.mxu0 %v2423
        %2444 = vmatprep.subr.mxu0 0.0
        %2445 = vmatpush1.msra.mxu0 0.0
        %2446 = vmatprep.subr.mxu0 0.0
        %2447 = vmatpush1.msra.mxu0 0.0
        %2448 = vmatprep.subr.mxu0 0.0
        %2449 = vmatpush1.msra.mxu0 0.0
        %2450 = vmatprep.subr.mxu0 0.0
        %2451 = vmatpush1.msra.mxu0 0.0
        %2452 = vmatprep.subr.mxu0 0.0
        %2453 = vmatpush1.msra.mxu0 0.0
        %2454 = vmatprep.subr.mxu0 0.0
        %2455 = vmatpush1.msra.mxu0 0.0
        %2456 = vmatprep.subr.mxu0 0.0
        %2457 = vmatpush1.msra.mxu0 0.0
        %2458 = vmatprep.subr.mxu0 0.0
        %2459 = vmatpush1.msra.mxu0 0.0
        %2460 = vmatprep.subr.mxu0 0.0
        %2461 = vmatpush1.msra.mxu0 0.0
        %2462 = vmatprep.subr.mxu0 0.0
        %2463 = vmatpush1.msra.mxu0 0.0
        %2464 = vmatprep.subr.mxu0 0.0
        %2465 = vmatpush1.msra.mxu0 0.0
        %2466 = vmatprep.subr.mxu0 0.0
        %2467 = vmatpush1.msra.mxu0 0.0
        %2468 = vmatprep.subr.mxu0 0.0
        %2469 = vmatpush1.msra.mxu0 0.0
        %2470 = vmatprep.subr.mxu0 0.0
        %2471 = vmatpush1.msra.mxu0 0.0
        %2472 = vmatprep.subr.mxu0 0.0
        %2473 = vmatpush1.msra.mxu0 0.0
        %2474 = vmatprep.subr.mxu0 0.0
        %2475 = vmatpush1.msra.mxu0 0.0
        %2476 = vmatprep.subr.mxu0 0.0
        %2477 = vmatpush1.msra.mxu0 0.0
        %2478 = vmatprep.subr.mxu0 0.0
        %2479 = vmatpush1.msra.mxu0 0.0
        %2480 = vmatprep.subr.mxu0 0.0
        %2481 = vmatpush1.msra.mxu0 0.0
        %2482 = vmatprep.subr.mxu0 0.0
        %2483 = vmatpush1.msra.mxu0 0.0
        %2484 = vmatprep.subr.mxu0 0.0
        %2485 = vmatpush1.msra.mxu0 0.0
        %2486 = vmatprep.subr.mxu0 0.0
        %2487 = vmatpush1.msra.mxu0 0.0
        %2488 = vmatprep.subr.mxu0 0.0
        %2489 = vmatpush1.msra.mxu0 0.0
        %2490 = vmatprep.subr.mxu0 0.0
        %2491 = vmatpush1.msra.mxu0 0.0
        %2492 = vmatprep.subr.mxu0 0.0
        %2493 = vmatpush1.msra.mxu0 0.0
        %2494 = vmatprep.subr.mxu0 0.0
        %2495 = vmatpush1.msra.mxu0 0.0
        %2496 = vmatprep.subr.mxu0 0.0
        %2497 = vmatpush1.msra.mxu0 0.0
        %2498 = vmatprep.subr.mxu0 0.0
        %2499 = vmatpush1.msra.mxu0 0.0
        %2500 = vmatprep.mubr.f32.mxu0 0.0
        %2501 = vmatmul.mubr.f32.gmra.mrb[0].mxu0 %v2425
        %v2502 = vpop.f32.mrb[0].mxu0
        %v2503 = vadd.f32 0.0, %v2502
        %v2504 = vpop.f32.mrb[0].mxu0
        %2505 = vmatprep.mubr.f32.mxu0 0.0
        %2506 = vmatmul.mubr.f32.gmra.mrb[0].mxu0 %v2428
        %v2507 = vpop.f32.mrb[0].mxu0
        %v2508 = vadd.f32 0.0, %v2507
        %v2509 = vpop.f32.mrb[0].mxu0
        %2510 = vmatprep.mubr.f32.mxu0 0.0
        %2511 = vmatmul.mubr.f32.gmra.mrb[0].mxu0 %v2431
        %v2512 = vpop.f32.mrb[0].mxu0
        %v2513 = vadd.f32 0.0, %v2512
        %v2514 = vpop.f32.mrb[0].mxu0
        %2515 = vmatprep.mubr.f32.mxu0 0.0
        %2516 = vmatmul.mubr.f32.gmra.mrb[0].mxu0 %v2434
        %v2517 = vpop.f32.mrb[0].mxu0
        %v2518 = vadd.f32 0.0, %v2517
        %v2519 = vpop.f32.mrb[0].mxu0
        %2520 = vdwg.mxu0
        %v2521 = vadd.f32 %v2395, %v2503
        %v2522 = vadd.f32 %v2396, %v2508
        %v2523 = vadd.f32 %v2397, %v2513
        %v2524 = vadd.f32 %v2398, %v2518
        %2525 = vset.pattern.permute.xlu0 6
        %2526 = vperm.xlu0 %2525, %v1672
        %v2527 = vpop.permute.xlu0 %2526
        %2529 = vset.pattern.permute.xlu0 6
        %2530 = vperm.xlu0 %2529, %v1673
        %v2531 = vpop.permute.xlu0 %2530
        %2533 = vset.pattern.permute.xlu0 6
        %2534 = vperm.xlu0 %2533, %v1674
        %v2535 = vpop.permute.xlu0 %2534
        %2537 = vset.pattern.permute.xlu0 6
        %2538 = vperm.xlu0 %2537, %v1675
        %v2539 = vpop.permute.xlu0 %2538
        %v2541 = vmul.f32 %v1668, %v2527
        %v2542 = vmul.f32 %v1669, %v2531
        %v2543 = vmul.f32 %v1670, %v2535
        %v2544 = vmul.f32 %v1671, %v2539
        %s2545 = scalar_lea.vmem [#allocation4], 192
        %v2546 = vld [vmem:[%s2545] sm:$0xff]
        %v2547 = vld [vmem:[%s2545 + $0x8] sm:$0xff]
        %v2548 = vld [vmem:[%s2545 + $0x10] sm:$0xff]
        %v2549 = vld [vmem:[%s2545 + $0x18] sm:$0xff]
        %v2551 = vsel %vm586, %v2541, 0
        %v2554 = vsel %vm586, %v2542, 0
        %v2557 = vsel %vm586, %v2543, 0
        %v2560 = vsel %vm586, %v2544, 0
        %2562 = vmatprep.subr.mxu0 0.0
        %2563 = vmatpush1.msra.mxu0 %v2546
        %2564 = vmatprep.subr.mxu0 0.0
        %2565 = vmatpush1.msra.mxu0 %v2547
        %2566 = vmatprep.subr.mxu0 0.0
        %2567 = vmatpush1.msra.mxu0 %v2548
        %2568 = vmatprep.subr.mxu0 0.0
        %2569 = vmatpush1.msra.mxu0 %v2549
        %2570 = vmatprep.subr.mxu0 0.0
        %2571 = vmatpush1.msra.mxu0 0.0
        %2572 = vmatprep.subr.mxu0 0.0
        %2573 = vmatpush1.msra.mxu0 0.0
        %2574 = vmatprep.subr.mxu0 0.0
        %2575 = vmatpush1.msra.mxu0 0.0
        %2576 = vmatprep.subr.mxu0 0.0
        %2577 = vmatpush1.msra.mxu0 0.0
        %2578 = vmatprep.subr.mxu0 0.0
        %2579 = vmatpush1.msra.mxu0 0.0
        %2580 = vmatprep.subr.mxu0 0.0
        %2581 = vmatpush1.msra.mxu0 0.0
        %2582 = vmatprep.subr.mxu0 0.0
        %2583 = vmatpush1.msra.mxu0 0.0
        %2584 = vmatprep.subr.mxu0 0.0
        %2585 = vmatpush1.msra.mxu0 0.0
        %2586 = vmatprep.subr.mxu0 0.0
        %2587 = vmatpush1.msra.mxu0 0.0
        %2588 = vmatprep.subr.mxu0 0.0
        %2589 = vmatpush1.msra.mxu0 0.0
        %2590 = vmatprep.subr.mxu0 0.0
        %2591 = vmatpush1.msra.mxu0 0.0
        %2592 = vmatprep.subr.mxu0 0.0
        %2593 = vmatpush1.msra.mxu0 0.0
        %2594 = vmatprep.subr.mxu0 0.0
        %2595 = vmatpush1.msra.mxu0 0.0
        %2596 = vmatprep.subr.mxu0 0.0
        %2597 = vmatpush1.msra.mxu0 0.0
        %2598 = vmatprep.subr.mxu0 0.0
        %2599 = vmatpush1.msra.mxu0 0.0
        %2600 = vmatprep.subr.mxu0 0.0
        %2601 = vmatpush1.msra.mxu0 0.0
        %2602 = vmatprep.subr.mxu0 0.0
        %2603 = vmatpush1.msra.mxu0 0.0
        %2604 = vmatprep.subr.mxu0 0.0
        %2605 = vmatpush1.msra.mxu0 0.0
        %2606 = vmatprep.subr.mxu0 0.0
        %2607 = vmatpush1.msra.mxu0 0.0
        %2608 = vmatprep.subr.mxu0 0.0
        %2609 = vmatpush1.msra.mxu0 0.0
        %2610 = vmatprep.subr.mxu0 0.0
        %2611 = vmatpush1.msra.mxu0 0.0
        %2612 = vmatprep.subr.mxu0 0.0
        %2613 = vmatpush1.msra.mxu0 0.0
        %2614 = vmatprep.subr.mxu0 0.0
        %2615 = vmatpush1.msra.mxu0 0.0
        %2616 = vmatprep.subr.mxu0 0.0
        %2617 = vmatpush1.msra.mxu0 0.0
        %2618 = vmatprep.subr.mxu0 0.0
        %2619 = vmatpush1.msra.mxu0 0.0
        %2620 = vmatprep.subr.mxu0 0.0
        %2621 = vmatpush1.msra.mxu0 0.0
        %2622 = vmatprep.subr.mxu0 0.0
        %2623 = vmatpush1.msra.mxu0 0.0
        %2624 = vmatprep.subr.mxu0 0.0
        %2625 = vmatpush1.msra.mxu0 0.0
        %2626 = vmatprep.mubr.f32.mxu0 0.0
        %2627 = vmatmul.mubr.f32.gmra.mrb[0].mxu0 %v2551
        %v2628 = vpop.f32.mrb[0].mxu0
        %v2629 = vadd.f32 0.0, %v2628
        %v2630 = vpop.f32.mrb[0].mxu0
        %2631 = vmatprep.mubr.f32.mxu0 0.0
        %2632 = vmatmul.mubr.f32.gmra.mrb[0].mxu0 %v2554
        %v2633 = vpop.f32.mrb[0].mxu0
        %v2634 = vadd.f32 0.0, %v2633
        %v2635 = vpop.f32.mrb[0].mxu0
        %2636 = vmatprep.mubr.f32.mxu0 0.0
        %2637 = vmatmul.mubr.f32.gmra.mrb[0].mxu0 %v2557
        %v2638 = vpop.f32.mrb[0].mxu0
        %v2639 = vadd.f32 0.0, %v2638
        %v2640 = vpop.f32.mrb[0].mxu0
        %2641 = vmatprep.mubr.f32.mxu0 0.0
        %2642 = vmatmul.mubr.f32.gmra.mrb[0].mxu0 %v2560
        %v2643 = vpop.f32.mrb[0].mxu0
        %v2644 = vadd.f32 0.0, %v2643
        %v2645 = vpop.f32.mrb[0].mxu0
        %2646 = vdwg.mxu0
        %v2647 = vadd.f32 %v2521, %v2629
        %v2648 = vadd.f32 %v2522, %v2634
        %v2649 = vadd.f32 %v2523, %v2639
        %v2650 = vadd.f32 %v2524, %v2644
        %2651 = vset.pattern.permute.xlu0 7
        %2652 = vperm.xlu0 %2651, %v1672
        %v2653 = vpop.permute.xlu0 %2652
        %2655 = vset.pattern.permute.xlu0 7
        %2656 = vperm.xlu0 %2655, %v1673
        %v2657 = vpop.permute.xlu0 %2656
        %2659 = vset.pattern.permute.xlu0 7
        %2660 = vperm.xlu0 %2659, %v1674
        %v2661 = vpop.permute.xlu0 %2660
        %2663 = vset.pattern.permute.xlu0 7
        %2664 = vperm.xlu0 %2663, %v1675
        %v2665 = vpop.permute.xlu0 %2664
        %v2667 = vmul.f32 %v1668, %v2653
        %v2668 = vmul.f32 %v1669, %v2657
        %v2669 = vmul.f32 %v1670, %v2661
        %v2670 = vmul.f32 %v1671, %v2665
        %s2671 = scalar_lea.vmem [#allocation4], 224
        %v2672 = vld [vmem:[%s2671] sm:$0xff]
        %v2673 = vld [vmem:[%s2671 + $0x8] sm:$0xff]
        %v2674 = vld [vmem:[%s2671 + $0x10] sm:$0xff]
        %v2675 = vld [vmem:[%s2671 + $0x18] sm:$0xff]
        %v2677 = vsel %vm586, %v2667, 0
        %v2680 = vsel %vm586, %v2668, 0
        %v2683 = vsel %vm586, %v2669, 0
        %v2686 = vsel %vm586, %v2670, 0
        %2688 = vmatprep.subr.mxu0 0.0
        %2689 = vmatpush1.msra.mxu0 %v2672
        %2690 = vmatprep.subr.mxu0 0.0
        %2691 = vmatpush1.msra.mxu0 %v2673
        %2692 = vmatprep.subr.mxu0 0.0
        %2693 = vmatpush1.msra.mxu0 %v2674
        %2694 = vmatprep.subr.mxu0 0.0
        %2695 = vmatpush1.msra.mxu0 %v2675
        %2696 = vmatprep.subr.mxu0 0.0
        %2697 = vmatpush1.msra.mxu0 0.0
        %2698 = vmatprep.subr.mxu0 0.0
        %2699 = vmatpush1.msra.mxu0 0.0
        %2700 = vmatprep.subr.mxu0 0.0
        %2701 = vmatpush1.msra.mxu0 0.0
        %2702 = vmatprep.subr.mxu0 0.0
        %2703 = vmatpush1.msra.mxu0 0.0
        %2704 = vmatprep.subr.mxu0 0.0
        %2705 = vmatpush1.msra.mxu0 0.0
        %2706 = vmatprep.subr.mxu0 0.0
        %2707 = vmatpush1.msra.mxu0 0.0
        %2708 = vmatprep.subr.mxu0 0.0
        %2709 = vmatpush1.msra.mxu0 0.0
        %2710 = vmatprep.subr.mxu0 0.0
        %2711 = vmatpush1.msra.mxu0 0.0
        %2712 = vmatprep.subr.mxu0 0.0
        %2713 = vmatpush1.msra.mxu0 0.0
        %2714 = vmatprep.subr.mxu0 0.0
        %2715 = vmatpush1.msra.mxu0 0.0
        %2716 = vmatprep.subr.mxu0 0.0
        %2717 = vmatpush1.msra.mxu0 0.0
        %2718 = vmatprep.subr.mxu0 0.0
        %2719 = vmatpush1.msra.mxu0 0.0
        %2720 = vmatprep.subr.mxu0 0.0
        %2721 = vmatpush1.msra.mxu0 0.0
        %2722 = vmatprep.subr.mxu0 0.0
        %2723 = vmatpush1.msra.mxu0 0.0
        %2724 = vmatprep.subr.mxu0 0.0
        %2725 = vmatpush1.msra.mxu0 0.0
        %2726 = vmatprep.subr.mxu0 0.0
        %2727 = vmatpush1.msra.mxu0 0.0
        %2728 = vmatprep.subr.mxu0 0.0
        %2729 = vmatpush1.msra.mxu0 0.0
        %2730 = vmatprep.subr.mxu0 0.0
        %2731 = vmatpush1.msra.mxu0 0.0
        %2732 = vmatprep.subr.mxu0 0.0
        %2733 = vmatpush1.msra.mxu0 0.0
        %2734 = vmatprep.subr.mxu0 0.0
        %2735 = vmatpush1.msra.mxu0 0.0
        %2736 = vmatprep.subr.mxu0 0.0
        %2737 = vmatpush1.msra.mxu0 0.0
        %2738 = vmatprep.subr.mxu0 0.0
        %2739 = vmatpush1.msra.mxu0 0.0
        %2740 = vmatprep.subr.mxu0 0.0
        %2741 = vmatpush1.msra.mxu0 0.0
        %2742 = vmatprep.subr.mxu0 0.0
        %2743 = vmatpush1.msra.mxu0 0.0
        %2744 = vmatprep.subr.mxu0 0.0
        %2745 = vmatpush1.msra.mxu0 0.0
        %2746 = vmatprep.subr.mxu0 0.0
        %2747 = vmatpush1.msra.mxu0 0.0
        %2748 = vmatprep.subr.mxu0 0.0
        %2749 = vmatpush1.msra.mxu0 0.0
        %2750 = vmatprep.subr.mxu0 0.0
        %2751 = vmatpush1.msra.mxu0 0.0
        %2752 = vmatprep.mubr.f32.mxu0 0.0
        %2753 = vmatmul.mubr.f32.gmra.mrb[0].mxu0 %v2677
        %v2754 = vpop.f32.mrb[0].mxu0
        %v2755 = vadd.f32 0.0, %v2754
        %v2756 = vpop.f32.mrb[0].mxu0
        %2757 = vmatprep.mubr.f32.mxu0 0.0
        %2758 = vmatmul.mubr.f32.gmra.mrb[0].mxu0 %v2680
        %v2759 = vpop.f32.mrb[0].mxu0
        %v2760 = vadd.f32 0.0, %v2759
        %v2761 = vpop.f32.mrb[0].mxu0
        %2762 = vmatprep.mubr.f32.mxu0 0.0
        %2763 = vmatmul.mubr.f32.gmra.mrb[0].mxu0 %v2683
        %v2764 = vpop.f32.mrb[0].mxu0
        %v2765 = vadd.f32 0.0, %v2764
        %v2766 = vpop.f32.mrb[0].mxu0
        %2767 = vmatprep.mubr.f32.mxu0 0.0
        %2768 = vmatmul.mubr.f32.gmra.mrb[0].mxu0 %v2686
        %v2769 = vpop.f32.mrb[0].mxu0
        %v2770 = vadd.f32 0.0, %v2769
        %v2771 = vpop.f32.mrb[0].mxu0
        %2772 = vdwg.mxu0
        %v2773 = vadd.f32 %v2647, %v2755
        %v2774 = vadd.f32 %v2648, %v2760
        %v2775 = vadd.f32 %v2649, %v2765
        %v2776 = vadd.f32 %v2650, %v2770
        %vm2777 = vcmp.gt.f32.partialorder %v2773, 0.0
        %vm2778 = vcmp.gt.f32.partialorder %v2774, 0.0
        %vm2779 = vcmp.gt.f32.partialorder %v2775, 0.0
        %vm2780 = vcmp.gt.f32.partialorder %v2776, 0.0
        %v2781 = vmul.f32 %v2773, 0.01
        %v2782 = vmul.f32 %v2774, 0.01
        %v2783 = vmul.f32 %v2775, 0.01
        %v2784 = vmul.f32 %v2776, 0.01
        %v2785 = vsel %vm2777, %v2773, %v2781
        %v2786 = vsel %vm2778, %v2774, %v2782
        %v2787 = vsel %vm2779, %v2775, %v2783
        %v2788 = vsel %vm2780, %v2776, %v2784
        %v2789 = vld [vmem:[%s9] sm:$0xff]
        %v2790 = vld [vmem:[%s9 + $0x8] sm:$0xff]
        %v2791 = vld [vmem:[%s9 + $0x10] sm:$0xff]
        %v2792 = vld [vmem:[%s9 + $0x18] sm:$0xff]
        %v2793 = vld [vmem:[%s10] sm:$0x1]
        %v2795 = vlaneseq
        %v2796 = vshrl.u32 %v2795, 7
        %v2797 = vsub.s32 0, %v2796
        %v2798 = vrot.slane %v2793, %v2797
        %v2801 = vsel %vm586, %v2785, 0
        %v2804 = vsel %vm586, %v2786, 0
        %v2807 = vsel %vm586, %v2787, 0
        %v2810 = vsel %vm586, %v2788, 0
        %2812 = vmatprep.subr.mxu0 0.0
        %2813 = vmatpush1.msra.mxu0 %v2789
        %2814 = vmatprep.subr.mxu0 0.0
        %2815 = vmatpush1.msra.mxu0 %v2790
        %2816 = vmatprep.subr.mxu0 0.0
        %2817 = vmatpush1.msra.mxu0 %v2791
        %2818 = vmatprep.subr.mxu0 0.0
        %2819 = vmatpush1.msra.mxu0 %v2792
        %2820 = vmatprep.subr.mxu0 0.0
        %2821 = vmatpush1.msra.mxu0 0.0
        %2822 = vmatprep.subr.mxu0 0.0
        %2823 = vmatpush1.msra.mxu0 0.0
        %2824 = vmatprep.subr.mxu0 0.0
        %2825 = vmatpush1.msra.mxu0 0.0
        %2826 = vmatprep.subr.mxu0 0.0
        %2827 = vmatpush1.msra.mxu0 0.0
        %2828 = vmatprep.subr.mxu0 0.0
        %2829 = vmatpush1.msra.mxu0 0.0
        %2830 = vmatprep.subr.mxu0 0.0
        %2831 = vmatpush1.msra.mxu0 0.0
        %2832 = vmatprep.subr.mxu0 0.0
        %2833 = vmatpush1.msra.mxu0 0.0
        %2834 = vmatprep.subr.mxu0 0.0
        %2835 = vmatpush1.msra.mxu0 0.0
        %2836 = vmatprep.subr.mxu0 0.0
        %2837 = vmatpush1.msra.mxu0 0.0
        %2838 = vmatprep.subr.mxu0 0.0
        %2839 = vmatpush1.msra.mxu0 0.0
        %2840 = vmatprep.subr.mxu0 0.0
        %2841 = vmatpush1.msra.mxu0 0.0
        %2842 = vmatprep.subr.mxu0 0.0
        %2843 = vmatpush1.msra.mxu0 0.0
        %2844 = vmatprep.subr.mxu0 0.0
        %2845 = vmatpush1.msra.mxu0 0.0
        %2846 = vmatprep.subr.mxu0 0.0
        %2847 = vmatpush1.msra.mxu0 0.0
        %2848 = vmatprep.subr.mxu0 0.0
        %2849 = vmatpush1.msra.mxu0 0.0
        %2850 = vmatprep.subr.mxu0 0.0
        %2851 = vmatpush1.msra.mxu0 0.0
        %2852 = vmatprep.subr.mxu0 0.0
        %2853 = vmatpush1.msra.mxu0 0.0
        %2854 = vmatprep.subr.mxu0 0.0
        %2855 = vmatpush1.msra.mxu0 0.0
        %2856 = vmatprep.subr.mxu0 0.0
        %2857 = vmatpush1.msra.mxu0 0.0
        %2858 = vmatprep.subr.mxu0 0.0
        %2859 = vmatpush1.msra.mxu0 0.0
        %2860 = vmatprep.subr.mxu0 0.0
        %2861 = vmatpush1.msra.mxu0 0.0
        %2862 = vmatprep.subr.mxu0 0.0
        %2863 = vmatpush1.msra.mxu0 0.0
        %2864 = vmatprep.subr.mxu0 0.0
        %2865 = vmatpush1.msra.mxu0 0.0
        %2866 = vmatprep.subr.mxu0 0.0
        %2867 = vmatpush1.msra.mxu0 0.0
        %2868 = vmatprep.subr.mxu0 0.0
        %2869 = vmatpush1.msra.mxu0 0.0
        %2870 = vmatprep.subr.mxu0 0.0
        %2871 = vmatpush1.msra.mxu0 0.0
        %2872 = vmatprep.subr.mxu0 0.0
        %2873 = vmatpush1.msra.mxu0 0.0
        %2874 = vmatprep.subr.mxu0 0.0
        %2875 = vmatpush1.msra.mxu0 0.0
        %2876 = vmatprep.mubr.f32.mxu0 0.0
        %2877 = vmatmul.mubr.f32.gmra.mrb[0].mxu0 %v2801
        %v2878 = vpop.f32.mrb[0].mxu0
        %v2879 = vadd.f32 %v2798, %v2878
        %v2880 = vpop.f32.mrb[0].mxu0
        %2881 = vmatprep.mubr.f32.mxu0 0.0
        %2882 = vmatmul.mubr.f32.gmra.mrb[0].mxu0 %v2804
        %v2883 = vpop.f32.mrb[0].mxu0
        %v2884 = vadd.f32 %v2798, %v2883
        %v2885 = vpop.f32.mrb[0].mxu0
        %2886 = vmatprep.mubr.f32.mxu0 0.0
        %2887 = vmatmul.mubr.f32.gmra.mrb[0].mxu0 %v2807
        %v2888 = vpop.f32.mrb[0].mxu0
        %v2889 = vadd.f32 %v2798, %v2888
        %v2890 = vpop.f32.mrb[0].mxu0
        %2891 = vmatprep.mubr.f32.mxu0 0.0
        %2892 = vmatmul.mubr.f32.gmra.mrb[0].mxu0 %v2810
        %v2893 = vpop.f32.mrb[0].mxu0
        %v2894 = vadd.f32 %v2798, %v2893
        %v2895 = vpop.f32.mrb[0].mxu0
        %2896 = vdwg.mxu0
        %vm2897 = vcmask 31744
        %2898 = vst.msk [vmem:[%s440] sm:$0xff] %vm2897, %v2879
        %2899 = vst.msk [vmem:[%s440 + $0x8] sm:$0xff] %vm2897, %v2884
        %2900 = vst.msk [vmem:[%s440 + $0x10] sm:$0xff] %vm2897, %v2889
        %2901 = vst.msk [vmem:[%s440 + $0x18] sm:$0xff] %vm2897, %v2894
        %s2902 = smul.u32 4, %s24
        %p2903 = scmp.lt.s32.totalorder %s2902, 7
        %s2904 = scalar_select %p2903, %s2902, 7
        %s2905 = smul.addr %s2904, 8
        %s2906 = scalar_lea.vmem %s11, %s2905
        // Predicated region
        $region73: #{tpu_custom_call.1} parent=63 // pred_check
          %p2907 = pneg %p283
        $region74: #{tpu_custom_call.1} parent=63 // pred_check_branch
          %2909 = sbr.rel (%p2907) target = $region76
        $region75: #{tpu_custom_call.1} parent=63 // pred_region
          %s2910 = smul.u32 4, %s24
        $region76: #{tpu_custom_call.1} parent=63 // pred_fallthru
          _
      $region64: #{tpu_custom_call.1} parent=5 // pred_fallthru
        _
      %p2911 = scmp.le.s32.totalorder 2, %s19
      // Predicated region
      $region77: #{tpu_custom_call.1} parent=5 // pred_check
        %p2912 = pneg %p2911
      $region78: #{tpu_custom_call.1} parent=5 // pred_check_branch
        %2914 = sbr.rel (%p2912) target = $region80
      $region79: #{tpu_custom_call.1} parent=5 // pred_region
        %s2915 = ssub.s32 %s19, 2
        // Predicated region
        $region81: #{tpu_custom_call.1} parent=79 // pred_check
          %p2916 = pneg %p289
        $region82: #{tpu_custom_call.1} parent=79 // pred_check_branch
          %2918 = sbr.rel (%p2916) target = $region84
        $region83: #{tpu_custom_call.1} parent=79 // pred_region
          %s2919 = smul.u32 4, %s25
          %p2920 = scmp.lt.s32.totalorder %s2919, 7
          %s2921 = scalar_select %p2920, %s2919, 7
          %s2922 = smul.addr %s2921, 8
          %s2923 = scalar_lea.vmem %s11, %s2922
        $region84: #{tpu_custom_call.1} parent=79 // pred_fallthru
          _
      $region80: #{tpu_custom_call.1} parent=5 // pred_fallthru
        _
    $region6: #{tpu_custom_call.1} parent=1 // loop_footer
      %s23 = sadd.s32 1, %s19
    $region7: #{tpu_custom_call.1} parent=1 // loop_footer_branch
      %18 = sbr.rel target = $region3
    $region8: #{tpu_custom_call.1} parent=1 // loop_exit
      _
    %2924 = vsyncpa [#allocation3], 1
    %s2925 = scalar_lea.sflag [#allocation3], 1
    %2926 = vsyncpa %s2925, 1
    %2927 = vsyncpa [#allocation5], 1

</llo_original>
